<compile_context>
chip_gen: v7x
topology: tpu7x:2x2x1
jax: 0.10.0
libtpu: 0.0.40
codegen_flags: <defaults>
</compile_context>

<pallas_src>
import functools

import jax
import jax.numpy as jnp
from jax.experimental import pallas as pl
from jax.experimental.pallas import tpu as pltpu

LN_EPS = 1e-5          # torch.nn.LayerNorm default
NEG_INF = -1e30        # additive mask value for cross-sequence positions


def _layernorm(x, gamma, beta):
    mean = jnp.mean(x, axis=-1, keepdims=True)
    var = jnp.mean((x - mean) ** 2, axis=-1, keepdims=True)
    return (x - mean) * jax.lax.rsqrt(var + LN_EPS) * gamma + beta


# --------------------------------------------------------------------------
# Fused kernel: whole Critic forward in one invocation (no grid).
# --------------------------------------------------------------------------
def critic_kernel(num_layers, num_heads,
                  x_ref, mask_ref,
                  wq_ref, wk_ref, wv_ref, bqkv_ref, wo_ref,
                  vec_ref, w1_ref, b1_ref, w2_ref,
                  ow_ref, ob_ref,
                  o_ref):
    h = x_ref[...]          # (N, D) float32, N = B*S
    mask = mask_ref[...]    # (N, N) additive bias: 0 in-sequence, -1e30 across

    for l in range(num_layers):               # static unroll (num_layers small)
        # ---- multi-head self-attention: per-head weights, merged by accumulation
        attn = None
        for hd in range(num_heads):           # static unroll
            # 1/sqrt(dh) already folded into wq / bq at pack time.
            q = jnp.dot(h, wq_ref[l, hd],
                        preferred_element_type=jnp.float32) + bqkv_ref[l, 0, hd]
            k = jnp.dot(h, wk_ref[l, hd],
                        preferred_element_type=jnp.float32) + bqkv_ref[l, 1, hd]
            v = jnp.dot(h, wv_ref[l, hd],
                        preferred_element_type=jnp.float32) + bqkv_ref[l, 2, hd]
            # scores over all flattened rows; block-diag mask keeps batches apart
            s = jax.lax.dot_general(q, k, (((1,), (1,)), ((), ())),
                                    preferred_element_type=jnp.float32) + mask
            s = s - jnp.max(s, axis=-1, keepdims=True)
            p = jnp.exp(s)                                        # (N, N)
            inv = 1.0 / jnp.sum(p, axis=-1, keepdims=True)        # (N, 1), exact
            ctx = jnp.dot(p, v, preferred_element_type=jnp.float32) * inv  # (N, dh)
            contrib = jnp.dot(ctx, wo_ref[l, hd],
                              preferred_element_type=jnp.float32)          # (N, D)
            attn = contrib if attn is None else attn + contrib
        attn = attn + vec_ref[l, 0:1, :]        # out_proj bias
        # TODO(synk): dropout is identity here (eval-mode); no RNG-based dropout.

        # ---- add & norm 1 (post-norm, torch TransformerEncoderLayer default)
        h = _layernorm(h + attn, vec_ref[l, 1:2, :], vec_ref[l, 2:3, :])

        # ---- feed-forward (ReLU)
        ff = jnp.dot(h, w1_ref[l], preferred_element_type=jnp.float32) + b1_ref[l]
        ff = jnp.maximum(ff, 0.0)
        ff = jnp.dot(ff, w2_ref[l], preferred_element_type=jnp.float32) \
             + vec_ref[l, 3:4, :]

        # ---- add & norm 2
        h = _layernorm(h + ff, vec_ref[l, 4:5, :], vec_ref[l, 5:6, :])

    # ---- output linear, lane-padded so the final store is a full unmasked vst
    o_ref[...] = jnp.dot(h, ow_ref[...],
                         preferred_element_type=jnp.float32) + ob_ref[...]


# --------------------------------------------------------------------------
# Wrapper
# --------------------------------------------------------------------------
@functools.partial(jax.jit, static_argnames=("out_dim",))
def critic_forward(x, packed, out_dim):
    B, S, D = x.shape
    N = B * S
    L, H = packed["wq"].shape[0], packed["wq"].shape[1]
    OP = packed["ow"].shape[1]

    x_flat = x.reshape(N, D)
    # additive block-diagonal mask: 0 within a sequence, -1e30 across sequences
    seq_id = jnp.repeat(jnp.arange(B, dtype=jnp.int32), S)
    mask = jnp.where(seq_id[:, None] == seq_id[None, :], 0.0, NEG_INF)
    mask = mask.astype(jnp.float32)

    args = (x_flat, mask,
            packed["wq"], packed["wk"], packed["wv"], packed["bqkv"],
            packed["wo"], packed["vec"], packed["w1"], packed["b1"],
            packed["w2"], packed["ow"], packed["ob"])
    vmem = pl.BlockSpec(memory_space=pltpu.MemorySpace.VMEM)

    out_pad = pl.pallas_call(
        functools.partial(critic_kernel, L, H),
        out_shape=jax.ShapeDtypeStruct((N, OP), jnp.float32),
        in_specs=[vmem] * len(args),
        out_specs=vmem,
    )(*args)

    return out_pad[:, :out_dim].reshape(B, S, out_dim)


# --------------------------------------------------------------------------
# Parameter construction (torch-Linear-style synthetic init) and packing
# --------------------------------------------------------------------------
def init_raw_params(key, hidden, num_layers, output_size):
    def dense(k, fan_in, fan_out):
        k1, k2 = jax.random.split(k)
        lim = 1.0 / (fan_in ** 0.5)
        w = jax.random.uniform(k1, (fan_in, fan_out), jnp.float32, -lim, lim)
        b = jax.random.uniform(k2, (fan_out,), jnp.float32, -lim, lim)
        return w, b

    layers = []
    for _ in range(num_layers):
        key, kqkv, ko, kl1, kl2 = jax.random.split(key, 5)
        wqkv, bqkv = dense(kqkv, hidden, 3 * hidden)      # MHA in_proj
        wo, bo = dense(ko, hidden, hidden)                # MHA out_proj
        w1, b1 = dense(kl1, hidden, 4 * hidden)           # FFN linear1
        w2, b2 = dense(kl2, 4 * hidden, hidden)           # FFN linear2
        g1 = jnp.ones((hidden,), jnp.float32)             # LayerNorm1
        be1 = jnp.zeros((hidden,), jnp.float32)
        g2 = jnp.ones((hidden,), jnp.float32)             # LayerNorm2
        be2 = jnp.zeros((hidden,), jnp.float32)
        layers.append((wqkv, bqkv, wo, bo, g1, be1, w1, b1, w2, b2, g2, be2))

    key, kout = jax.random.split(key)
    out_w, out_b = dense(kout, hidden, output_size)       # output_linear
    return layers, out_w, out_b


def pack_params(layers_raw, out_w, out_b, num_heads, lane_pad=128):
    """Split per head, fold 1/sqrt(dh), stack across layers, pad output lanes."""
    D, O = out_w.shape
    dh = D // num_heads
    scale = 1.0 / (dh ** 0.5)

    wq_l, wk_l, wv_l, bqkv_l, wo_l, vec_l, w1_l, b1_l, w2_l = ([] for _ in range(9))
    for (wqkv, bqkv, wo, bo, g1, be1, w1, b1, w2, b2, g2, be2) in layers_raw:
        wq = wqkv[:, 0 * D:1 * D] * scale          # fold attention scale
        wk = wqkv[:, 1 * D:2 * D]
        wv = wqkv[:, 2 * D:3 * D]
        bq = bqkv[0 * D:1 * D] * scale
        bk = bqkv[1 * D:2 * D]
        bv = bqkv[2 * D:3 * D]

        def split_w(w):
            return jnp.stack([w[:, h * dh:(h + 1) * dh] for h in range(num_heads)])

        def split_b(b):
            return jnp.stack([b[h * dh:(h + 1) * dh].reshape(1, dh)
                              for h in range(num_heads)])

        wq_l.append(split_w(wq))                                   # (H, D, dh)
        wk_l.append(split_w(wk))
        wv_l.append(split_w(wv))
        bqkv_l.append(jnp.stack([split_b(bq), split_b(bk), split_b(bv)]))  # (3,H,1,dh)
        wo_l.append(jnp.stack([wo[h * dh:(h + 1) * dh, :]
                               for h in range(num_heads)]))         # (H, dh, D)
        vec_l.append(jnp.stack([bo, g1, be1, b2, g2, be2]))         # (6, D)
        w1_l.append(w1)
        b1_l.append(b1.reshape(1, -1))
        w2_l.append(w2)

    OP = max(lane_pad, ((O + lane_pad - 1) // lane_pad) * lane_pad)
    ow_pad = jnp.zeros((D, OP), jnp.float32).at[:, :O].set(out_w)
    ob_pad = jnp.zeros((1, OP), jnp.float32).at[:, :O].set(out_b.reshape(1, O))

    packed = dict(
        wq=jnp.stack(wq_l), wk=jnp.stack(wk_l), wv=jnp.stack(wv_l),
        bqkv=jnp.stack(bqkv_l), wo=jnp.stack(wo_l), vec=jnp.stack(vec_l),
        w1=jnp.stack(w1_l), b1=jnp.stack(b1_l), w2=jnp.stack(w2_l),
        ow=ow_pad, ob=ob_pad)
    return packed, O


# --------------------------------------------------------------------------
# Pure-JAX reference (standard unsplit formulation) for a correctness check
# --------------------------------------------------------------------------
def critic_reference(x, layers_raw, out_w, out_b, num_heads):
    B, S, D = x.shape
    dh = D // num_heads
    h = x
    for (wqkv, bqkv, wo, bo, g1, be1, w1, b1, w2, b2, g2, be2) in layers_raw:
        q = h @ wqkv[:, 0 * D:1 * D] + bqkv[0 * D:1 * D]
        k = h @ wqkv[:, 1 * D:2 * D] + bqkv[1 * D:2 * D]
        v = h @ wqkv[:, 2 * D:3 * D] + bqkv[2 * D:3 * D]

        def split(t):
            return t.reshape(B, S, num_heads, dh).transpose(0, 2, 1, 3)

        qh, kh, vh = split(q), split(k), split(v)
        s = jnp.einsum('bhqd,bhkd->bhqk', qh, kh) / (dh ** 0.5)
        p = jax.nn.softmax(s, axis=-1)
        ctx = jnp.einsum('bhqk,bhkd->bhqd', p, vh)
        ctx = ctx.transpose(0, 2, 1, 3).reshape(B, S, D)
        attn = ctx @ wo + bo
        h = _layernorm(h + attn, g1, be1)
        ff = jnp.maximum(h @ w1 + b1, 0.0) @ w2 + b2
        h = _layernorm(h + ff, g2, be2)
    return h @ out_w + out_b


if __name__ == "__main__":
    # shapes consistent with the module:
    # hidden_size=32, num_heads=4, num_layers=2, output_size=4, batch=2, seq=8
    B, S, D, H, L, O = 2, 8, 32, 4, 2, 4

    key = jax.random.PRNGKey(0)
    k_x, k_p = jax.random.split(key)
    x = jax.random.normal(k_x, (B, S, D), dtype=jnp.float32)

    layers_raw, out_w, out_b = init_raw_params(k_p, D, L, O)
    packed, out_dim = pack_params(layers_raw, out_w, out_b, H)

    y = critic_forward(x, packed, out_dim)
    y = jax.block_until_ready(y)

    assert y.shape == (B, S, O), y.shape
    assert bool(jnp.all(jnp.isfinite(y)))

    y_ref = critic_reference(x, layers_raw, out_w, out_b, H)
    max_err = float(jnp.max(jnp.abs(y - y_ref)))
    assert max_err < 2e-3, f"mismatch vs pure-JAX reference: {max_err}"

    print("KERNEL_OK")
</pallas_src>

<mosaic_0001>
module attributes {stable_mosaic.version = 11 : i64} {
  func.func @critic_kernel(%arg0: memref<16x32xf32, #tpu.memory_space<vmem>>, %arg1: memref<16x16xf32, #tpu.memory_space<vmem>>, %arg2: memref<2x4x32x8xf32, #tpu.memory_space<vmem>>, %arg3: memref<2x4x32x8xf32, #tpu.memory_space<vmem>>, %arg4: memref<2x4x32x8xf32, #tpu.memory_space<vmem>>, %arg5: memref<2x3x4x1x8xf32, #tpu.memory_space<vmem>>, %arg6: memref<2x4x8x32xf32, #tpu.memory_space<vmem>>, %arg7: memref<2x6x32xf32, #tpu.memory_space<vmem>>, %arg8: memref<2x32x128xf32, #tpu.memory_space<vmem>>, %arg9: memref<2x1x128xf32, #tpu.memory_space<vmem>>, %arg10: memref<2x128x32xf32, #tpu.memory_space<vmem>>, %arg11: memref<32x128xf32, #tpu.memory_space<vmem>>, %arg12: memref<1x128xf32, #tpu.memory_space<vmem>>, %arg13: memref<16x128xf32, #tpu.memory_space<vmem>>) attributes {dimension_semantics = [], scalar_prefetch = 0 : i64, scratch_operands = 0 : i64, tpu.core_type = #tpu.core_type<tc>} {
    %c0 = arith.constant 0 : index
    %c0_0 = arith.constant 0 : index
    %0 = vector.load %arg0[%c0, %c0_0] : memref<16x32xf32, #tpu.memory_space<vmem>>, vector<16x32xf32>
    %c0_1 = arith.constant 0 : index
    %c0_2 = arith.constant 0 : index
    %1 = vector.load %arg1[%c0_1, %c0_2] : memref<16x16xf32, #tpu.memory_space<vmem>>, vector<16x16xf32>
    %c0_3 = arith.constant 0 : index
    %c0_4 = arith.constant 0 : index
    %c0_5 = arith.constant 0 : index
    %c0_6 = arith.constant 0 : index
    %2 = vector.load %arg2[%c0_3, %c0_4, %c0_5, %c0_6] : memref<2x4x32x8xf32, #tpu.memory_space<vmem>>, vector<1x1x32x8xf32>
    %3 = vector.shape_cast %2 : vector<1x1x32x8xf32> to vector<32x8xf32>
    %cst = arith.constant dense<0.000000e+00> : vector<16x8xf32>
    %4 = tpu.matmul %0, %3, %cst {dimension_numbers = #tpu.dot_dimension_numbers<[1], [0], [0], [1], [0, 0, 1, 1], [], []>} : vector<16x32xf32>, vector<32x8xf32>, vector<16x8xf32> -> vector<16x8xf32>
    %c0_7 = arith.constant 0 : index
    %c0_8 = arith.constant 0 : index
    %c0_9 = arith.constant 0 : index
    %c0_10 = arith.constant 0 : index
    %c0_11 = arith.constant 0 : index
    %5 = vector.load %arg5[%c0_7, %c0_8, %c0_9, %c0_10, %c0_11] : memref<2x3x4x1x8xf32, #tpu.memory_space<vmem>>, vector<1x1x1x1x8xf32>
    %6 = vector.shape_cast %5 : vector<1x1x1x1x8xf32> to vector<1x8xf32>
    %7 = vector.broadcast %6 : vector<1x8xf32> to vector<16x8xf32>
    %8 = arith.addf %4, %7 : vector<16x8xf32>
    %c0_12 = arith.constant 0 : index
    %c0_13 = arith.constant 0 : index
    %c0_14 = arith.constant 0 : index
    %c0_15 = arith.constant 0 : index
    %9 = vector.load %arg3[%c0_12, %c0_13, %c0_14, %c0_15] : memref<2x4x32x8xf32, #tpu.memory_space<vmem>>, vector<1x1x32x8xf32>
    %10 = vector.shape_cast %9 : vector<1x1x32x8xf32> to vector<32x8xf32>
    %cst_16 = arith.constant dense<0.000000e+00> : vector<16x8xf32>
    %11 = tpu.matmul %0, %10, %cst_16 {dimension_numbers = #tpu.dot_dimension_numbers<[1], [0], [0], [1], [0, 0, 1, 1], [], []>} : vector<16x32xf32>, vector<32x8xf32>, vector<16x8xf32> -> vector<16x8xf32>
    %c0_17 = arith.constant 0 : index
    %c1 = arith.constant 1 : index
    %c0_18 = arith.constant 0 : index
    %c0_19 = arith.constant 0 : index
    %c0_20 = arith.constant 0 : index
    %12 = vector.load %arg5[%c0_17, %c1, %c0_18, %c0_19, %c0_20] : memref<2x3x4x1x8xf32, #tpu.memory_space<vmem>>, vector<1x1x1x1x8xf32>
    %13 = vector.shape_cast %12 : vector<1x1x1x1x8xf32> to vector<1x8xf32>
    %14 = vector.broadcast %13 : vector<1x8xf32> to vector<16x8xf32>
    %15 = arith.addf %11, %14 : vector<16x8xf32>
    %c0_21 = arith.constant 0 : index
    %c0_22 = arith.constant 0 : index
    %c0_23 = arith.constant 0 : index
    %c0_24 = arith.constant 0 : index
    %16 = vector.load %arg4[%c0_21, %c0_22, %c0_23, %c0_24] : memref<2x4x32x8xf32, #tpu.memory_space<vmem>>, vector<1x1x32x8xf32>
    %17 = vector.shape_cast %16 : vector<1x1x32x8xf32> to vector<32x8xf32>
    %cst_25 = arith.constant dense<0.000000e+00> : vector<16x8xf32>
    %18 = tpu.matmul %0, %17, %cst_25 {dimension_numbers = #tpu.dot_dimension_numbers<[1], [0], [0], [1], [0, 0, 1, 1], [], []>} : vector<16x32xf32>, vector<32x8xf32>, vector<16x8xf32> -> vector<16x8xf32>
    %c0_26 = arith.constant 0 : index
    %c2 = arith.constant 2 : index
    %c0_27 = arith.constant 0 : index
    %c0_28 = arith.constant 0 : index
    %c0_29 = arith.constant 0 : index
    %19 = vector.load %arg5[%c0_26, %c2, %c0_27, %c0_28, %c0_29] : memref<2x3x4x1x8xf32, #tpu.memory_space<vmem>>, vector<1x1x1x1x8xf32>
    %20 = vector.shape_cast %19 : vector<1x1x1x1x8xf32> to vector<1x8xf32>
    %21 = vector.broadcast %20 : vector<1x8xf32> to vector<16x8xf32>
    %22 = arith.addf %18, %21 : vector<16x8xf32>
    %cst_30 = arith.constant dense<0.000000e+00> : vector<16x16xf32>
    %23 = tpu.matmul %8, %15, %cst_30 {dimension_numbers = #tpu.dot_dimension_numbers<[1], [1], [0], [0], [0, 0, 1, 0], [], []>} : vector<16x8xf32>, vector<16x8xf32>, vector<16x16xf32> -> vector<16x16xf32>
    %24 = arith.addf %23, %1 : vector<16x16xf32>
    %cst_31 = arith.constant dense<0xFF800000> : vector<16xf32>
    %25 = vector.multi_reduction <maximumf>, %24, %cst_31 [1] : vector<16x16xf32> to vector<16xf32>
    %26 = vector.shape_cast %25 : vector<16xf32> to vector<16x1xf32>
    %27 = vector.broadcast %26 : vector<16x1xf32> to vector<16x16xf32>
    %28 = arith.subf %24, %27 : vector<16x16xf32>
    %29 = math.exp %28 : vector<16x16xf32>
    %cst_32 = arith.constant dense<0.000000e+00> : vector<16xf32>
    %30 = vector.multi_reduction <add>, %29, %cst_32 [1] : vector<16x16xf32> to vector<16xf32>
    %31 = vector.shape_cast %30 : vector<16xf32> to vector<16x1xf32>
    %cst_33 = arith.constant 1.000000e+00 : f32
    %32 = vector.broadcast %cst_33 : f32 to vector<16x1xf32>
    %33 = arith.divf %32, %31 : vector<16x1xf32>
    %cst_34 = arith.constant dense<0.000000e+00> : vector<16x8xf32>
    %34 = tpu.matmul %29, %22, %cst_34 {dimension_numbers = #tpu.dot_dimension_numbers<[1], [0], [0], [1], [0, 0, 1, 1], [], []>} : vector<16x16xf32>, vector<16x8xf32>, vector<16x8xf32> -> vector<16x8xf32>
    %35 = vector.broadcast %33 : vector<16x1xf32> to vector<16x8xf32>
    %36 = arith.mulf %34, %35 : vector<16x8xf32>
    %c0_35 = arith.constant 0 : index
    %c0_36 = arith.constant 0 : index
    %c0_37 = arith.constant 0 : index
    %c0_38 = arith.constant 0 : index
    %37 = vector.load %arg6[%c0_35, %c0_36, %c0_37, %c0_38] : memref<2x4x8x32xf32, #tpu.memory_space<vmem>>, vector<1x1x8x32xf32>
    %38 = vector.shape_cast %37 : vector<1x1x8x32xf32> to vector<8x32xf32>
    %cst_39 = arith.constant dense<0.000000e+00> : vector<16x32xf32>
    %39 = tpu.matmul %36, %38, %cst_39 {dimension_numbers = #tpu.dot_dimension_numbers<[1], [0], [0], [1], [0, 0, 1, 1], [], []>} : vector<16x8xf32>, vector<8x32xf32>, vector<16x32xf32> -> vector<16x32xf32>
    %c0_40 = arith.constant 0 : index
    %c1_41 = arith.constant 1 : index
    %c0_42 = arith.constant 0 : index
    %c0_43 = arith.constant 0 : index
    %40 = vector.load %arg2[%c0_40, %c1_41, %c0_42, %c0_43] : memref<2x4x32x8xf32, #tpu.memory_space<vmem>>, vector<1x1x32x8xf32>
    %41 = vector.shape_cast %40 : vector<1x1x32x8xf32> to vector<32x8xf32>
    %cst_44 = arith.constant dense<0.000000e+00> : vector<16x8xf32>
    %42 = tpu.matmul %0, %41, %cst_44 {dimension_numbers = #tpu.dot_dimension_numbers<[1], [0], [0], [1], [0, 0, 1, 1], [], []>} : vector<16x32xf32>, vector<32x8xf32>, vector<16x8xf32> -> vector<16x8xf32>
    %c0_45 = arith.constant 0 : index
    %c0_46 = arith.constant 0 : index
    %c1_47 = arith.constant 1 : index
    %c0_48 = arith.constant 0 : index
    %c0_49 = arith.constant 0 : index
    %43 = vector.load %arg5[%c0_45, %c0_46, %c1_47, %c0_48, %c0_49] : memref<2x3x4x1x8xf32, #tpu.memory_space<vmem>>, vector<1x1x1x1x8xf32>
    %44 = vector.shape_cast %43 : vector<1x1x1x1x8xf32> to vector<1x8xf32>
    %45 = vector.broadcast %44 : vector<1x8xf32> to vector<16x8xf32>
    %46 = arith.addf %42, %45 : vector<16x8xf32>
    %c0_50 = arith.constant 0 : index
    %c1_51 = arith.constant 1 : index
    %c0_52 = arith.constant 0 : index
    %c0_53 = arith.constant 0 : index
    %47 = vector.load %arg3[%c0_50, %c1_51, %c0_52, %c0_53] : memref<2x4x32x8xf32, #tpu.memory_space<vmem>>, vector<1x1x32x8xf32>
    %48 = vector.shape_cast %47 : vector<1x1x32x8xf32> to vector<32x8xf32>
    %cst_54 = arith.constant dense<0.000000e+00> : vector<16x8xf32>
    %49 = tpu.matmul %0, %48, %cst_54 {dimension_numbers = #tpu.dot_dimension_numbers<[1], [0], [0], [1], [0, 0, 1, 1], [], []>} : vector<16x32xf32>, vector<32x8xf32>, vector<16x8xf32> -> vector<16x8xf32>
    %c0_55 = arith.constant 0 : index
    %c1_56 = arith.constant 1 : index
    %c1_57 = arith.constant 1 : index
    %c0_58 = arith.constant 0 : index
    %c0_59 = arith.constant 0 : index
    %50 = vector.load %arg5[%c0_55, %c1_56, %c1_57, %c0_58, %c0_59] : memref<2x3x4x1x8xf32, #tpu.memory_space<vmem>>, vector<1x1x1x1x8xf32>
    %51 = vector.shape_cast %50 : vector<1x1x1x1x8xf32> to vector<1x8xf32>
    %52 = vector.broadcast %51 : vector<1x8xf32> to vector<16x8xf32>
    %53 = arith.addf %49, %52 : vector<16x8xf32>
    %c0_60 = arith.constant 0 : index
    %c1_61 = arith.constant 1 : index
    %c0_62 = arith.constant 0 : index
    %c0_63 = arith.constant 0 : index
    %54 = vector.load %arg4[%c0_60, %c1_61, %c0_62, %c0_63] : memref<2x4x32x8xf32, #tpu.memory_space<vmem>>, vector<1x1x32x8xf32>
    %55 = vector.shape_cast %54 : vector<1x1x32x8xf32> to vector<32x8xf32>
    %cst_64 = arith.constant dense<0.000000e+00> : vector<16x8xf32>
    %56 = tpu.matmul %0, %55, %cst_64 {dimension_numbers = #tpu.dot_dimension_numbers<[1], [0], [0], [1], [0, 0, 1, 1], [], []>} : vector<16x32xf32>, vector<32x8xf32>, vector<16x8xf32> -> vector<16x8xf32>
    %c0_65 = arith.constant 0 : index
    %c2_66 = arith.constant 2 : index
    %c1_67 = arith.constant 1 : index
    %c0_68 = arith.constant 0 : index
    %c0_69 = arith.constant 0 : index
    %57 = vector.load %arg5[%c0_65, %c2_66, %c1_67, %c0_68, %c0_69] : memref<2x3x4x1x8xf32, #tpu.memory_space<vmem>>, vector<1x1x1x1x8xf32>
    %58 = vector.shape_cast %57 : vector<1x1x1x1x8xf32> to vector<1x8xf32>
    %59 = vector.broadcast %58 : vector<1x8xf32> to vector<16x8xf32>
    %60 = arith.addf %56, %59 : vector<16x8xf32>
    %cst_70 = arith.constant dense<0.000000e+00> : vector<16x16xf32>
    %61 = tpu.matmul %46, %53, %cst_70 {dimension_numbers = #tpu.dot_dimension_numbers<[1], [1], [0], [0], [0, 0, 1, 0], [], []>} : vector<16x8xf32>, vector<16x8xf32>, vector<16x16xf32> -> vector<16x16xf32>
    %62 = arith.addf %61, %1 : vector<16x16xf32>
    %cst_71 = arith.constant dense<0xFF800000> : vector<16xf32>
    %63 = vector.multi_reduction <maximumf>, %62, %cst_71 [1] : vector<16x16xf32> to vector<16xf32>
    %64 = vector.shape_cast %63 : vector<16xf32> to vector<16x1xf32>
    %65 = vector.broadcast %64 : vector<16x1xf32> to vector<16x16xf32>
    %66 = arith.subf %62, %65 : vector<16x16xf32>
    %67 = math.exp %66 : vector<16x16xf32>
    %cst_72 = arith.constant dense<0.000000e+00> : vector<16xf32>
    %68 = vector.multi_reduction <add>, %67, %cst_72 [1] : vector<16x16xf32> to vector<16xf32>
    %69 = vector.shape_cast %68 : vector<16xf32> to vector<16x1xf32>
    %cst_73 = arith.constant 1.000000e+00 : f32
    %70 = vector.broadcast %cst_73 : f32 to vector<16x1xf32>
    %71 = arith.divf %70, %69 : vector<16x1xf32>
    %cst_74 = arith.constant dense<0.000000e+00> : vector<16x8xf32>
    %72 = tpu.matmul %67, %60, %cst_74 {dimension_numbers = #tpu.dot_dimension_numbers<[1], [0], [0], [1], [0, 0, 1, 1], [], []>} : vector<16x16xf32>, vector<16x8xf32>, vector<16x8xf32> -> vector<16x8xf32>
    %73 = vector.broadcast %71 : vector<16x1xf32> to vector<16x8xf32>
    %74 = arith.mulf %72, %73 : vector<16x8xf32>
    %c0_75 = arith.constant 0 : index
    %c1_76 = arith.constant 1 : index
    %c0_77 = arith.constant 0 : index
    %c0_78 = arith.constant 0 : index
    %75 = vector.load %arg6[%c0_75, %c1_76, %c0_77, %c0_78] : memref<2x4x8x32xf32, #tpu.memory_space<vmem>>, vector<1x1x8x32xf32>
    %76 = vector.shape_cast %75 : vector<1x1x8x32xf32> to vector<8x32xf32>
    %cst_79 = arith.constant dense<0.000000e+00> : vector<16x32xf32>
    %77 = tpu.matmul %74, %76, %cst_79 {dimension_numbers = #tpu.dot_dimension_numbers<[1], [0], [0], [1], [0, 0, 1, 1], [], []>} : vector<16x8xf32>, vector<8x32xf32>, vector<16x32xf32> -> vector<16x32xf32>
    %78 = arith.addf %39, %77 : vector<16x32xf32>
    %c0_80 = arith.constant 0 : index
    %c2_81 = arith.constant 2 : index
    %c0_82 = arith.constant 0 : index
    %c0_83 = arith.constant 0 : index
    %79 = vector.load %arg2[%c0_80, %c2_81, %c0_82, %c0_83] : memref<2x4x32x8xf32, #tpu.memory_space<vmem>>, vector<1x1x32x8xf32>
    %80 = vector.shape_cast %79 : vector<1x1x32x8xf32> to vector<32x8xf32>
    %cst_84 = arith.constant dense<0.000000e+00> : vector<16x8xf32>
    %81 = tpu.matmul %0, %80, %cst_84 {dimension_numbers = #tpu.dot_dimension_numbers<[1], [0], [0], [1], [0, 0, 1, 1], [], []>} : vector<16x32xf32>, vector<32x8xf32>, vector<16x8xf32> -> vector<16x8xf32>
    %c0_85 = arith.constant 0 : index
    %c0_86 = arith.constant 0 : index
    %c2_87 = arith.constant 2 : index
    %c0_88 = arith.constant 0 : index
    %c0_89 = arith.constant 0 : index
    %82 = vector.load %arg5[%c0_85, %c0_86, %c2_87, %c0_88, %c0_89] : memref<2x3x4x1x8xf32, #tpu.memory_space<vmem>>, vector<1x1x1x1x8xf32>
    %83 = vector.shape_cast %82 : vector<1x1x1x1x8xf32> to vector<1x8xf32>
    %84 = vector.broadcast %83 : vector<1x8xf32> to vector<16x8xf32>
    %85 = arith.addf %81, %84 : vector<16x8xf32>
    %c0_90 = arith.constant 0 : index
    %c2_91 = arith.constant 2 : index
    %c0_92 = arith.constant 0 : index
    %c0_93 = arith.constant 0 : index
    %86 = vector.load %arg3[%c0_90, %c2_91, %c0_92, %c0_93] : memref<2x4x32x8xf32, #tpu.memory_space<vmem>>, vector<1x1x32x8xf32>
    %87 = vector.shape_cast %86 : vector<1x1x32x8xf32> to vector<32x8xf32>
    %cst_94 = arith.constant dense<0.000000e+00> : vector<16x8xf32>
    %88 = tpu.matmul %0, %87, %cst_94 {dimension_numbers = #tpu.dot_dimension_numbers<[1], [0], [0], [1], [0, 0, 1, 1], [], []>} : vector<16x32xf32>, vector<32x8xf32>, vector<16x8xf32> -> vector<16x8xf32>
    %c0_95 = arith.constant 0 : index
    %c1_96 = arith.constant 1 : index
    %c2_97 = arith.constant 2 : index
    %c0_98 = arith.constant 0 : index
    %c0_99 = arith.constant 0 : index
    %89 = vector.load %arg5[%c0_95, %c1_96, %c2_97, %c0_98, %c0_99] : memref<2x3x4x1x8xf32, #tpu.memory_space<vmem>>, vector<1x1x1x1x8xf32>
    %90 = vector.shape_cast %89 : vector<1x1x1x1x8xf32> to vector<1x8xf32>
    %91 = vector.broadcast %90 : vector<1x8xf32> to vector<16x8xf32>
    %92 = arith.addf %88, %91 : vector<16x8xf32>
    %c0_100 = arith.constant 0 : index
    %c2_101 = arith.constant 2 : index
    %c0_102 = arith.constant 0 : index
    %c0_103 = arith.constant 0 : index
    %93 = vector.load %arg4[%c0_100, %c2_101, %c0_102, %c0_103] : memref<2x4x32x8xf32, #tpu.memory_space<vmem>>, vector<1x1x32x8xf32>
    %94 = vector.shape_cast %93 : vector<1x1x32x8xf32> to vector<32x8xf32>
    %cst_104 = arith.constant dense<0.000000e+00> : vector<16x8xf32>
    %95 = tpu.matmul %0, %94, %cst_104 {dimension_numbers = #tpu.dot_dimension_numbers<[1], [0], [0], [1], [0, 0, 1, 1], [], []>} : vector<16x32xf32>, vector<32x8xf32>, vector<16x8xf32> -> vector<16x8xf32>
    %c0_105 = arith.constant 0 : index
    %c2_106 = arith.constant 2 : index
    %c2_107 = arith.constant 2 : index
    %c0_108 = arith.constant 0 : index
    %c0_109 = arith.constant 0 : index
    %96 = vector.load %arg5[%c0_105, %c2_106, %c2_107, %c0_108, %c0_109] : memref<2x3x4x1x8xf32, #tpu.memory_space<vmem>>, vector<1x1x1x1x8xf32>
    %97 = vector.shape_cast %96 : vector<1x1x1x1x8xf32> to vector<1x8xf32>
    %98 = vector.broadcast %97 : vector<1x8xf32> to vector<16x8xf32>
    %99 = arith.addf %95, %98 : vector<16x8xf32>
    %cst_110 = arith.constant dense<0.000000e+00> : vector<16x16xf32>
    %100 = tpu.matmul %85, %92, %cst_110 {dimension_numbers = #tpu.dot_dimension_numbers<[1], [1], [0], [0], [0, 0, 1, 0], [], []>} : vector<16x8xf32>, vector<16x8xf32>, vector<16x16xf32> -> vector<16x16xf32>
    %101 = arith.addf %100, %1 : vector<16x16xf32>
    %cst_111 = arith.constant dense<0xFF800000> : vector<16xf32>
    %102 = vector.multi_reduction <maximumf>, %101, %cst_111 [1] : vector<16x16xf32> to vector<16xf32>
    %103 = vector.shape_cast %102 : vector<16xf32> to vector<16x1xf32>
    %104 = vector.broadcast %103 : vector<16x1xf32> to vector<16x16xf32>
    %105 = arith.subf %101, %104 : vector<16x16xf32>
    %106 = math.exp %105 : vector<16x16xf32>
    %cst_112 = arith.constant dense<0.000000e+00> : vector<16xf32>
    %107 = vector.multi_reduction <add>, %106, %cst_112 [1] : vector<16x16xf32> to vector<16xf32>
    %108 = vector.shape_cast %107 : vector<16xf32> to vector<16x1xf32>
    %cst_113 = arith.constant 1.000000e+00 : f32
    %109 = vector.broadcast %cst_113 : f32 to vector<16x1xf32>
    %110 = arith.divf %109, %108 : vector<16x1xf32>
    %cst_114 = arith.constant dense<0.000000e+00> : vector<16x8xf32>
    %111 = tpu.matmul %106, %99, %cst_114 {dimension_numbers = #tpu.dot_dimension_numbers<[1], [0], [0], [1], [0, 0, 1, 1], [], []>} : vector<16x16xf32>, vector<16x8xf32>, vector<16x8xf32> -> vector<16x8xf32>
    %112 = vector.broadcast %110 : vector<16x1xf32> to vector<16x8xf32>
    %113 = arith.mulf %111, %112 : vector<16x8xf32>
    %c0_115 = arith.constant 0 : index
    %c2_116 = arith.constant 2 : index
    %c0_117 = arith.constant 0 : index
    %c0_118 = arith.constant 0 : index
    %114 = vector.load %arg6[%c0_115, %c2_116, %c0_117, %c0_118] : memref<2x4x8x32xf32, #tpu.memory_space<vmem>>, vector<1x1x8x32xf32>
    %115 = vector.shape_cast %114 : vector<1x1x8x32xf32> to vector<8x32xf32>
    %cst_119 = arith.constant dense<0.000000e+00> : vector<16x32xf32>
    %116 = tpu.matmul %113, %115, %cst_119 {dimension_numbers = #tpu.dot_dimension_numbers<[1], [0], [0], [1], [0, 0, 1, 1], [], []>} : vector<16x8xf32>, vector<8x32xf32>, vector<16x32xf32> -> vector<16x32xf32>
    %117 = arith.addf %78, %116 : vector<16x32xf32>
    %c0_120 = arith.constant 0 : index
    %c3 = arith.constant 3 : index
    %c0_121 = arith.constant 0 : index
    %c0_122 = arith.constant 0 : index
    %118 = vector.load %arg2[%c0_120, %c3, %c0_121, %c0_122] : memref<2x4x32x8xf32, #tpu.memory_space<vmem>>, vector<1x1x32x8xf32>
    %119 = vector.shape_cast %118 : vector<1x1x32x8xf32> to vector<32x8xf32>
    %cst_123 = arith.constant dense<0.000000e+00> : vector<16x8xf32>
    %120 = tpu.matmul %0, %119, %cst_123 {dimension_numbers = #tpu.dot_dimension_numbers<[1], [0], [0], [1], [0, 0, 1, 1], [], []>} : vector<16x32xf32>, vector<32x8xf32>, vector<16x8xf32> -> vector<16x8xf32>
    %c0_124 = arith.constant 0 : index
    %c0_125 = arith.constant 0 : index
    %c3_126 = arith.constant 3 : index
    %c0_127 = arith.constant 0 : index
    %c0_128 = arith.constant 0 : index
    %121 = vector.load %arg5[%c0_124, %c0_125, %c3_126, %c0_127, %c0_128] : memref<2x3x4x1x8xf32, #tpu.memory_space<vmem>>, vector<1x1x1x1x8xf32>
    %122 = vector.shape_cast %121 : vector<1x1x1x1x8xf32> to vector<1x8xf32>
    %123 = vector.broadcast %122 : vector<1x8xf32> to vector<16x8xf32>
    %124 = arith.addf %120, %123 : vector<16x8xf32>
    %c0_129 = arith.constant 0 : index
    %c3_130 = arith.constant 3 : index
    %c0_131 = arith.constant 0 : index
    %c0_132 = arith.constant 0 : index
    %125 = vector.load %arg3[%c0_129, %c3_130, %c0_131, %c0_132] : memref<2x4x32x8xf32, #tpu.memory_space<vmem>>, vector<1x1x32x8xf32>
    %126 = vector.shape_cast %125 : vector<1x1x32x8xf32> to vector<32x8xf32>
    %cst_133 = arith.constant dense<0.000000e+00> : vector<16x8xf32>
    %127 = tpu.matmul %0, %126, %cst_133 {dimension_numbers = #tpu.dot_dimension_numbers<[1], [0], [0], [1], [0, 0, 1, 1], [], []>} : vector<16x32xf32>, vector<32x8xf32>, vector<16x8xf32> -> vector<16x8xf32>
    %c0_134 = arith.constant 0 : index
    %c1_135 = arith.constant 1 : index
    %c3_136 = arith.constant 3 : index
    %c0_137 = arith.constant 0 : index
    %c0_138 = arith.constant 0 : index
    %128 = vector.load %arg5[%c0_134, %c1_135, %c3_136, %c0_137, %c0_138] : memref<2x3x4x1x8xf32, #tpu.memory_space<vmem>>, vector<1x1x1x1x8xf32>
    %129 = vector.shape_cast %128 : vector<1x1x1x1x8xf32> to vector<1x8xf32>
    %130 = vector.broadcast %129 : vector<1x8xf32> to vector<16x8xf32>
    %131 = arith.addf %127, %130 : vector<16x8xf32>
    %c0_139 = arith.constant 0 : index
    %c3_140 = arith.constant 3 : index
    %c0_141 = arith.constant 0 : index
    %c0_142 = arith.constant 0 : index
    %132 = vector.load %arg4[%c0_139, %c3_140, %c0_141, %c0_142] : memref<2x4x32x8xf32, #tpu.memory_space<vmem>>, vector<1x1x32x8xf32>
    %133 = vector.shape_cast %132 : vector<1x1x32x8xf32> to vector<32x8xf32>
    %cst_143 = arith.constant dense<0.000000e+00> : vector<16x8xf32>
    %134 = tpu.matmul %0, %133, %cst_143 {dimension_numbers = #tpu.dot_dimension_numbers<[1], [0], [0], [1], [0, 0, 1, 1], [], []>} : vector<16x32xf32>, vector<32x8xf32>, vector<16x8xf32> -> vector<16x8xf32>
    %c0_144 = arith.constant 0 : index
    %c2_145 = arith.constant 2 : index
    %c3_146 = arith.constant 3 : index
    %c0_147 = arith.constant 0 : index
    %c0_148 = arith.constant 0 : index
    %135 = vector.load %arg5[%c0_144, %c2_145, %c3_146, %c0_147, %c0_148] : memref<2x3x4x1x8xf32, #tpu.memory_space<vmem>>, vector<1x1x1x1x8xf32>
    %136 = vector.shape_cast %135 : vector<1x1x1x1x8xf32> to vector<1x8xf32>
    %137 = vector.broadcast %136 : vector<1x8xf32> to vector<16x8xf32>
    %138 = arith.addf %134, %137 : vector<16x8xf32>
    %cst_149 = arith.constant dense<0.000000e+00> : vector<16x16xf32>
    %139 = tpu.matmul %124, %131, %cst_149 {dimension_numbers = #tpu.dot_dimension_numbers<[1], [1], [0], [0], [0, 0, 1, 0], [], []>} : vector<16x8xf32>, vector<16x8xf32>, vector<16x16xf32> -> vector<16x16xf32>
    %140 = arith.addf %139, %1 : vector<16x16xf32>
    %cst_150 = arith.constant dense<0xFF800000> : vector<16xf32>
    %141 = vector.multi_reduction <maximumf>, %140, %cst_150 [1] : vector<16x16xf32> to vector<16xf32>
    %142 = vector.shape_cast %141 : vector<16xf32> to vector<16x1xf32>
    %143 = vector.broadcast %142 : vector<16x1xf32> to vector<16x16xf32>
    %144 = arith.subf %140, %143 : vector<16x16xf32>
    %145 = math.exp %144 : vector<16x16xf32>
    %cst_151 = arith.constant dense<0.000000e+00> : vector<16xf32>
    %146 = vector.multi_reduction <add>, %145, %cst_151 [1] : vector<16x16xf32> to vector<16xf32>
    %147 = vector.shape_cast %146 : vector<16xf32> to vector<16x1xf32>
    %cst_152 = arith.constant 1.000000e+00 : f32
    %148 = vector.broadcast %cst_152 : f32 to vector<16x1xf32>
    %149 = arith.divf %148, %147 : vector<16x1xf32>
    %cst_153 = arith.constant dense<0.000000e+00> : vector<16x8xf32>
    %150 = tpu.matmul %145, %138, %cst_153 {dimension_numbers = #tpu.dot_dimension_numbers<[1], [0], [0], [1], [0, 0, 1, 1], [], []>} : vector<16x16xf32>, vector<16x8xf32>, vector<16x8xf32> -> vector<16x8xf32>
    %151 = vector.broadcast %149 : vector<16x1xf32> to vector<16x8xf32>
    %152 = arith.mulf %150, %151 : vector<16x8xf32>
    %c0_154 = arith.constant 0 : index
    %c3_155 = arith.constant 3 : index
    %c0_156 = arith.constant 0 : index
    %c0_157 = arith.constant 0 : index
    %153 = vector.load %arg6[%c0_154, %c3_155, %c0_156, %c0_157] : memref<2x4x8x32xf32, #tpu.memory_space<vmem>>, vector<1x1x8x32xf32>
    %154 = vector.shape_cast %153 : vector<1x1x8x32xf32> to vector<8x32xf32>
    %cst_158 = arith.constant dense<0.000000e+00> : vector<16x32xf32>
    %155 = tpu.matmul %152, %154, %cst_158 {dimension_numbers = #tpu.dot_dimension_numbers<[1], [0], [0], [1], [0, 0, 1, 1], [], []>} : vector<16x8xf32>, vector<8x32xf32>, vector<16x32xf32> -> vector<16x32xf32>
    %156 = arith.addf %117, %155 : vector<16x32xf32>
    %c0_159 = arith.constant 0 : index
    %c0_160 = arith.constant 0 : index
    %c0_161 = arith.constant 0 : index
    %157 = vector.load %arg7[%c0_159, %c0_160, %c0_161] : memref<2x6x32xf32, #tpu.memory_space<vmem>>, vector<1x1x32xf32>
    %158 = vector.shape_cast %157 : vector<1x1x32xf32> to vector<1x32xf32>
    %159 = vector.broadcast %158 : vector<1x32xf32> to vector<16x32xf32>
    %160 = arith.addf %156, %159 : vector<16x32xf32>
    %161 = arith.addf %0, %160 : vector<16x32xf32>
    %c0_162 = arith.constant 0 : index
    %c1_163 = arith.constant 1 : index
    %c0_164 = arith.constant 0 : index
    %162 = vector.load %arg7[%c0_162, %c1_163, %c0_164] : memref<2x6x32xf32, #tpu.memory_space<vmem>>, vector<1x1x32xf32>
    %163 = vector.shape_cast %162 : vector<1x1x32xf32> to vector<1x32xf32>
    %c0_165 = arith.constant 0 : index
    %c2_166 = arith.constant 2 : index
    %c0_167 = arith.constant 0 : index
    %164 = vector.load %arg7[%c0_165, %c2_166, %c0_167] : memref<2x6x32xf32, #tpu.memory_space<vmem>>, vector<1x1x32xf32>
    %165 = vector.shape_cast %164 : vector<1x1x32xf32> to vector<1x32xf32>
    %cst_168 = arith.constant dense<0.000000e+00> : vector<16xf32>
    %166 = vector.multi_reduction <add>, %161, %cst_168 [1] : vector<16x32xf32> to vector<16xf32>
    %167 = vector.shape_cast %166 : vector<16xf32> to vector<16x1xf32>
    %cst_169 = arith.constant 3.200000e+01 : f32
    %168 = vector.broadcast %cst_169 : f32 to vector<16x1xf32>
    %169 = arith.divf %167, %168 : vector<16x1xf32>
    %170 = vector.broadcast %169 : vector<16x1xf32> to vector<16x32xf32>
    %171 = arith.subf %161, %170 : vector<16x32xf32>
    %172 = arith.mulf %171, %171 : vector<16x32xf32>
    %cst_170 = arith.constant dense<0.000000e+00> : vector<16xf32>
    %173 = vector.multi_reduction <add>, %172, %cst_170 [1] : vector<16x32xf32> to vector<16xf32>
    %174 = vector.shape_cast %173 : vector<16xf32> to vector<16x1xf32>
    %cst_171 = arith.constant 3.200000e+01 : f32
    %175 = vector.broadcast %cst_171 : f32 to vector<16x1xf32>
    %176 = arith.divf %174, %175 : vector<16x1xf32>
    %177 = vector.broadcast %169 : vector<16x1xf32> to vector<16x32xf32>
    %178 = arith.subf %161, %177 : vector<16x32xf32>
    %cst_172 = arith.constant 9.99999974E-6 : f32
    %179 = vector.broadcast %cst_172 : f32 to vector<16x1xf32>
    %180 = arith.addf %176, %179 : vector<16x1xf32>
    %181 = math.rsqrt %180 : vector<16x1xf32>
    %182 = vector.broadcast %181 : vector<16x1xf32> to vector<16x32xf32>
    %183 = arith.mulf %178, %182 : vector<16x32xf32>
    %184 = vector.broadcast %163 : vector<1x32xf32> to vector<16x32xf32>
    %185 = arith.mulf %183, %184 : vector<16x32xf32>
    %186 = vector.broadcast %165 : vector<1x32xf32> to vector<16x32xf32>
    %187 = arith.addf %185, %186 : vector<16x32xf32>
    %c0_173 = arith.constant 0 : index
    %c0_174 = arith.constant 0 : index
    %c0_175 = arith.constant 0 : index
    %188 = vector.load %arg8[%c0_173, %c0_174, %c0_175] : memref<2x32x128xf32, #tpu.memory_space<vmem>>, vector<1x32x128xf32>
    %189 = vector.shape_cast %188 : vector<1x32x128xf32> to vector<32x128xf32>
    %cst_176 = arith.constant dense<0.000000e+00> : vector<16x128xf32>
    %190 = tpu.matmul %187, %189, %cst_176 {dimension_numbers = #tpu.dot_dimension_numbers<[1], [0], [0], [1], [0, 0, 1, 1], [], []>} : vector<16x32xf32>, vector<32x128xf32>, vector<16x128xf32> -> vector<16x128xf32>
    %c0_177 = arith.constant 0 : index
    %c0_178 = arith.constant 0 : index
    %c0_179 = arith.constant 0 : index
    %191 = vector.load %arg9[%c0_177, %c0_178, %c0_179] : memref<2x1x128xf32, #tpu.memory_space<vmem>>, vector<1x1x128xf32>
    %192 = vector.shape_cast %191 : vector<1x1x128xf32> to vector<1x128xf32>
    %193 = vector.broadcast %192 : vector<1x128xf32> to vector<16x128xf32>
    %194 = arith.addf %190, %193 : vector<16x128xf32>
    %cst_180 = arith.constant 0.000000e+00 : f32
    %195 = vector.broadcast %cst_180 : f32 to vector<16x128xf32>
    %196 = arith.maximumf %194, %195 : vector<16x128xf32>
    %c0_181 = arith.constant 0 : index
    %c0_182 = arith.constant 0 : index
    %c0_183 = arith.constant 0 : index
    %197 = vector.load %arg10[%c0_181, %c0_182, %c0_183] : memref<2x128x32xf32, #tpu.memory_space<vmem>>, vector<1x128x32xf32>
    %198 = vector.shape_cast %197 : vector<1x128x32xf32> to vector<128x32xf32>
    %cst_184 = arith.constant dense<0.000000e+00> : vector<16x32xf32>
    %199 = tpu.matmul %196, %198, %cst_184 {dimension_numbers = #tpu.dot_dimension_numbers<[1], [0], [0], [1], [0, 0, 1, 1], [], []>} : vector<16x128xf32>, vector<128x32xf32>, vector<16x32xf32> -> vector<16x32xf32>
    %c0_185 = arith.constant 0 : index
    %c3_186 = arith.constant 3 : index
    %c0_187 = arith.constant 0 : index
    %200 = vector.load %arg7[%c0_185, %c3_186, %c0_187] : memref<2x6x32xf32, #tpu.memory_space<vmem>>, vector<1x1x32xf32>
    %201 = vector.shape_cast %200 : vector<1x1x32xf32> to vector<1x32xf32>
    %202 = vector.broadcast %201 : vector<1x32xf32> to vector<16x32xf32>
    %203 = arith.addf %199, %202 : vector<16x32xf32>
    %204 = arith.addf %187, %203 : vector<16x32xf32>
    %c0_188 = arith.constant 0 : index
    %c4 = arith.constant 4 : index
    %c0_189 = arith.constant 0 : index
    %205 = vector.load %arg7[%c0_188, %c4, %c0_189] : memref<2x6x32xf32, #tpu.memory_space<vmem>>, vector<1x1x32xf32>
    %206 = vector.shape_cast %205 : vector<1x1x32xf32> to vector<1x32xf32>
    %c0_190 = arith.constant 0 : index
    %c5 = arith.constant 5 : index
    %c0_191 = arith.constant 0 : index
    %207 = vector.load %arg7[%c0_190, %c5, %c0_191] : memref<2x6x32xf32, #tpu.memory_space<vmem>>, vector<1x1x32xf32>
    %208 = vector.shape_cast %207 : vector<1x1x32xf32> to vector<1x32xf32>
    %cst_192 = arith.constant dense<0.000000e+00> : vector<16xf32>
    %209 = vector.multi_reduction <add>, %204, %cst_192 [1] : vector<16x32xf32> to vector<16xf32>
    %210 = vector.shape_cast %209 : vector<16xf32> to vector<16x1xf32>
    %cst_193 = arith.constant 3.200000e+01 : f32
    %211 = vector.broadcast %cst_193 : f32 to vector<16x1xf32>
    %212 = arith.divf %210, %211 : vector<16x1xf32>
    %213 = vector.broadcast %212 : vector<16x1xf32> to vector<16x32xf32>
    %214 = arith.subf %204, %213 : vector<16x32xf32>
    %215 = arith.mulf %214, %214 : vector<16x32xf32>
    %cst_194 = arith.constant dense<0.000000e+00> : vector<16xf32>
    %216 = vector.multi_reduction <add>, %215, %cst_194 [1] : vector<16x32xf32> to vector<16xf32>
    %217 = vector.shape_cast %216 : vector<16xf32> to vector<16x1xf32>
    %cst_195 = arith.constant 3.200000e+01 : f32
    %218 = vector.broadcast %cst_195 : f32 to vector<16x1xf32>
    %219 = arith.divf %217, %218 : vector<16x1xf32>
    %220 = vector.broadcast %212 : vector<16x1xf32> to vector<16x32xf32>
    %221 = arith.subf %204, %220 : vector<16x32xf32>
    %cst_196 = arith.constant 9.99999974E-6 : f32
    %222 = vector.broadcast %cst_196 : f32 to vector<16x1xf32>
    %223 = arith.addf %219, %222 : vector<16x1xf32>
    %224 = math.rsqrt %223 : vector<16x1xf32>
    %225 = vector.broadcast %224 : vector<16x1xf32> to vector<16x32xf32>
    %226 = arith.mulf %221, %225 : vector<16x32xf32>
    %227 = vector.broadcast %206 : vector<1x32xf32> to vector<16x32xf32>
    %228 = arith.mulf %226, %227 : vector<16x32xf32>
    %229 = vector.broadcast %208 : vector<1x32xf32> to vector<16x32xf32>
    %230 = arith.addf %228, %229 : vector<16x32xf32>
    %c1_197 = arith.constant 1 : index
    %c0_198 = arith.constant 0 : index
    %c0_199 = arith.constant 0 : index
    %c0_200 = arith.constant 0 : index
    %231 = vector.load %arg2[%c1_197, %c0_198, %c0_199, %c0_200] : memref<2x4x32x8xf32, #tpu.memory_space<vmem>>, vector<1x1x32x8xf32>
    %232 = vector.shape_cast %231 : vector<1x1x32x8xf32> to vector<32x8xf32>
    %cst_201 = arith.constant dense<0.000000e+00> : vector<16x8xf32>
    %233 = tpu.matmul %230, %232, %cst_201 {dimension_numbers = #tpu.dot_dimension_numbers<[1], [0], [0], [1], [0, 0, 1, 1], [], []>} : vector<16x32xf32>, vector<32x8xf32>, vector<16x8xf32> -> vector<16x8xf32>
    %c1_202 = arith.constant 1 : index
    %c0_203 = arith.constant 0 : index
    %c0_204 = arith.constant 0 : index
    %c0_205 = arith.constant 0 : index
    %c0_206 = arith.constant 0 : index
    %234 = vector.load %arg5[%c1_202, %c0_203, %c0_204, %c0_205, %c0_206] : memref<2x3x4x1x8xf32, #tpu.memory_space<vmem>>, vector<1x1x1x1x8xf32>
    %235 = vector.shape_cast %234 : vector<1x1x1x1x8xf32> to vector<1x8xf32>
    %236 = vector.broadcast %235 : vector<1x8xf32> to vector<16x8xf32>
    %237 = arith.addf %233, %236 : vector<16x8xf32>
    %c1_207 = arith.constant 1 : index
    %c0_208 = arith.constant 0 : index
    %c0_209 = arith.constant 0 : index
    %c0_210 = arith.constant 0 : index
    %238 = vector.load %arg3[%c1_207, %c0_208, %c0_209, %c0_210] : memref<2x4x32x8xf32, #tpu.memory_space<vmem>>, vector<1x1x32x8xf32>
    %239 = vector.shape_cast %238 : vector<1x1x32x8xf32> to vector<32x8xf32>
    %cst_211 = arith.constant dense<0.000000e+00> : vector<16x8xf32>
    %240 = tpu.matmul %230, %239, %cst_211 {dimension_numbers = #tpu.dot_dimension_numbers<[1], [0], [0], [1], [0, 0, 1, 1], [], []>} : vector<16x32xf32>, vector<32x8xf32>, vector<16x8xf32> -> vector<16x8xf32>
    %c1_212 = arith.constant 1 : index
    %c1_213 = arith.constant 1 : index
    %c0_214 = arith.constant 0 : index
    %c0_215 = arith.constant 0 : index
    %c0_216 = arith.constant 0 : index
    %241 = vector.load %arg5[%c1_212, %c1_213, %c0_214, %c0_215, %c0_216] : memref<2x3x4x1x8xf32, #tpu.memory_space<vmem>>, vector<1x1x1x1x8xf32>
    %242 = vector.shape_cast %241 : vector<1x1x1x1x8xf32> to vector<1x8xf32>
    %243 = vector.broadcast %242 : vector<1x8xf32> to vector<16x8xf32>
    %244 = arith.addf %240, %243 : vector<16x8xf32>
    %c1_217 = arith.constant 1 : index
    %c0_218 = arith.constant 0 : index
    %c0_219 = arith.constant 0 : index
    %c0_220 = arith.constant 0 : index
    %245 = vector.load %arg4[%c1_217, %c0_218, %c0_219, %c0_220] : memref<2x4x32x8xf32, #tpu.memory_space<vmem>>, vector<1x1x32x8xf32>
    %246 = vector.shape_cast %245 : vector<1x1x32x8xf32> to vector<32x8xf32>
    %cst_221 = arith.constant dense<0.000000e+00> : vector<16x8xf32>
    %247 = tpu.matmul %230, %246, %cst_221 {dimension_numbers = #tpu.dot_dimension_numbers<[1], [0], [0], [1], [0, 0, 1, 1], [], []>} : vector<16x32xf32>, vector<32x8xf32>, vector<16x8xf32> -> vector<16x8xf32>
    %c1_222 = arith.constant 1 : index
    %c2_223 = arith.constant 2 : index
    %c0_224 = arith.constant 0 : index
    %c0_225 = arith.constant 0 : index
    %c0_226 = arith.constant 0 : index
    %248 = vector.load %arg5[%c1_222, %c2_223, %c0_224, %c0_225, %c0_226] : memref<2x3x4x1x8xf32, #tpu.memory_space<vmem>>, vector<1x1x1x1x8xf32>
    %249 = vector.shape_cast %248 : vector<1x1x1x1x8xf32> to vector<1x8xf32>
    %250 = vector.broadcast %249 : vector<1x8xf32> to vector<16x8xf32>
    %251 = arith.addf %247, %250 : vector<16x8xf32>
    %cst_227 = arith.constant dense<0.000000e+00> : vector<16x16xf32>
    %252 = tpu.matmul %237, %244, %cst_227 {dimension_numbers = #tpu.dot_dimension_numbers<[1], [1], [0], [0], [0, 0, 1, 0], [], []>} : vector<16x8xf32>, vector<16x8xf32>, vector<16x16xf32> -> vector<16x16xf32>
    %253 = arith.addf %252, %1 : vector<16x16xf32>
    %cst_228 = arith.constant dense<0xFF800000> : vector<16xf32>
    %254 = vector.multi_reduction <maximumf>, %253, %cst_228 [1] : vector<16x16xf32> to vector<16xf32>
    %255 = vector.shape_cast %254 : vector<16xf32> to vector<16x1xf32>
    %256 = vector.broadcast %255 : vector<16x1xf32> to vector<16x16xf32>
    %257 = arith.subf %253, %256 : vector<16x16xf32>
    %258 = math.exp %257 : vector<16x16xf32>
    %cst_229 = arith.constant dense<0.000000e+00> : vector<16xf32>
    %259 = vector.multi_reduction <add>, %258, %cst_229 [1] : vector<16x16xf32> to vector<16xf32>
    %260 = vector.shape_cast %259 : vector<16xf32> to vector<16x1xf32>
    %cst_230 = arith.constant 1.000000e+00 : f32
    %261 = vector.broadcast %cst_230 : f32 to vector<16x1xf32>
    %262 = arith.divf %261, %260 : vector<16x1xf32>
    %cst_231 = arith.constant dense<0.000000e+00> : vector<16x8xf32>
    %263 = tpu.matmul %258, %251, %cst_231 {dimension_numbers = #tpu.dot_dimension_numbers<[1], [0], [0], [1], [0, 0, 1, 1], [], []>} : vector<16x16xf32>, vector<16x8xf32>, vector<16x8xf32> -> vector<16x8xf32>
    %264 = vector.broadcast %262 : vector<16x1xf32> to vector<16x8xf32>
    %265 = arith.mulf %263, %264 : vector<16x8xf32>
    %c1_232 = arith.constant 1 : index
    %c0_233 = arith.constant 0 : index
    %c0_234 = arith.constant 0 : index
    %c0_235 = arith.constant 0 : index
    %266 = vector.load %arg6[%c1_232, %c0_233, %c0_234, %c0_235] : memref<2x4x8x32xf32, #tpu.memory_space<vmem>>, vector<1x1x8x32xf32>
    %267 = vector.shape_cast %266 : vector<1x1x8x32xf32> to vector<8x32xf32>
    %cst_236 = arith.constant dense<0.000000e+00> : vector<16x32xf32>
    %268 = tpu.matmul %265, %267, %cst_236 {dimension_numbers = #tpu.dot_dimension_numbers<[1], [0], [0], [1], [0, 0, 1, 1], [], []>} : vector<16x8xf32>, vector<8x32xf32>, vector<16x32xf32> -> vector<16x32xf32>
    %c1_237 = arith.constant 1 : index
    %c1_238 = arith.constant 1 : index
    %c0_239 = arith.constant 0 : index
    %c0_240 = arith.constant 0 : index
    %269 = vector.load %arg2[%c1_237, %c1_238, %c0_239, %c0_240] : memref<2x4x32x8xf32, #tpu.memory_space<vmem>>, vector<1x1x32x8xf32>
    %270 = vector.shape_cast %269 : vector<1x1x32x8xf32> to vector<32x8xf32>
    %cst_241 = arith.constant dense<0.000000e+00> : vector<16x8xf32>
    %271 = tpu.matmul %230, %270, %cst_241 {dimension_numbers = #tpu.dot_dimension_numbers<[1], [0], [0], [1], [0, 0, 1, 1], [], []>} : vector<16x32xf32>, vector<32x8xf32>, vector<16x8xf32> -> vector<16x8xf32>
    %c1_242 = arith.constant 1 : index
    %c0_243 = arith.constant 0 : index
    %c1_244 = arith.constant 1 : index
    %c0_245 = arith.constant 0 : index
    %c0_246 = arith.constant 0 : index
    %272 = vector.load %arg5[%c1_242, %c0_243, %c1_244, %c0_245, %c0_246] : memref<2x3x4x1x8xf32, #tpu.memory_space<vmem>>, vector<1x1x1x1x8xf32>
    %273 = vector.shape_cast %272 : vector<1x1x1x1x8xf32> to vector<1x8xf32>
    %274 = vector.broadcast %273 : vector<1x8xf32> to vector<16x8xf32>
    %275 = arith.addf %271, %274 : vector<16x8xf32>
    %c1_247 = arith.constant 1 : index
    %c1_248 = arith.constant 1 : index
    %c0_249 = arith.constant 0 : index
    %c0_250 = arith.constant 0 : index
    %276 = vector.load %arg3[%c1_247, %c1_248, %c0_249, %c0_250] : memref<2x4x32x8xf32, #tpu.memory_space<vmem>>, vector<1x1x32x8xf32>
    %277 = vector.shape_cast %276 : vector<1x1x32x8xf32> to vector<32x8xf32>
    %cst_251 = arith.constant dense<0.000000e+00> : vector<16x8xf32>
    %278 = tpu.matmul %230, %277, %cst_251 {dimension_numbers = #tpu.dot_dimension_numbers<[1], [0], [0], [1], [0, 0, 1, 1], [], []>} : vector<16x32xf32>, vector<32x8xf32>, vector<16x8xf32> -> vector<16x8xf32>
    %c1_252 = arith.constant 1 : index
    %c1_253 = arith.constant 1 : index
    %c1_254 = arith.constant 1 : index
    %c0_255 = arith.constant 0 : index
    %c0_256 = arith.constant 0 : index
    %279 = vector.load %arg5[%c1_252, %c1_253, %c1_254, %c0_255, %c0_256] : memref<2x3x4x1x8xf32, #tpu.memory_space<vmem>>, vector<1x1x1x1x8xf32>
    %280 = vector.shape_cast %279 : vector<1x1x1x1x8xf32> to vector<1x8xf32>
    %281 = vector.broadcast %280 : vector<1x8xf32> to vector<16x8xf32>
    %282 = arith.addf %278, %281 : vector<16x8xf32>
    %c1_257 = arith.constant 1 : index
    %c1_258 = arith.constant 1 : index
    %c0_259 = arith.constant 0 : index
    %c0_260 = arith.constant 0 : index
    %283 = vector.load %arg4[%c1_257, %c1_258, %c0_259, %c0_260] : memref<2x4x32x8xf32, #tpu.memory_space<vmem>>, vector<1x1x32x8xf32>
    %284 = vector.shape_cast %283 : vector<1x1x32x8xf32> to vector<32x8xf32>
    %cst_261 = arith.constant dense<0.000000e+00> : vector<16x8xf32>
    %285 = tpu.matmul %230, %284, %cst_261 {dimension_numbers = #tpu.dot_dimension_numbers<[1], [0], [0], [1], [0, 0, 1, 1], [], []>} : vector<16x32xf32>, vector<32x8xf32>, vector<16x8xf32> -> vector<16x8xf32>
    %c1_262 = arith.constant 1 : index
    %c2_263 = arith.constant 2 : index
    %c1_264 = arith.constant 1 : index
    %c0_265 = arith.constant 0 : index
    %c0_266 = arith.constant 0 : index
    %286 = vector.load %arg5[%c1_262, %c2_263, %c1_264, %c0_265, %c0_266] : memref<2x3x4x1x8xf32, #tpu.memory_space<vmem>>, vector<1x1x1x1x8xf32>
    %287 = vector.shape_cast %286 : vector<1x1x1x1x8xf32> to vector<1x8xf32>
    %288 = vector.broadcast %287 : vector<1x8xf32> to vector<16x8xf32>
    %289 = arith.addf %285, %288 : vector<16x8xf32>
    %cst_267 = arith.constant dense<0.000000e+00> : vector<16x16xf32>
    %290 = tpu.matmul %275, %282, %cst_267 {dimension_numbers = #tpu.dot_dimension_numbers<[1], [1], [0], [0], [0, 0, 1, 0], [], []>} : vector<16x8xf32>, vector<16x8xf32>, vector<16x16xf32> -> vector<16x16xf32>
    %291 = arith.addf %290, %1 : vector<16x16xf32>
    %cst_268 = arith.constant dense<0xFF800000> : vector<16xf32>
    %292 = vector.multi_reduction <maximumf>, %291, %cst_268 [1] : vector<16x16xf32> to vector<16xf32>
    %293 = vector.shape_cast %292 : vector<16xf32> to vector<16x1xf32>
    %294 = vector.broadcast %293 : vector<16x1xf32> to vector<16x16xf32>
    %295 = arith.subf %291, %294 : vector<16x16xf32>
    %296 = math.exp %295 : vector<16x16xf32>
    %cst_269 = arith.constant dense<0.000000e+00> : vector<16xf32>
    %297 = vector.multi_reduction <add>, %296, %cst_269 [1] : vector<16x16xf32> to vector<16xf32>
    %298 = vector.shape_cast %297 : vector<16xf32> to vector<16x1xf32>
    %cst_270 = arith.constant 1.000000e+00 : f32
    %299 = vector.broadcast %cst_270 : f32 to vector<16x1xf32>
    %300 = arith.divf %299, %298 : vector<16x1xf32>
    %cst_271 = arith.constant dense<0.000000e+00> : vector<16x8xf32>
    %301 = tpu.matmul %296, %289, %cst_271 {dimension_numbers = #tpu.dot_dimension_numbers<[1], [0], [0], [1], [0, 0, 1, 1], [], []>} : vector<16x16xf32>, vector<16x8xf32>, vector<16x8xf32> -> vector<16x8xf32>
    %302 = vector.broadcast %300 : vector<16x1xf32> to vector<16x8xf32>
    %303 = arith.mulf %301, %302 : vector<16x8xf32>
    %c1_272 = arith.constant 1 : index
    %c1_273 = arith.constant 1 : index
    %c0_274 = arith.constant 0 : index
    %c0_275 = arith.constant 0 : index
    %304 = vector.load %arg6[%c1_272, %c1_273, %c0_274, %c0_275] : memref<2x4x8x32xf32, #tpu.memory_space<vmem>>, vector<1x1x8x32xf32>
    %305 = vector.shape_cast %304 : vector<1x1x8x32xf32> to vector<8x32xf32>
    %cst_276 = arith.constant dense<0.000000e+00> : vector<16x32xf32>
    %306 = tpu.matmul %303, %305, %cst_276 {dimension_numbers = #tpu.dot_dimension_numbers<[1], [0], [0], [1], [0, 0, 1, 1], [], []>} : vector<16x8xf32>, vector<8x32xf32>, vector<16x32xf32> -> vector<16x32xf32>
    %307 = arith.addf %268, %306 : vector<16x32xf32>
    %c1_277 = arith.constant 1 : index
    %c2_278 = arith.constant 2 : index
    %c0_279 = arith.constant 0 : index
    %c0_280 = arith.constant 0 : index
    %308 = vector.load %arg2[%c1_277, %c2_278, %c0_279, %c0_280] : memref<2x4x32x8xf32, #tpu.memory_space<vmem>>, vector<1x1x32x8xf32>
    %309 = vector.shape_cast %308 : vector<1x1x32x8xf32> to vector<32x8xf32>
    %cst_281 = arith.constant dense<0.000000e+00> : vector<16x8xf32>
    %310 = tpu.matmul %230, %309, %cst_281 {dimension_numbers = #tpu.dot_dimension_numbers<[1], [0], [0], [1], [0, 0, 1, 1], [], []>} : vector<16x32xf32>, vector<32x8xf32>, vector<16x8xf32> -> vector<16x8xf32>
    %c1_282 = arith.constant 1 : index
    %c0_283 = arith.constant 0 : index
    %c2_284 = arith.constant 2 : index
    %c0_285 = arith.constant 0 : index
    %c0_286 = arith.constant 0 : index
    %311 = vector.load %arg5[%c1_282, %c0_283, %c2_284, %c0_285, %c0_286] : memref<2x3x4x1x8xf32, #tpu.memory_space<vmem>>, vector<1x1x1x1x8xf32>
    %312 = vector.shape_cast %311 : vector<1x1x1x1x8xf32> to vector<1x8xf32>
    %313 = vector.broadcast %312 : vector<1x8xf32> to vector<16x8xf32>
    %314 = arith.addf %310, %313 : vector<16x8xf32>
    %c1_287 = arith.constant 1 : index
    %c2_288 = arith.constant 2 : index
    %c0_289 = arith.constant 0 : index
    %c0_290 = arith.constant 0 : index
    %315 = vector.load %arg3[%c1_287, %c2_288, %c0_289, %c0_290] : memref<2x4x32x8xf32, #tpu.memory_space<vmem>>, vector<1x1x32x8xf32>
    %316 = vector.shape_cast %315 : vector<1x1x32x8xf32> to vector<32x8xf32>
    %cst_291 = arith.constant dense<0.000000e+00> : vector<16x8xf32>
    %317 = tpu.matmul %230, %316, %cst_291 {dimension_numbers = #tpu.dot_dimension_numbers<[1], [0], [0], [1], [0, 0, 1, 1], [], []>} : vector<16x32xf32>, vector<32x8xf32>, vector<16x8xf32> -> vector<16x8xf32>
    %c1_292 = arith.constant 1 : index
    %c1_293 = arith.constant 1 : index
    %c2_294 = arith.constant 2 : index
    %c0_295 = arith.constant 0 : index
    %c0_296 = arith.constant 0 : index
    %318 = vector.load %arg5[%c1_292, %c1_293, %c2_294, %c0_295, %c0_296] : memref<2x3x4x1x8xf32, #tpu.memory_space<vmem>>, vector<1x1x1x1x8xf32>
    %319 = vector.shape_cast %318 : vector<1x1x1x1x8xf32> to vector<1x8xf32>
    %320 = vector.broadcast %319 : vector<1x8xf32> to vector<16x8xf32>
    %321 = arith.addf %317, %320 : vector<16x8xf32>
    %c1_297 = arith.constant 1 : index
    %c2_298 = arith.constant 2 : index
    %c0_299 = arith.constant 0 : index
    %c0_300 = arith.constant 0 : index
    %322 = vector.load %arg4[%c1_297, %c2_298, %c0_299, %c0_300] : memref<2x4x32x8xf32, #tpu.memory_space<vmem>>, vector<1x1x32x8xf32>
    %323 = vector.shape_cast %322 : vector<1x1x32x8xf32> to vector<32x8xf32>
    %cst_301 = arith.constant dense<0.000000e+00> : vector<16x8xf32>
    %324 = tpu.matmul %230, %323, %cst_301 {dimension_numbers = #tpu.dot_dimension_numbers<[1], [0], [0], [1], [0, 0, 1, 1], [], []>} : vector<16x32xf32>, vector<32x8xf32>, vector<16x8xf32> -> vector<16x8xf32>
    %c1_302 = arith.constant 1 : index
    %c2_303 = arith.constant 2 : index
    %c2_304 = arith.constant 2 : index
    %c0_305 = arith.constant 0 : index
    %c0_306 = arith.constant 0 : index
    %325 = vector.load %arg5[%c1_302, %c2_303, %c2_304, %c0_305, %c0_306] : memref<2x3x4x1x8xf32, #tpu.memory_space<vmem>>, vector<1x1x1x1x8xf32>
    %326 = vector.shape_cast %325 : vector<1x1x1x1x8xf32> to vector<1x8xf32>
    %327 = vector.broadcast %326 : vector<1x8xf32> to vector<16x8xf32>
    %328 = arith.addf %324, %327 : vector<16x8xf32>
    %cst_307 = arith.constant dense<0.000000e+00> : vector<16x16xf32>
    %329 = tpu.matmul %314, %321, %cst_307 {dimension_numbers = #tpu.dot_dimension_numbers<[1], [1], [0], [0], [0, 0, 1, 0], [], []>} : vector<16x8xf32>, vector<16x8xf32>, vector<16x16xf32> -> vector<16x16xf32>
    %330 = arith.addf %329, %1 : vector<16x16xf32>
    %cst_308 = arith.constant dense<0xFF800000> : vector<16xf32>
    %331 = vector.multi_reduction <maximumf>, %330, %cst_308 [1] : vector<16x16xf32> to vector<16xf32>
    %332 = vector.shape_cast %331 : vector<16xf32> to vector<16x1xf32>
    %333 = vector.broadcast %332 : vector<16x1xf32> to vector<16x16xf32>
    %334 = arith.subf %330, %333 : vector<16x16xf32>
    %335 = math.exp %334 : vector<16x16xf32>
    %cst_309 = arith.constant dense<0.000000e+00> : vector<16xf32>
    %336 = vector.multi_reduction <add>, %335, %cst_309 [1] : vector<16x16xf32> to vector<16xf32>
    %337 = vector.shape_cast %336 : vector<16xf32> to vector<16x1xf32>
    %cst_310 = arith.constant 1.000000e+00 : f32
    %338 = vector.broadcast %cst_310 : f32 to vector<16x1xf32>
    %339 = arith.divf %338, %337 : vector<16x1xf32>
    %cst_311 = arith.constant dense<0.000000e+00> : vector<16x8xf32>
    %340 = tpu.matmul %335, %328, %cst_311 {dimension_numbers = #tpu.dot_dimension_numbers<[1], [0], [0], [1], [0, 0, 1, 1], [], []>} : vector<16x16xf32>, vector<16x8xf32>, vector<16x8xf32> -> vector<16x8xf32>
    %341 = vector.broadcast %339 : vector<16x1xf32> to vector<16x8xf32>
    %342 = arith.mulf %340, %341 : vector<16x8xf32>
    %c1_312 = arith.constant 1 : index
    %c2_313 = arith.constant 2 : index
    %c0_314 = arith.constant 0 : index
    %c0_315 = arith.constant 0 : index
    %343 = vector.load %arg6[%c1_312, %c2_313, %c0_314, %c0_315] : memref<2x4x8x32xf32, #tpu.memory_space<vmem>>, vector<1x1x8x32xf32>
    %344 = vector.shape_cast %343 : vector<1x1x8x32xf32> to vector<8x32xf32>
    %cst_316 = arith.constant dense<0.000000e+00> : vector<16x32xf32>
    %345 = tpu.matmul %342, %344, %cst_316 {dimension_numbers = #tpu.dot_dimension_numbers<[1], [0], [0], [1], [0, 0, 1, 1], [], []>} : vector<16x8xf32>, vector<8x32xf32>, vector<16x32xf32> -> vector<16x32xf32>
    %346 = arith.addf %307, %345 : vector<16x32xf32>
    %c1_317 = arith.constant 1 : index
    %c3_318 = arith.constant 3 : index
    %c0_319 = arith.constant 0 : index
    %c0_320 = arith.constant 0 : index
    %347 = vector.load %arg2[%c1_317, %c3_318, %c0_319, %c0_320] : memref<2x4x32x8xf32, #tpu.memory_space<vmem>>, vector<1x1x32x8xf32>
    %348 = vector.shape_cast %347 : vector<1x1x32x8xf32> to vector<32x8xf32>
    %cst_321 = arith.constant dense<0.000000e+00> : vector<16x8xf32>
    %349 = tpu.matmul %230, %348, %cst_321 {dimension_numbers = #tpu.dot_dimension_numbers<[1], [0], [0], [1], [0, 0, 1, 1], [], []>} : vector<16x32xf32>, vector<32x8xf32>, vector<16x8xf32> -> vector<16x8xf32>
    %c1_322 = arith.constant 1 : index
    %c0_323 = arith.constant 0 : index
    %c3_324 = arith.constant 3 : index
    %c0_325 = arith.constant 0 : index
    %c0_326 = arith.constant 0 : index
    %350 = vector.load %arg5[%c1_322, %c0_323, %c3_324, %c0_325, %c0_326] : memref<2x3x4x1x8xf32, #tpu.memory_space<vmem>>, vector<1x1x1x1x8xf32>
    %351 = vector.shape_cast %350 : vector<1x1x1x1x8xf32> to vector<1x8xf32>
    %352 = vector.broadcast %351 : vector<1x8xf32> to vector<16x8xf32>
    %353 = arith.addf %349, %352 : vector<16x8xf32>
    %c1_327 = arith.constant 1 : index
    %c3_328 = arith.constant 3 : index
    %c0_329 = arith.constant 0 : index
    %c0_330 = arith.constant 0 : index
    %354 = vector.load %arg3[%c1_327, %c3_328, %c0_329, %c0_330] : memref<2x4x32x8xf32, #tpu.memory_space<vmem>>, vector<1x1x32x8xf32>
    %355 = vector.shape_cast %354 : vector<1x1x32x8xf32> to vector<32x8xf32>
    %cst_331 = arith.constant dense<0.000000e+00> : vector<16x8xf32>
    %356 = tpu.matmul %230, %355, %cst_331 {dimension_numbers = #tpu.dot_dimension_numbers<[1], [0], [0], [1], [0, 0, 1, 1], [], []>} : vector<16x32xf32>, vector<32x8xf32>, vector<16x8xf32> -> vector<16x8xf32>
    %c1_332 = arith.constant 1 : index
    %c1_333 = arith.constant 1 : index
    %c3_334 = arith.constant 3 : index
    %c0_335 = arith.constant 0 : index
    %c0_336 = arith.constant 0 : index
    %357 = vector.load %arg5[%c1_332, %c1_333, %c3_334, %c0_335, %c0_336] : memref<2x3x4x1x8xf32, #tpu.memory_space<vmem>>, vector<1x1x1x1x8xf32>
    %358 = vector.shape_cast %357 : vector<1x1x1x1x8xf32> to vector<1x8xf32>
    %359 = vector.broadcast %358 : vector<1x8xf32> to vector<16x8xf32>
    %360 = arith.addf %356, %359 : vector<16x8xf32>
    %c1_337 = arith.constant 1 : index
    %c3_338 = arith.constant 3 : index
    %c0_339 = arith.constant 0 : index
    %c0_340 = arith.constant 0 : index
    %361 = vector.load %arg4[%c1_337, %c3_338, %c0_339, %c0_340] : memref<2x4x32x8xf32, #tpu.memory_space<vmem>>, vector<1x1x32x8xf32>
    %362 = vector.shape_cast %361 : vector<1x1x32x8xf32> to vector<32x8xf32>
    %cst_341 = arith.constant dense<0.000000e+00> : vector<16x8xf32>
    %363 = tpu.matmul %230, %362, %cst_341 {dimension_numbers = #tpu.dot_dimension_numbers<[1], [0], [0], [1], [0, 0, 1, 1], [], []>} : vector<16x32xf32>, vector<32x8xf32>, vector<16x8xf32> -> vector<16x8xf32>
    %c1_342 = arith.constant 1 : index
    %c2_343 = arith.constant 2 : index
    %c3_344 = arith.constant 3 : index
    %c0_345 = arith.constant 0 : index
    %c0_346 = arith.constant 0 : index
    %364 = vector.load %arg5[%c1_342, %c2_343, %c3_344, %c0_345, %c0_346] : memref<2x3x4x1x8xf32, #tpu.memory_space<vmem>>, vector<1x1x1x1x8xf32>
    %365 = vector.shape_cast %364 : vector<1x1x1x1x8xf32> to vector<1x8xf32>
    %366 = vector.broadcast %365 : vector<1x8xf32> to vector<16x8xf32>
    %367 = arith.addf %363, %366 : vector<16x8xf32>
    %cst_347 = arith.constant dense<0.000000e+00> : vector<16x16xf32>
    %368 = tpu.matmul %353, %360, %cst_347 {dimension_numbers = #tpu.dot_dimension_numbers<[1], [1], [0], [0], [0, 0, 1, 0], [], []>} : vector<16x8xf32>, vector<16x8xf32>, vector<16x16xf32> -> vector<16x16xf32>
    %369 = arith.addf %368, %1 : vector<16x16xf32>
    %cst_348 = arith.constant dense<0xFF800000> : vector<16xf32>
    %370 = vector.multi_reduction <maximumf>, %369, %cst_348 [1] : vector<16x16xf32> to vector<16xf32>
    %371 = vector.shape_cast %370 : vector<16xf32> to vector<16x1xf32>
    %372 = vector.broadcast %371 : vector<16x1xf32> to vector<16x16xf32>
    %373 = arith.subf %369, %372 : vector<16x16xf32>
    %374 = math.exp %373 : vector<16x16xf32>
    %cst_349 = arith.constant dense<0.000000e+00> : vector<16xf32>
    %375 = vector.multi_reduction <add>, %374, %cst_349 [1] : vector<16x16xf32> to vector<16xf32>
    %376 = vector.shape_cast %375 : vector<16xf32> to vector<16x1xf32>
    %cst_350 = arith.constant 1.000000e+00 : f32
    %377 = vector.broadcast %cst_350 : f32 to vector<16x1xf32>
    %378 = arith.divf %377, %376 : vector<16x1xf32>
    %cst_351 = arith.constant dense<0.000000e+00> : vector<16x8xf32>
    %379 = tpu.matmul %374, %367, %cst_351 {dimension_numbers = #tpu.dot_dimension_numbers<[1], [0], [0], [1], [0, 0, 1, 1], [], []>} : vector<16x16xf32>, vector<16x8xf32>, vector<16x8xf32> -> vector<16x8xf32>
    %380 = vector.broadcast %378 : vector<16x1xf32> to vector<16x8xf32>
    %381 = arith.mulf %379, %380 : vector<16x8xf32>
    %c1_352 = arith.constant 1 : index
    %c3_353 = arith.constant 3 : index
    %c0_354 = arith.constant 0 : index
    %c0_355 = arith.constant 0 : index
    %382 = vector.load %arg6[%c1_352, %c3_353, %c0_354, %c0_355] : memref<2x4x8x32xf32, #tpu.memory_space<vmem>>, vector<1x1x8x32xf32>
    %383 = vector.shape_cast %382 : vector<1x1x8x32xf32> to vector<8x32xf32>
    %cst_356 = arith.constant dense<0.000000e+00> : vector<16x32xf32>
    %384 = tpu.matmul %381, %383, %cst_356 {dimension_numbers = #tpu.dot_dimension_numbers<[1], [0], [0], [1], [0, 0, 1, 1], [], []>} : vector<16x8xf32>, vector<8x32xf32>, vector<16x32xf32> -> vector<16x32xf32>
    %385 = arith.addf %346, %384 : vector<16x32xf32>
    %c1_357 = arith.constant 1 : index
    %c0_358 = arith.constant 0 : index
    %c0_359 = arith.constant 0 : index
    %386 = vector.load %arg7[%c1_357, %c0_358, %c0_359] : memref<2x6x32xf32, #tpu.memory_space<vmem>>, vector<1x1x32xf32>
    %387 = vector.shape_cast %386 : vector<1x1x32xf32> to vector<1x32xf32>
    %388 = vector.broadcast %387 : vector<1x32xf32> to vector<16x32xf32>
    %389 = arith.addf %385, %388 : vector<16x32xf32>
    %390 = arith.addf %230, %389 : vector<16x32xf32>
    %c1_360 = arith.constant 1 : index
    %c1_361 = arith.constant 1 : index
    %c0_362 = arith.constant 0 : index
    %391 = vector.load %arg7[%c1_360, %c1_361, %c0_362] : memref<2x6x32xf32, #tpu.memory_space<vmem>>, vector<1x1x32xf32>
    %392 = vector.shape_cast %391 : vector<1x1x32xf32> to vector<1x32xf32>
    %c1_363 = arith.constant 1 : index
    %c2_364 = arith.constant 2 : index
    %c0_365 = arith.constant 0 : index
    %393 = vector.load %arg7[%c1_363, %c2_364, %c0_365] : memref<2x6x32xf32, #tpu.memory_space<vmem>>, vector<1x1x32xf32>
    %394 = vector.shape_cast %393 : vector<1x1x32xf32> to vector<1x32xf32>
    %cst_366 = arith.constant dense<0.000000e+00> : vector<16xf32>
    %395 = vector.multi_reduction <add>, %390, %cst_366 [1] : vector<16x32xf32> to vector<16xf32>
    %396 = vector.shape_cast %395 : vector<16xf32> to vector<16x1xf32>
    %cst_367 = arith.constant 3.200000e+01 : f32
    %397 = vector.broadcast %cst_367 : f32 to vector<16x1xf32>
    %398 = arith.divf %396, %397 : vector<16x1xf32>
    %399 = vector.broadcast %398 : vector<16x1xf32> to vector<16x32xf32>
    %400 = arith.subf %390, %399 : vector<16x32xf32>
    %401 = arith.mulf %400, %400 : vector<16x32xf32>
    %cst_368 = arith.constant dense<0.000000e+00> : vector<16xf32>
    %402 = vector.multi_reduction <add>, %401, %cst_368 [1] : vector<16x32xf32> to vector<16xf32>
    %403 = vector.shape_cast %402 : vector<16xf32> to vector<16x1xf32>
    %cst_369 = arith.constant 3.200000e+01 : f32
    %404 = vector.broadcast %cst_369 : f32 to vector<16x1xf32>
    %405 = arith.divf %403, %404 : vector<16x1xf32>
    %406 = vector.broadcast %398 : vector<16x1xf32> to vector<16x32xf32>
    %407 = arith.subf %390, %406 : vector<16x32xf32>
    %cst_370 = arith.constant 9.99999974E-6 : f32
    %408 = vector.broadcast %cst_370 : f32 to vector<16x1xf32>
    %409 = arith.addf %405, %408 : vector<16x1xf32>
    %410 = math.rsqrt %409 : vector<16x1xf32>
    %411 = vector.broadcast %410 : vector<16x1xf32> to vector<16x32xf32>
    %412 = arith.mulf %407, %411 : vector<16x32xf32>
    %413 = vector.broadcast %392 : vector<1x32xf32> to vector<16x32xf32>
    %414 = arith.mulf %412, %413 : vector<16x32xf32>
    %415 = vector.broadcast %394 : vector<1x32xf32> to vector<16x32xf32>
    %416 = arith.addf %414, %415 : vector<16x32xf32>
    %c1_371 = arith.constant 1 : index
    %c0_372 = arith.constant 0 : index
    %c0_373 = arith.constant 0 : index
    %417 = vector.load %arg8[%c1_371, %c0_372, %c0_373] : memref<2x32x128xf32, #tpu.memory_space<vmem>>, vector<1x32x128xf32>
    %418 = vector.shape_cast %417 : vector<1x32x128xf32> to vector<32x128xf32>
    %cst_374 = arith.constant dense<0.000000e+00> : vector<16x128xf32>
    %419 = tpu.matmul %416, %418, %cst_374 {dimension_numbers = #tpu.dot_dimension_numbers<[1], [0], [0], [1], [0, 0, 1, 1], [], []>} : vector<16x32xf32>, vector<32x128xf32>, vector<16x128xf32> -> vector<16x128xf32>
    %c1_375 = arith.constant 1 : index
    %c0_376 = arith.constant 0 : index
    %c0_377 = arith.constant 0 : index
    %420 = vector.load %arg9[%c1_375, %c0_376, %c0_377] : memref<2x1x128xf32, #tpu.memory_space<vmem>>, vector<1x1x128xf32>
    %421 = vector.shape_cast %420 : vector<1x1x128xf32> to vector<1x128xf32>
    %422 = vector.broadcast %421 : vector<1x128xf32> to vector<16x128xf32>
    %423 = arith.addf %419, %422 : vector<16x128xf32>
    %cst_378 = arith.constant 0.000000e+00 : f32
    %424 = vector.broadcast %cst_378 : f32 to vector<16x128xf32>
    %425 = arith.maximumf %423, %424 : vector<16x128xf32>
    %c1_379 = arith.constant 1 : index
    %c0_380 = arith.constant 0 : index
    %c0_381 = arith.constant 0 : index
    %426 = vector.load %arg10[%c1_379, %c0_380, %c0_381] : memref<2x128x32xf32, #tpu.memory_space<vmem>>, vector<1x128x32xf32>
    %427 = vector.shape_cast %426 : vector<1x128x32xf32> to vector<128x32xf32>
    %cst_382 = arith.constant dense<0.000000e+00> : vector<16x32xf32>
    %428 = tpu.matmul %425, %427, %cst_382 {dimension_numbers = #tpu.dot_dimension_numbers<[1], [0], [0], [1], [0, 0, 1, 1], [], []>} : vector<16x128xf32>, vector<128x32xf32>, vector<16x32xf32> -> vector<16x32xf32>
    %c1_383 = arith.constant 1 : index
    %c3_384 = arith.constant 3 : index
    %c0_385 = arith.constant 0 : index
    %429 = vector.load %arg7[%c1_383, %c3_384, %c0_385] : memref<2x6x32xf32, #tpu.memory_space<vmem>>, vector<1x1x32xf32>
    %430 = vector.shape_cast %429 : vector<1x1x32xf32> to vector<1x32xf32>
    %431 = vector.broadcast %430 : vector<1x32xf32> to vector<16x32xf32>
    %432 = arith.addf %428, %431 : vector<16x32xf32>
    %433 = arith.addf %416, %432 : vector<16x32xf32>
    %c1_386 = arith.constant 1 : index
    %c4_387 = arith.constant 4 : index
    %c0_388 = arith.constant 0 : index
    %434 = vector.load %arg7[%c1_386, %c4_387, %c0_388] : memref<2x6x32xf32, #tpu.memory_space<vmem>>, vector<1x1x32xf32>
    %435 = vector.shape_cast %434 : vector<1x1x32xf32> to vector<1x32xf32>
    %c1_389 = arith.constant 1 : index
    %c5_390 = arith.constant 5 : index
    %c0_391 = arith.constant 0 : index
    %436 = vector.load %arg7[%c1_389, %c5_390, %c0_391] : memref<2x6x32xf32, #tpu.memory_space<vmem>>, vector<1x1x32xf32>
    %437 = vector.shape_cast %436 : vector<1x1x32xf32> to vector<1x32xf32>
    %cst_392 = arith.constant dense<0.000000e+00> : vector<16xf32>
    %438 = vector.multi_reduction <add>, %433, %cst_392 [1] : vector<16x32xf32> to vector<16xf32>
    %439 = vector.shape_cast %438 : vector<16xf32> to vector<16x1xf32>
    %cst_393 = arith.constant 3.200000e+01 : f32
    %440 = vector.broadcast %cst_393 : f32 to vector<16x1xf32>
    %441 = arith.divf %439, %440 : vector<16x1xf32>
    %442 = vector.broadcast %441 : vector<16x1xf32> to vector<16x32xf32>
    %443 = arith.subf %433, %442 : vector<16x32xf32>
    %444 = arith.mulf %443, %443 : vector<16x32xf32>
    %cst_394 = arith.constant dense<0.000000e+00> : vector<16xf32>
    %445 = vector.multi_reduction <add>, %444, %cst_394 [1] : vector<16x32xf32> to vector<16xf32>
    %446 = vector.shape_cast %445 : vector<16xf32> to vector<16x1xf32>
    %cst_395 = arith.constant 3.200000e+01 : f32
    %447 = vector.broadcast %cst_395 : f32 to vector<16x1xf32>
    %448 = arith.divf %446, %447 : vector<16x1xf32>
    %449 = vector.broadcast %441 : vector<16x1xf32> to vector<16x32xf32>
    %450 = arith.subf %433, %449 : vector<16x32xf32>
    %cst_396 = arith.constant 9.99999974E-6 : f32
    %451 = vector.broadcast %cst_396 : f32 to vector<16x1xf32>
    %452 = arith.addf %448, %451 : vector<16x1xf32>
    %453 = math.rsqrt %452 : vector<16x1xf32>
    %454 = vector.broadcast %453 : vector<16x1xf32> to vector<16x32xf32>
    %455 = arith.mulf %450, %454 : vector<16x32xf32>
    %456 = vector.broadcast %435 : vector<1x32xf32> to vector<16x32xf32>
    %457 = arith.mulf %455, %456 : vector<16x32xf32>
    %458 = vector.broadcast %437 : vector<1x32xf32> to vector<16x32xf32>
    %459 = arith.addf %457, %458 : vector<16x32xf32>
    %c0_397 = arith.constant 0 : index
    %c0_398 = arith.constant 0 : index
    %460 = vector.load %arg11[%c0_397, %c0_398] : memref<32x128xf32, #tpu.memory_space<vmem>>, vector<32x128xf32>
    %cst_399 = arith.constant dense<0.000000e+00> : vector<16x128xf32>
    %461 = tpu.matmul %459, %460, %cst_399 {dimension_numbers = #tpu.dot_dimension_numbers<[1], [0], [0], [1], [0, 0, 1, 1], [], []>} : vector<16x32xf32>, vector<32x128xf32>, vector<16x128xf32> -> vector<16x128xf32>
    %c0_400 = arith.constant 0 : index
    %c0_401 = arith.constant 0 : index
    %462 = vector.load %arg12[%c0_400, %c0_401] : memref<1x128xf32, #tpu.memory_space<vmem>>, vector<1x128xf32>
    %463 = vector.broadcast %462 : vector<1x128xf32> to vector<16x128xf32>
    %464 = arith.addf %461, %463 : vector<16x128xf32>
    %c0_402 = arith.constant 0 : index
    %c0_403 = arith.constant 0 : index
    %465 = vector.load %arg13[%c0_402, %c0_403] : memref<16x128xf32, #tpu.memory_space<vmem>>, vector<16x128xf32>
    tpu.vector_store %arg13[%c0_402, %c0_403], %464 {strides = array<i32>} : memref<16x128xf32, #tpu.memory_space<vmem>>, vector<16x128xf32>,
    return
  }
}

</mosaic_0001>

<llo_original>
// kernel: eq.8
$region0: #{eq.8}
  %s0 = inlined_call_operand.vmem [shape: s32[2,8], index: 0, kind: input, shape index: {}]
  %s1 = inlined_call_operand.vmem [shape: s32[16], index: 1, kind: output, shape index: {}]
  $region1: #{eq.8} parent=0
    #allocation0 [shape = 'u8[4096]{0}', space=vmem, size = 0x1000, scoped, tag = 'scoped mem for output reshape']
    #allocation1 [shape = 'u8[4096]{0}', space=vmem, size = 0x1000, scoped, tag = 'scoped mem for input reshape']
    %s3 = sshllo.u32 0, 2
    %v4 = vld [vmem:[%s0] sm:%s3]
    %5 = vst [vmem:[#allocation1] sm:%s3] %v4
    %v6 = vld [vmem:[#allocation1] sm:$0x1]
    %vm7 = vcmask 64512
    %8 = vst.msk [vmem:[#allocation0] sm:$0x1] %vm7, %v6
    %s9 = scalar_lea.vmem [#allocation1], 1
    %v10 = vld [vmem:[%s9] sm:$0x1]
    %11 = vrot.lane.b32.xlu0 %v10, 8
    %v12 = vpop.permute.xlu0 %11
    %vm13 = vcmask 130112
    %14 = vst.msk [vmem:[#allocation0] sm:$0x1] %vm13, %v12
    %s16 = sshllo.u32 0, 1
    %v18 = vld [vmem:[#allocation0] sm:%s16]
    %s19 = sshllo.u32 0, 1
    %20 = vst [vmem:[%s1] sm:%s19] %v18

// kernel: critic_forward.1
$region0: #{critic_forward.1}
  #allocation0 [shape = 'u32[]', space=smem, size = 0x4, offset = 0x4, fixed_abs, tag = 'smem constant byte address 0x4 - core index']
  #allocation1 [shape = 'u32[144,128]{1,0:T(1,128)}', space=vmem, size = 0x12000, scoped, tag = 'internal scratch']
  %s0 = inlined_call_operand.vmem [shape: f32[16,32], index: 0, kind: input, shape index: {}]
  %s1 = inlined_call_operand.vmem [shape: f32[16,16], index: 1, kind: input, shape index: {}]
  %s2 = inlined_call_operand.vmem [shape: f32[2,4,32,8], index: 2, kind: input, shape index: {}]
  %s3 = inlined_call_operand.vmem [shape: f32[2,4,32,8], index: 3, kind: input, shape index: {}]
  %s4 = inlined_call_operand.vmem [shape: f32[2,4,32,8], index: 4, kind: input, shape index: {}]
  %s5 = inlined_call_operand.vmem [shape: f32[2,3,4,1,8], index: 5, kind: input, shape index: {}]
  %s6 = inlined_call_operand.vmem [shape: f32[2,4,8,32], index: 6, kind: input, shape index: {}]
  %s7 = inlined_call_operand.vmem [shape: f32[2,6,32], index: 7, kind: input, shape index: {}]
  %s8 = inlined_call_operand.vmem [shape: f32[2,32,128], index: 8, kind: input, shape index: {}]
  %s9 = inlined_call_operand.vmem [shape: f32[2,1,128], index: 9, kind: input, shape index: {}]
  %s10 = inlined_call_operand.vmem [shape: f32[2,128,32], index: 10, kind: input, shape index: {}]
  %s11 = inlined_call_operand.vmem [shape: f32[32,128], index: 11, kind: input, shape index: {}]
  %s12 = inlined_call_operand.vmem [shape: f32[1,128], index: 12, kind: input, shape index: {}]
  %s13 = inlined_call_operand.vmem [shape: f32[16,128], index: 13, kind: output, shape index: {}]
  %s14 = sld [smem:[#allocation0]]
  $region62: #{critic_forward.1} parent=0
    _
  %s16 = ssub.s32 1, %s14
  %s17 = scalar_select 0, %s16, %s14
  // Predicated region
  $region2: #{critic_forward.1} parent=0 // pred_check
    _
  $region3: #{critic_forward.1} parent=0 // pred_check_branch
    %19 = sbr.rel (0) target = $region5
  $region4: #{critic_forward.1} parent=0 // pred_region
    _
  $region5: #{critic_forward.1} parent=0 // pred_fallthru
    _
  // Predicated region
  $region6: #{critic_forward.1} parent=0 // pred_check
    _
  $region7: #{critic_forward.1} parent=0 // pred_check_branch
    %21 = sbr.rel (0) target = $region9
  $region8: #{critic_forward.1} parent=0 // pred_region
    _
  $region9: #{critic_forward.1} parent=0 // pred_fallthru
    _
  // Predicated region
  $region10: #{critic_forward.1} parent=0 // pred_check
    _
  $region11: #{critic_forward.1} parent=0 // pred_check_branch
    %23 = sbr.rel (0) target = $region13
  $region12: #{critic_forward.1} parent=0 // pred_region
    _
  $region13: #{critic_forward.1} parent=0 // pred_fallthru
    _
  // Predicated region
  $region14: #{critic_forward.1} parent=0 // pred_check
    _
  $region15: #{critic_forward.1} parent=0 // pred_check_branch
    %25 = sbr.rel (0) target = $region17
  $region16: #{critic_forward.1} parent=0 // pred_region
    _
  $region17: #{critic_forward.1} parent=0 // pred_fallthru
    _
  // Predicated region
  $region18: #{critic_forward.1} parent=0 // pred_check
    _
  $region19: #{critic_forward.1} parent=0 // pred_check_branch
    %27 = sbr.rel (0) target = $region21
  $region20: #{critic_forward.1} parent=0 // pred_region
    _
  $region21: #{critic_forward.1} parent=0 // pred_fallthru
    _
  // Predicated region
  $region22: #{critic_forward.1} parent=0 // pred_check
    _
  $region23: #{critic_forward.1} parent=0 // pred_check_branch
    %29 = sbr.rel (0) target = $region25
  $region24: #{critic_forward.1} parent=0 // pred_region
    _
  $region25: #{critic_forward.1} parent=0 // pred_fallthru
    _
  // Predicated region
  $region26: #{critic_forward.1} parent=0 // pred_check
    _
  $region27: #{critic_forward.1} parent=0 // pred_check_branch
    %31 = sbr.rel (0) target = $region29
  $region28: #{critic_forward.1} parent=0 // pred_region
    _
  $region29: #{critic_forward.1} parent=0 // pred_fallthru
    _
  // Predicated region
  $region30: #{critic_forward.1} parent=0 // pred_check
    _
  $region31: #{critic_forward.1} parent=0 // pred_check_branch
    %33 = sbr.rel (0) target = $region33
  $region32: #{critic_forward.1} parent=0 // pred_region
    _
  $region33: #{critic_forward.1} parent=0 // pred_fallthru
    _
  // Predicated region
  $region34: #{critic_forward.1} parent=0 // pred_check
    _
  $region35: #{critic_forward.1} parent=0 // pred_check_branch
    %35 = sbr.rel (0) target = $region37
  $region36: #{critic_forward.1} parent=0 // pred_region
    _
  $region37: #{critic_forward.1} parent=0 // pred_fallthru
    _
  // Predicated region
  $region38: #{critic_forward.1} parent=0 // pred_check
    _
  $region39: #{critic_forward.1} parent=0 // pred_check_branch
    %37 = sbr.rel (0) target = $region41
  $region40: #{critic_forward.1} parent=0 // pred_region
    _
  $region41: #{critic_forward.1} parent=0 // pred_fallthru
    _
  // Predicated region
  $region42: #{critic_forward.1} parent=0 // pred_check
    _
  $region43: #{critic_forward.1} parent=0 // pred_check_branch
    %39 = sbr.rel (0) target = $region45
  $region44: #{critic_forward.1} parent=0 // pred_region
    _
  $region45: #{critic_forward.1} parent=0 // pred_fallthru
    _
  // Predicated region
  $region46: #{critic_forward.1} parent=0 // pred_check
    _
  $region47: #{critic_forward.1} parent=0 // pred_check_branch
    %41 = sbr.rel (0) target = $region49
  $region48: #{critic_forward.1} parent=0 // pred_region
    _
  $region49: #{critic_forward.1} parent=0 // pred_fallthru
    _
  // Predicated region
  $region50: #{critic_forward.1} parent=0 // pred_check
    _
  $region51: #{critic_forward.1} parent=0 // pred_check_branch
    %43 = sbr.rel (0) target = $region53
  $region52: #{critic_forward.1} parent=0 // pred_region
    _
  $region53: #{critic_forward.1} parent=0 // pred_fallthru
    _
  %v44 = vld [vmem:[%s0] sm:$0xff]
  %v45 = vld [vmem:[%s0 + $0x8] sm:$0xff]
  %v46 = vld [vmem:[%s1] sm:$0xff]
  %v47 = vld [vmem:[%s1 + $0x8] sm:$0xff]
  %v48 = vld [vmem:[%s2] sm:$0xff]
  %v49 = vld [vmem:[%s2 + $0x8] sm:$0xff]
  %v50 = vld [vmem:[%s2 + $0x10] sm:$0xff]
  %v51 = vld [vmem:[%s2 + $0x18] sm:$0xff]
  %v52 = vld [vmem:[%s5] sm:$0x1]
  %v54 = vlaneseq
  %v55 = vshrl.u32 %v54, 7
  %v56 = vsub.s32 0, %v55
  %v57 = vrot.slane %v52, %v56
  %vm59 = vcmask 261120
  %v61 = vsel %vm59, %v44, 0
  %v64 = vsel %vm59, %v45, 0
  %66 = vmatprep.subr.mxu0 0.0
  %67 = vmatpush1.msra.mxu0 %v48
  %68 = vmatprep.subr.mxu0 0.0
  %69 = vmatpush1.msra.mxu0 %v49
  %70 = vmatprep.subr.mxu0 0.0
  %71 = vmatpush1.msra.mxu0 %v50
  %72 = vmatprep.subr.mxu0 0.0
  %73 = vmatpush1.msra.mxu0 %v51
  %74 = vmatprep.subr.mxu0 0.0
  %75 = vmatpush1.msra.mxu0 0.0
  %76 = vmatprep.subr.mxu0 0.0
  %77 = vmatpush1.msra.mxu0 0.0
  %78 = vmatprep.subr.mxu0 0.0
  %79 = vmatpush1.msra.mxu0 0.0
  %80 = vmatprep.subr.mxu0 0.0
  %81 = vmatpush1.msra.mxu0 0.0
  %82 = vmatprep.subr.mxu0 0.0
  %83 = vmatpush1.msra.mxu0 0.0
  %84 = vmatprep.subr.mxu0 0.0
  %85 = vmatpush1.msra.mxu0 0.0
  %86 = vmatprep.subr.mxu0 0.0
  %87 = vmatpush1.msra.mxu0 0.0
  %88 = vmatprep.subr.mxu0 0.0
  %89 = vmatpush1.msra.mxu0 0.0
  %90 = vmatprep.subr.mxu0 0.0
  %91 = vmatpush1.msra.mxu0 0.0
  %92 = vmatprep.subr.mxu0 0.0
  %93 = vmatpush1.msra.mxu0 0.0
  %94 = vmatprep.subr.mxu0 0.0
  %95 = vmatpush1.msra.mxu0 0.0
  %96 = vmatprep.subr.mxu0 0.0
  %97 = vmatpush1.msra.mxu0 0.0
  %98 = vmatprep.subr.mxu0 0.0
  %99 = vmatpush1.msra.mxu0 0.0
  %100 = vmatprep.subr.mxu0 0.0
  %101 = vmatpush1.msra.mxu0 0.0
  %102 = vmatprep.subr.mxu0 0.0
  %103 = vmatpush1.msra.mxu0 0.0
  %104 = vmatprep.subr.mxu0 0.0
  %105 = vmatpush1.msra.mxu0 0.0
  %106 = vmatprep.subr.mxu0 0.0
  %107 = vmatpush1.msra.mxu0 0.0
  %108 = vmatprep.subr.mxu0 0.0
  %109 = vmatpush1.msra.mxu0 0.0
  %110 = vmatprep.subr.mxu0 0.0
  %111 = vmatpush1.msra.mxu0 0.0
  %112 = vmatprep.subr.mxu0 0.0
  %113 = vmatpush1.msra.mxu0 0.0
  %114 = vmatprep.subr.mxu0 0.0
  %115 = vmatpush1.msra.mxu0 0.0
  %116 = vmatprep.subr.mxu0 0.0
  %117 = vmatpush1.msra.mxu0 0.0
  %118 = vmatprep.subr.mxu0 0.0
  %119 = vmatpush1.msra.mxu0 0.0
  %120 = vmatprep.subr.mxu0 0.0
  %121 = vmatpush1.msra.mxu0 0.0
  %122 = vmatprep.subr.mxu0 0.0
  %123 = vmatpush1.msra.mxu0 0.0
  %124 = vmatprep.subr.mxu0 0.0
  %125 = vmatpush1.msra.mxu0 0.0
  %126 = vmatprep.subr.mxu0 0.0
  %127 = vmatpush1.msra.mxu0 0.0
  %128 = vmatprep.subr.mxu0 0.0
  %129 = vmatpush1.msra.mxu0 0.0
  %130 = vmatprep.mubr.f32.mxu0 0.0
  %131 = vmatmul.mubr.f32.gmra.mrb[0].mxu0 %v61
  %v132 = vpop.f32.mrb[0].mxu0
  %v133 = vadd.f32 %v57, %v132
  %v134 = vpop.f32.mrb[0].mxu0
  %135 = vmatprep.mubr.f32.mxu0 0.0
  %136 = vmatmul.mubr.f32.gmra.mrb[0].mxu0 %v64
  %v137 = vpop.f32.mrb[0].mxu0
  %v138 = vadd.f32 %v57, %v137
  %v139 = vpop.f32.mrb[0].mxu0
  %140 = vdwg.mxu0
  %v141 = vld [vmem:[%s3] sm:$0xff]
  %v142 = vld [vmem:[%s3 + $0x8] sm:$0xff]
  %v143 = vld [vmem:[%s3 + $0x10] sm:$0xff]
  %v144 = vld [vmem:[%s3 + $0x18] sm:$0xff]
  %s145 = scalar_lea.vmem %s5, 4
  %v146 = vld [vmem:[%s145] sm:$0x1]
  %v148 = vlaneseq
  %v149 = vshrl.u32 %v148, 7
  %v150 = vsub.s32 0, %v149
  %v151 = vrot.slane %v146, %v150
  %153 = vmatprep.subr.mxu0 0.0
  %154 = vmatpush1.msra.mxu0 %v141
  %155 = vmatprep.subr.mxu0 0.0
  %156 = vmatpush1.msra.mxu0 %v142
  %157 = vmatprep.subr.mxu0 0.0
  %158 = vmatpush1.msra.mxu0 %v143
  %159 = vmatprep.subr.mxu0 0.0
  %160 = vmatpush1.msra.mxu0 %v144
  %161 = vmatprep.subr.mxu0 0.0
  %162 = vmatpush1.msra.mxu0 0.0
  %163 = vmatprep.subr.mxu0 0.0
  %164 = vmatpush1.msra.mxu0 0.0
  %165 = vmatprep.subr.mxu0 0.0
  %166 = vmatpush1.msra.mxu0 0.0
  %167 = vmatprep.subr.mxu0 0.0
  %168 = vmatpush1.msra.mxu0 0.0
  %169 = vmatprep.subr.mxu0 0.0
  %170 = vmatpush1.msra.mxu0 0.0
  %171 = vmatprep.subr.mxu0 0.0
  %172 = vmatpush1.msra.mxu0 0.0
  %173 = vmatprep.subr.mxu0 0.0
  %174 = vmatpush1.msra.mxu0 0.0
  %175 = vmatprep.subr.mxu0 0.0
  %176 = vmatpush1.msra.mxu0 0.0
  %177 = vmatprep.subr.mxu0 0.0
  %178 = vmatpush1.msra.mxu0 0.0
  %179 = vmatprep.subr.mxu0 0.0
  %180 = vmatpush1.msra.mxu0 0.0
  %181 = vmatprep.subr.mxu0 0.0
  %182 = vmatpush1.msra.mxu0 0.0
  %183 = vmatprep.subr.mxu0 0.0
  %184 = vmatpush1.msra.mxu0 0.0
  %185 = vmatprep.subr.mxu0 0.0
  %186 = vmatpush1.msra.mxu0 0.0
  %187 = vmatprep.subr.mxu0 0.0
  %188 = vmatpush1.msra.mxu0 0.0
  %189 = vmatprep.subr.mxu0 0.0
  %190 = vmatpush1.msra.mxu0 0.0
  %191 = vmatprep.subr.mxu0 0.0
  %192 = vmatpush1.msra.mxu0 0.0
  %193 = vmatprep.subr.mxu0 0.0
  %194 = vmatpush1.msra.mxu0 0.0
  %195 = vmatprep.subr.mxu0 0.0
  %196 = vmatpush1.msra.mxu0 0.0
  %197 = vmatprep.subr.mxu0 0.0
  %198 = vmatpush1.msra.mxu0 0.0
  %199 = vmatprep.subr.mxu0 0.0
  %200 = vmatpush1.msra.mxu0 0.0
  %201 = vmatprep.subr.mxu0 0.0
  %202 = vmatpush1.msra.mxu0 0.0
  %203 = vmatprep.subr.mxu0 0.0
  %204 = vmatpush1.msra.mxu0 0.0
  %205 = vmatprep.subr.mxu0 0.0
  %206 = vmatpush1.msra.mxu0 0.0
  %207 = vmatprep.subr.mxu0 0.0
  %208 = vmatpush1.msra.mxu0 0.0
  %209 = vmatprep.subr.mxu0 0.0
  %210 = vmatpush1.msra.mxu0 0.0
  %211 = vmatprep.subr.mxu0 0.0
  %212 = vmatpush1.msra.mxu0 0.0
  %213 = vmatprep.subr.mxu0 0.0
  %214 = vmatpush1.msra.mxu0 0.0
  %215 = vmatprep.subr.mxu0 0.0
  %216 = vmatpush1.msra.mxu0 0.0
  %217 = vmatprep.mubr.f32.mxu0 0.0
  %218 = vmatmul.mubr.f32.gmra.mrb[0].mxu0 %v61
  %v219 = vpop.f32.mrb[0].mxu0
  %v220 = vadd.f32 %v151, %v219
  %v221 = vpop.f32.mrb[0].mxu0
  %222 = vmatprep.mubr.f32.mxu0 0.0
  %223 = vmatmul.mubr.f32.gmra.mrb[0].mxu0 %v64
  %v224 = vpop.f32.mrb[0].mxu0
  %v225 = vadd.f32 %v151, %v224
  %v226 = vpop.f32.mrb[0].mxu0
  %227 = vdwg.mxu0
  %v228 = vld [vmem:[%s4] sm:$0xff]
  %v229 = vld [vmem:[%s4 + $0x8] sm:$0xff]
  %v230 = vld [vmem:[%s4 + $0x10] sm:$0xff]
  %v231 = vld [vmem:[%s4 + $0x18] sm:$0xff]
  %s232 = scalar_lea.vmem %s5, 8
  %v233 = vld [vmem:[%s232] sm:$0x1]
  %v235 = vlaneseq
  %v236 = vshrl.u32 %v235, 7
  %v237 = vsub.s32 0, %v236
  %v238 = vrot.slane %v233, %v237
  %240 = vmatprep.subr.mxu0 0.0
  %241 = vmatpush1.msra.mxu0 %v228
  %242 = vmatprep.subr.mxu0 0.0
  %243 = vmatpush1.msra.mxu0 %v229
  %244 = vmatprep.subr.mxu0 0.0
  %245 = vmatpush1.msra.mxu0 %v230
  %246 = vmatprep.subr.mxu0 0.0
  %247 = vmatpush1.msra.mxu0 %v231
  %248 = vmatprep.subr.mxu0 0.0
  %249 = vmatpush1.msra.mxu0 0.0
  %250 = vmatprep.subr.mxu0 0.0
  %251 = vmatpush1.msra.mxu0 0.0
  %252 = vmatprep.subr.mxu0 0.0
  %253 = vmatpush1.msra.mxu0 0.0
  %254 = vmatprep.subr.mxu0 0.0
  %255 = vmatpush1.msra.mxu0 0.0
  %256 = vmatprep.subr.mxu0 0.0
  %257 = vmatpush1.msra.mxu0 0.0
  %258 = vmatprep.subr.mxu0 0.0
  %259 = vmatpush1.msra.mxu0 0.0
  %260 = vmatprep.subr.mxu0 0.0
  %261 = vmatpush1.msra.mxu0 0.0
  %262 = vmatprep.subr.mxu0 0.0
  %263 = vmatpush1.msra.mxu0 0.0
  %264 = vmatprep.subr.mxu0 0.0
  %265 = vmatpush1.msra.mxu0 0.0
  %266 = vmatprep.subr.mxu0 0.0
  %267 = vmatpush1.msra.mxu0 0.0
  %268 = vmatprep.subr.mxu0 0.0
  %269 = vmatpush1.msra.mxu0 0.0
  %270 = vmatprep.subr.mxu0 0.0
  %271 = vmatpush1.msra.mxu0 0.0
  %272 = vmatprep.subr.mxu0 0.0
  %273 = vmatpush1.msra.mxu0 0.0
  %274 = vmatprep.subr.mxu0 0.0
  %275 = vmatpush1.msra.mxu0 0.0
  %276 = vmatprep.subr.mxu0 0.0
  %277 = vmatpush1.msra.mxu0 0.0
  %278 = vmatprep.subr.mxu0 0.0
  %279 = vmatpush1.msra.mxu0 0.0
  %280 = vmatprep.subr.mxu0 0.0
  %281 = vmatpush1.msra.mxu0 0.0
  %282 = vmatprep.subr.mxu0 0.0
  %283 = vmatpush1.msra.mxu0 0.0
  %284 = vmatprep.subr.mxu0 0.0
  %285 = vmatpush1.msra.mxu0 0.0
  %286 = vmatprep.subr.mxu0 0.0
  %287 = vmatpush1.msra.mxu0 0.0
  %288 = vmatprep.subr.mxu0 0.0
  %289 = vmatpush1.msra.mxu0 0.0
  %290 = vmatprep.subr.mxu0 0.0
  %291 = vmatpush1.msra.mxu0 0.0
  %292 = vmatprep.subr.mxu0 0.0
  %293 = vmatpush1.msra.mxu0 0.0
  %294 = vmatprep.subr.mxu0 0.0
  %295 = vmatpush1.msra.mxu0 0.0
  %296 = vmatprep.subr.mxu0 0.0
  %297 = vmatpush1.msra.mxu0 0.0
  %298 = vmatprep.subr.mxu0 0.0
  %299 = vmatpush1.msra.mxu0 0.0
  %300 = vmatprep.subr.mxu0 0.0
  %301 = vmatpush1.msra.mxu0 0.0
  %302 = vmatprep.subr.mxu0 0.0
  %303 = vmatpush1.msra.mxu0 0.0
  %304 = vmatprep.mubr.f32.mxu0 0.0
  %305 = vmatmul.mubr.f32.gmra.mrb[0].mxu0 %v61
  %v306 = vpop.f32.mrb[0].mxu0
  %v307 = vadd.f32 %v238, %v306
  %v308 = vpop.f32.mrb[0].mxu0
  %309 = vmatprep.mubr.f32.mxu0 0.0
  %310 = vmatmul.mubr.f32.gmra.mrb[0].mxu0 %v64
  %v311 = vpop.f32.mrb[0].mxu0
  %v312 = vadd.f32 %v238, %v311
  %v313 = vpop.f32.mrb[0].mxu0
  %314 = vdwg.mxu0
  %vm315 = vcmask 64512
  %v317 = vsel %vm315, %v133, 0
  %v320 = vsel %vm315, %v138, 0
  %v323 = vsel %vm315, %v220, 0
  %v326 = vsel %vm315, %v225, 0
  %328 = vmatprep.subr.mxu0 0.0
  %329 = vmatpush1.xpose.msra.mxu0 %v323
  %330 = vmatprep.subr.mxu0 0.0
  %331 = vmatpush1.xpose.msra.mxu0 %v326
  %332 = vmatprep.subr.mxu0 0.0
  %333 = vmatpush1.xpose.msra.mxu0 0.0
  %334 = vmatprep.subr.mxu0 0.0
  %335 = vmatpush1.xpose.msra.mxu0 0.0
  %336 = vmatprep.subr.mxu0 0.0
  %337 = vmatpush1.xpose.msra.mxu0 0.0
  %338 = vmatprep.subr.mxu0 0.0
  %339 = vmatpush1.xpose.msra.mxu0 0.0
  %340 = vmatprep.subr.mxu0 0.0
  %341 = vmatpush1.xpose.msra.mxu0 0.0
  %342 = vmatprep.subr.mxu0 0.0
  %343 = vmatpush1.xpose.msra.mxu0 0.0
  %344 = vmatprep.subr.mxu0 0.0
  %345 = vmatpush1.xpose.msra.mxu0 0.0
  %346 = vmatprep.subr.mxu0 0.0
  %347 = vmatpush1.xpose.msra.mxu0 0.0
  %348 = vmatprep.subr.mxu0 0.0
  %349 = vmatpush1.xpose.msra.mxu0 0.0
  %350 = vmatprep.subr.mxu0 0.0
  %351 = vmatpush1.xpose.msra.mxu0 0.0
  %352 = vmatprep.subr.mxu0 0.0
  %353 = vmatpush1.xpose.msra.mxu0 0.0
  %354 = vmatprep.subr.mxu0 0.0
  %355 = vmatpush1.xpose.msra.mxu0 0.0
  %356 = vmatprep.subr.mxu0 0.0
  %357 = vmatpush1.xpose.msra.mxu0 0.0
  %358 = vmatprep.subr.mxu0 0.0
  %359 = vmatpush1.xpose.msra.mxu0 0.0
  %360 = vmatprep.subr.mxu0 0.0
  %361 = vmatpush1.xpose.msra.mxu0 0.0
  %362 = vmatprep.subr.mxu0 0.0
  %363 = vmatpush1.xpose.msra.mxu0 0.0
  %364 = vmatprep.subr.mxu0 0.0
  %365 = vmatpush1.xpose.msra.mxu0 0.0
  %366 = vmatprep.subr.mxu0 0.0
  %367 = vmatpush1.xpose.msra.mxu0 0.0
  %368 = vmatprep.subr.mxu0 0.0
  %369 = vmatpush1.xpose.msra.mxu0 0.0
  %370 = vmatprep.subr.mxu0 0.0
  %371 = vmatpush1.xpose.msra.mxu0 0.0
  %372 = vmatprep.subr.mxu0 0.0
  %373 = vmatpush1.xpose.msra.mxu0 0.0
  %374 = vmatprep.subr.mxu0 0.0
  %375 = vmatpush1.xpose.msra.mxu0 0.0
  %376 = vmatprep.subr.mxu0 0.0
  %377 = vmatpush1.xpose.msra.mxu0 0.0
  %378 = vmatprep.subr.mxu0 0.0
  %379 = vmatpush1.xpose.msra.mxu0 0.0
  %380 = vmatprep.subr.mxu0 0.0
  %381 = vmatpush1.xpose.msra.mxu0 0.0
  %382 = vmatprep.subr.mxu0 0.0
  %383 = vmatpush1.xpose.msra.mxu0 0.0
  %384 = vmatprep.subr.mxu0 0.0
  %385 = vmatpush1.xpose.msra.mxu0 0.0
  %386 = vmatprep.subr.mxu0 0.0
  %387 = vmatpush1.xpose.msra.mxu0 0.0
  %388 = vmatprep.subr.mxu0 0.0
  %389 = vmatpush1.xpose.msra.mxu0 0.0
  %390 = vmatprep.subr.mxu0 0.0
  %391 = vmatpush1.xpose.msra.mxu0 0.0
  %392 = vmatprep.mubr.f32.mxu0 0.0
  %393 = vmatmul.mubr.f32.gmra.mrb[0].mxu0 %v317
  %v394 = vpop.f32.mrb[0].mxu0
  %v395 = vadd.f32 %v46, %v394
  %v396 = vpop.f32.mrb[0].mxu0
  %397 = vmatprep.mubr.f32.mxu0 0.0
  %398 = vmatmul.mubr.f32.gmra.mrb[0].mxu0 %v320
  %v399 = vpop.f32.mrb[0].mxu0
  %v400 = vadd.f32 %v47, %v399
  %v401 = vpop.f32.mrb[0].mxu0
  %402 = vdwg.mxu0
  %vm403 = vcmask 130048
  %v404 = vsel %vm403, %v395, -inf
  %405 = vmax.xlane.f32.xlu0 %v404
  %v406 = vpop.xlane.xlu0 %405
  %v407 = vsel %vm403, %v400, -inf
  %408 = vmax.xlane.f32.xlu0 %v407
  %v409 = vpop.xlane.xlu0 %408
  %v410 = vsub.f32 %v395, %v406
  %v411 = vsub.f32 %v400, %v409
  %v412 = vmul.f32 %v410, 1.442695
  %v413 = vpow.pop %v412
  %v414 = vmul.f32 %v411, 1.442695
  %v415 = vpow.pop %v414
  %v416 = vsel %vm403, %v413, 0.0
  %417 = vadd.xlane.f32.xlu0 %v416
  %v418 = vpop.xlane.xlu0 %417
  %v419 = vsel %vm403, %v415, 0.0
  %420 = vadd.xlane.f32.xlu0 %v419
  %v421 = vpop.xlane.xlu0 %420
  %v422 = vrcp.pop %v418
  %v423 = vmul.f32 1.0, %v422
  %v424 = vrcp.pop %v421
  %v425 = vmul.f32 1.0, %v424
  %v427 = vsel %vm403, %v413, 0
  %v430 = vsel %vm403, %v415, 0
  %432 = vmatprep.subr.mxu0 0.0
  %433 = vmatpush1.msra.mxu0 %v307
  %434 = vmatprep.subr.mxu0 0.0
  %435 = vmatpush1.msra.mxu0 %v312
  %436 = vmatprep.subr.mxu0 0.0
  %437 = vmatpush1.msra.mxu0 0.0
  %438 = vmatprep.subr.mxu0 0.0
  %439 = vmatpush1.msra.mxu0 0.0
  %440 = vmatprep.subr.mxu0 0.0
  %441 = vmatpush1.msra.mxu0 0.0
  %442 = vmatprep.subr.mxu0 0.0
  %443 = vmatpush1.msra.mxu0 0.0
  %444 = vmatprep.subr.mxu0 0.0
  %445 = vmatpush1.msra.mxu0 0.0
  %446 = vmatprep.subr.mxu0 0.0
  %447 = vmatpush1.msra.mxu0 0.0
  %448 = vmatprep.subr.mxu0 0.0
  %449 = vmatpush1.msra.mxu0 0.0
  %450 = vmatprep.subr.mxu0 0.0
  %451 = vmatpush1.msra.mxu0 0.0
  %452 = vmatprep.subr.mxu0 0.0
  %453 = vmatpush1.msra.mxu0 0.0
  %454 = vmatprep.subr.mxu0 0.0
  %455 = vmatpush1.msra.mxu0 0.0
  %456 = vmatprep.subr.mxu0 0.0
  %457 = vmatpush1.msra.mxu0 0.0
  %458 = vmatprep.subr.mxu0 0.0
  %459 = vmatpush1.msra.mxu0 0.0
  %460 = vmatprep.subr.mxu0 0.0
  %461 = vmatpush1.msra.mxu0 0.0
  %462 = vmatprep.subr.mxu0 0.0
  %463 = vmatpush1.msra.mxu0 0.0
  %464 = vmatprep.subr.mxu0 0.0
  %465 = vmatpush1.msra.mxu0 0.0
  %466 = vmatprep.subr.mxu0 0.0
  %467 = vmatpush1.msra.mxu0 0.0
  %468 = vmatprep.subr.mxu0 0.0
  %469 = vmatpush1.msra.mxu0 0.0
  %470 = vmatprep.subr.mxu0 0.0
  %471 = vmatpush1.msra.mxu0 0.0
  %472 = vmatprep.subr.mxu0 0.0
  %473 = vmatpush1.msra.mxu0 0.0
  %474 = vmatprep.subr.mxu0 0.0
  %475 = vmatpush1.msra.mxu0 0.0
  %476 = vmatprep.subr.mxu0 0.0
  %477 = vmatpush1.msra.mxu0 0.0
  %478 = vmatprep.subr.mxu0 0.0
  %479 = vmatpush1.msra.mxu0 0.0
  %480 = vmatprep.subr.mxu0 0.0
  %481 = vmatpush1.msra.mxu0 0.0
  %482 = vmatprep.subr.mxu0 0.0
  %483 = vmatpush1.msra.mxu0 0.0
  %484 = vmatprep.subr.mxu0 0.0
  %485 = vmatpush1.msra.mxu0 0.0
  %486 = vmatprep.subr.mxu0 0.0
  %487 = vmatpush1.msra.mxu0 0.0
  %488 = vmatprep.subr.mxu0 0.0
  %489 = vmatpush1.msra.mxu0 0.0
  %490 = vmatprep.subr.mxu0 0.0
  %491 = vmatpush1.msra.mxu0 0.0
  %492 = vmatprep.subr.mxu0 0.0
  %493 = vmatpush1.msra.mxu0 0.0
  %494 = vmatprep.subr.mxu0 0.0
  %495 = vmatpush1.msra.mxu0 0.0
  %496 = vmatprep.mubr.f32.mxu0 0.0
  %497 = vmatmul.mubr.f32.gmra.mrb[0].mxu0 %v427
  %v498 = vpop.f32.mrb[0].mxu0
  %v499 = vadd.f32 0.0, %v498
  %v500 = vpop.f32.mrb[0].mxu0
  %501 = vmatprep.mubr.f32.mxu0 0.0
  %502 = vmatmul.mubr.f32.gmra.mrb[0].mxu0 %v430
  %v503 = vpop.f32.mrb[0].mxu0
  %v504 = vadd.f32 0.0, %v503
  %v505 = vpop.f32.mrb[0].mxu0
  %506 = vdwg.mxu0
  %v507 = vmul.f32 %v499, %v423
  %v508 = vmul.f32 %v504, %v425
  %v509 = vld [vmem:[%s6] sm:$0xff]
  %s510 = scalar_lea.vmem %s2, 32
  %v511 = vld [vmem:[%s510] sm:$0xff]
  %v512 = vld [vmem:[%s510 + $0x8] sm:$0xff]
  %v513 = vld [vmem:[%s510 + $0x10] sm:$0xff]
  %v514 = vld [vmem:[%s510 + $0x18] sm:$0xff]
  %s515 = scalar_lea.vmem %s5, 1
  %v516 = vld [vmem:[%s515] sm:$0x1]
  %v518 = vlaneseq
  %v519 = vshrl.u32 %v518, 7
  %v520 = vsub.s32 0, %v519
  %v521 = vrot.slane %v516, %v520
  %523 = vmatprep.subr.mxu0 0.0
  %524 = vmatpush1.msra.mxu0 %v511
  %525 = vmatprep.subr.mxu0 0.0
  %526 = vmatpush1.msra.mxu0 %v512
  %527 = vmatprep.subr.mxu0 0.0
  %528 = vmatpush1.msra.mxu0 %v513
  %529 = vmatprep.subr.mxu0 0.0
  %530 = vmatpush1.msra.mxu0 %v514
  %531 = vmatprep.subr.mxu0 0.0
  %532 = vmatpush1.msra.mxu0 0.0
  %533 = vmatprep.subr.mxu0 0.0
  %534 = vmatpush1.msra.mxu0 0.0
  %535 = vmatprep.subr.mxu0 0.0
  %536 = vmatpush1.msra.mxu0 0.0
  %537 = vmatprep.subr.mxu0 0.0
  %538 = vmatpush1.msra.mxu0 0.0
  %539 = vmatprep.subr.mxu0 0.0
  %540 = vmatpush1.msra.mxu0 0.0
  %541 = vmatprep.subr.mxu0 0.0
  %542 = vmatpush1.msra.mxu0 0.0
  %543 = vmatprep.subr.mxu0 0.0
  %544 = vmatpush1.msra.mxu0 0.0
  %545 = vmatprep.subr.mxu0 0.0
  %546 = vmatpush1.msra.mxu0 0.0
  %547 = vmatprep.subr.mxu0 0.0
  %548 = vmatpush1.msra.mxu0 0.0
  %549 = vmatprep.subr.mxu0 0.0
  %550 = vmatpush1.msra.mxu0 0.0
  %551 = vmatprep.subr.mxu0 0.0
  %552 = vmatpush1.msra.mxu0 0.0
  %553 = vmatprep.subr.mxu0 0.0
  %554 = vmatpush1.msra.mxu0 0.0
  %555 = vmatprep.subr.mxu0 0.0
  %556 = vmatpush1.msra.mxu0 0.0
  %557 = vmatprep.subr.mxu0 0.0
  %558 = vmatpush1.msra.mxu0 0.0
  %559 = vmatprep.subr.mxu0 0.0
  %560 = vmatpush1.msra.mxu0 0.0
  %561 = vmatprep.subr.mxu0 0.0
  %562 = vmatpush1.msra.mxu0 0.0
  %563 = vmatprep.subr.mxu0 0.0
  %564 = vmatpush1.msra.mxu0 0.0
  %565 = vmatprep.subr.mxu0 0.0
  %566 = vmatpush1.msra.mxu0 0.0
  %567 = vmatprep.subr.mxu0 0.0
  %568 = vmatpush1.msra.mxu0 0.0
  %569 = vmatprep.subr.mxu0 0.0
  %570 = vmatpush1.msra.mxu0 0.0
  %571 = vmatprep.subr.mxu0 0.0
  %572 = vmatpush1.msra.mxu0 0.0
  %573 = vmatprep.subr.mxu0 0.0
  %574 = vmatpush1.msra.mxu0 0.0
  %575 = vmatprep.subr.mxu0 0.0
  %576 = vmatpush1.msra.mxu0 0.0
  %577 = vmatprep.subr.mxu0 0.0
  %578 = vmatpush1.msra.mxu0 0.0
  %579 = vmatprep.subr.mxu0 0.0
  %580 = vmatpush1.msra.mxu0 0.0
  %581 = vmatprep.subr.mxu0 0.0
  %582 = vmatpush1.msra.mxu0 0.0
  %583 = vmatprep.subr.mxu0 0.0
  %584 = vmatpush1.msra.mxu0 0.0
  %585 = vmatprep.subr.mxu0 0.0
  %586 = vmatpush1.msra.mxu0 0.0
  %587 = vmatprep.mubr.f32.mxu0 0.0
  %588 = vmatmul.mubr.f32.gmra.mrb[0].mxu0 %v61
  %v589 = vpop.f32.mrb[0].mxu0
  %v590 = vadd.f32 %v521, %v589
  %v591 = vpop.f32.mrb[0].mxu0
  %592 = vmatprep.mubr.f32.mxu0 0.0
  %593 = vmatmul.mubr.f32.gmra.mrb[0].mxu0 %v64
  %v594 = vpop.f32.mrb[0].mxu0
  %v595 = vadd.f32 %v521, %v594
  %v596 = vpop.f32.mrb[0].mxu0
  %597 = vdwg.mxu0
  %s598 = scalar_lea.vmem %s3, 32
  %v599 = vld [vmem:[%s598] sm:$0xff]
  %v600 = vld [vmem:[%s598 + $0x8] sm:$0xff]
  %v601 = vld [vmem:[%s598 + $0x10] sm:$0xff]
  %v602 = vld [vmem:[%s598 + $0x18] sm:$0xff]
  %s603 = scalar_lea.vmem %s5, 5
  %v604 = vld [vmem:[%s603] sm:$0x1]
  %v606 = vlaneseq
  %v607 = vshrl.u32 %v606, 7
  %v608 = vsub.s32 0, %v607
  %v609 = vrot.slane %v604, %v608
  %611 = vmatprep.subr.mxu0 0.0
  %612 = vmatpush1.msra.mxu0 %v599
  %613 = vmatprep.subr.mxu0 0.0
  %614 = vmatpush1.msra.mxu0 %v600
  %615 = vmatprep.subr.mxu0 0.0
  %616 = vmatpush1.msra.mxu0 %v601
  %617 = vmatprep.subr.mxu0 0.0
  %618 = vmatpush1.msra.mxu0 %v602
  %619 = vmatprep.subr.mxu0 0.0
  %620 = vmatpush1.msra.mxu0 0.0
  %621 = vmatprep.subr.mxu0 0.0
  %622 = vmatpush1.msra.mxu0 0.0
  %623 = vmatprep.subr.mxu0 0.0
  %624 = vmatpush1.msra.mxu0 0.0
  %625 = vmatprep.subr.mxu0 0.0
  %626 = vmatpush1.msra.mxu0 0.0
  %627 = vmatprep.subr.mxu0 0.0
  %628 = vmatpush1.msra.mxu0 0.0
  %629 = vmatprep.subr.mxu0 0.0
  %630 = vmatpush1.msra.mxu0 0.0
  %631 = vmatprep.subr.mxu0 0.0
  %632 = vmatpush1.msra.mxu0 0.0
  %633 = vmatprep.subr.mxu0 0.0
  %634 = vmatpush1.msra.mxu0 0.0
  %635 = vmatprep.subr.mxu0 0.0
  %636 = vmatpush1.msra.mxu0 0.0
  %637 = vmatprep.subr.mxu0 0.0
  %638 = vmatpush1.msra.mxu0 0.0
  %639 = vmatprep.subr.mxu0 0.0
  %640 = vmatpush1.msra.mxu0 0.0
  %641 = vmatprep.subr.mxu0 0.0
  %642 = vmatpush1.msra.mxu0 0.0
  %643 = vmatprep.subr.mxu0 0.0
  %644 = vmatpush1.msra.mxu0 0.0
  %645 = vmatprep.subr.mxu0 0.0
  %646 = vmatpush1.msra.mxu0 0.0
  %647 = vmatprep.subr.mxu0 0.0
  %648 = vmatpush1.msra.mxu0 0.0
  %649 = vmatprep.subr.mxu0 0.0
  %650 = vmatpush1.msra.mxu0 0.0
  %651 = vmatprep.subr.mxu0 0.0
  %652 = vmatpush1.msra.mxu0 0.0
  %653 = vmatprep.subr.mxu0 0.0
  %654 = vmatpush1.msra.mxu0 0.0
  %655 = vmatprep.subr.mxu0 0.0
  %656 = vmatpush1.msra.mxu0 0.0
  %657 = vmatprep.subr.mxu0 0.0
  %658 = vmatpush1.msra.mxu0 0.0
  %659 = vmatprep.subr.mxu0 0.0
  %660 = vmatpush1.msra.mxu0 0.0
  %661 = vmatprep.subr.mxu0 0.0
  %662 = vmatpush1.msra.mxu0 0.0
  %663 = vmatprep.subr.mxu0 0.0
  %664 = vmatpush1.msra.mxu0 0.0
  %665 = vmatprep.subr.mxu0 0.0
  %666 = vmatpush1.msra.mxu0 0.0
  %667 = vmatprep.subr.mxu0 0.0
  %668 = vmatpush1.msra.mxu0 0.0
  %669 = vmatprep.subr.mxu0 0.0
  %670 = vmatpush1.msra.mxu0 0.0
  %671 = vmatprep.subr.mxu0 0.0
  %672 = vmatpush1.msra.mxu0 0.0
  %673 = vmatprep.subr.mxu0 0.0
  %674 = vmatpush1.msra.mxu0 0.0
  %675 = vmatprep.mubr.f32.mxu0 0.0
  %676 = vmatmul.mubr.f32.gmra.mrb[0].mxu0 %v61
  %v677 = vpop.f32.mrb[0].mxu0
  %v678 = vadd.f32 %v609, %v677
  %v679 = vpop.f32.mrb[0].mxu0
  %680 = vmatprep.mubr.f32.mxu0 0.0
  %681 = vmatmul.mubr.f32.gmra.mrb[0].mxu0 %v64
  %v682 = vpop.f32.mrb[0].mxu0
  %v683 = vadd.f32 %v609, %v682
  %v684 = vpop.f32.mrb[0].mxu0
  %685 = vdwg.mxu0
  %s686 = scalar_lea.vmem %s4, 32
  %v687 = vld [vmem:[%s686] sm:$0xff]
  %v688 = vld [vmem:[%s686 + $0x8] sm:$0xff]
  %v689 = vld [vmem:[%s686 + $0x10] sm:$0xff]
  %v690 = vld [vmem:[%s686 + $0x18] sm:$0xff]
  %s691 = scalar_lea.vmem %s5, 9
  %v692 = vld [vmem:[%s691] sm:$0x1]
  %v694 = vlaneseq
  %v695 = vshrl.u32 %v694, 7
  %v696 = vsub.s32 0, %v695
  %v697 = vrot.slane %v692, %v696
  %699 = vmatprep.subr.mxu0 0.0
  %700 = vmatpush1.msra.mxu0 %v687
  %701 = vmatprep.subr.mxu0 0.0
  %702 = vmatpush1.msra.mxu0 %v688
  %703 = vmatprep.subr.mxu0 0.0
  %704 = vmatpush1.msra.mxu0 %v689
  %705 = vmatprep.subr.mxu0 0.0
  %706 = vmatpush1.msra.mxu0 %v690
  %707 = vmatprep.subr.mxu0 0.0
  %708 = vmatpush1.msra.mxu0 0.0
  %709 = vmatprep.subr.mxu0 0.0
  %710 = vmatpush1.msra.mxu0 0.0
  %711 = vmatprep.subr.mxu0 0.0
  %712 = vmatpush1.msra.mxu0 0.0
  %713 = vmatprep.subr.mxu0 0.0
  %714 = vmatpush1.msra.mxu0 0.0
  %715 = vmatprep.subr.mxu0 0.0
  %716 = vmatpush1.msra.mxu0 0.0
  %717 = vmatprep.subr.mxu0 0.0
  %718 = vmatpush1.msra.mxu0 0.0
  %719 = vmatprep.subr.mxu0 0.0
  %720 = vmatpush1.msra.mxu0 0.0
  %721 = vmatprep.subr.mxu0 0.0
  %722 = vmatpush1.msra.mxu0 0.0
  %723 = vmatprep.subr.mxu0 0.0
  %724 = vmatpush1.msra.mxu0 0.0
  %725 = vmatprep.subr.mxu0 0.0
  %726 = vmatpush1.msra.mxu0 0.0
  %727 = vmatprep.subr.mxu0 0.0
  %728 = vmatpush1.msra.mxu0 0.0
  %729 = vmatprep.subr.mxu0 0.0
  %730 = vmatpush1.msra.mxu0 0.0
  %731 = vmatprep.subr.mxu0 0.0
  %732 = vmatpush1.msra.mxu0 0.0
  %733 = vmatprep.subr.mxu0 0.0
  %734 = vmatpush1.msra.mxu0 0.0
  %735 = vmatprep.subr.mxu0 0.0
  %736 = vmatpush1.msra.mxu0 0.0
  %737 = vmatprep.subr.mxu0 0.0
  %738 = vmatpush1.msra.mxu0 0.0
  %739 = vmatprep.subr.mxu0 0.0
  %740 = vmatpush1.msra.mxu0 0.0
  %741 = vmatprep.subr.mxu0 0.0
  %742 = vmatpush1.msra.mxu0 0.0
  %743 = vmatprep.subr.mxu0 0.0
  %744 = vmatpush1.msra.mxu0 0.0
  %745 = vmatprep.subr.mxu0 0.0
  %746 = vmatpush1.msra.mxu0 0.0
  %747 = vmatprep.subr.mxu0 0.0
  %748 = vmatpush1.msra.mxu0 0.0
  %749 = vmatprep.subr.mxu0 0.0
  %750 = vmatpush1.msra.mxu0 0.0
  %751 = vmatprep.subr.mxu0 0.0
  %752 = vmatpush1.msra.mxu0 0.0
  %753 = vmatprep.subr.mxu0 0.0
  %754 = vmatpush1.msra.mxu0 0.0
  %755 = vmatprep.subr.mxu0 0.0
  %756 = vmatpush1.msra.mxu0 0.0
  %757 = vmatprep.subr.mxu0 0.0
  %758 = vmatpush1.msra.mxu0 0.0
  %759 = vmatprep.subr.mxu0 0.0
  %760 = vmatpush1.msra.mxu0 0.0
  %761 = vmatprep.subr.mxu0 0.0
  %762 = vmatpush1.msra.mxu0 0.0
  %763 = vmatprep.mubr.f32.mxu0 0.0
  %764 = vmatmul.mubr.f32.gmra.mrb[0].mxu0 %v61
  %v765 = vpop.f32.mrb[0].mxu0
  %v766 = vadd.f32 %v697, %v765
  %v767 = vpop.f32.mrb[0].mxu0
  %768 = vmatprep.mubr.f32.mxu0 0.0
  %769 = vmatmul.mubr.f32.gmra.mrb[0].mxu0 %v64
  %v770 = vpop.f32.mrb[0].mxu0
  %v771 = vadd.f32 %v697, %v770
  %v772 = vpop.f32.mrb[0].mxu0
  %773 = vdwg.mxu0
  %v775 = vsel %vm315, %v590, 0
  %v778 = vsel %vm315, %v595, 0
  %v781 = vsel %vm315, %v678, 0
  %v784 = vsel %vm315, %v683, 0
  %786 = vmatprep.subr.mxu0 0.0
  %787 = vmatpush1.xpose.msra.mxu0 %v781
  %788 = vmatprep.subr.mxu0 0.0
  %789 = vmatpush1.xpose.msra.mxu0 %v784
  %790 = vmatprep.subr.mxu0 0.0
  %791 = vmatpush1.xpose.msra.mxu0 0.0
  %792 = vmatprep.subr.mxu0 0.0
  %793 = vmatpush1.xpose.msra.mxu0 0.0
  %794 = vmatprep.subr.mxu0 0.0
  %795 = vmatpush1.xpose.msra.mxu0 0.0
  %796 = vmatprep.subr.mxu0 0.0
  %797 = vmatpush1.xpose.msra.mxu0 0.0
  %798 = vmatprep.subr.mxu0 0.0
  %799 = vmatpush1.xpose.msra.mxu0 0.0
  %800 = vmatprep.subr.mxu0 0.0
  %801 = vmatpush1.xpose.msra.mxu0 0.0
  %802 = vmatprep.subr.mxu0 0.0
  %803 = vmatpush1.xpose.msra.mxu0 0.0
  %804 = vmatprep.subr.mxu0 0.0
  %805 = vmatpush1.xpose.msra.mxu0 0.0
  %806 = vmatprep.subr.mxu0 0.0
  %807 = vmatpush1.xpose.msra.mxu0 0.0
  %808 = vmatprep.subr.mxu0 0.0
  %809 = vmatpush1.xpose.msra.mxu0 0.0
  %810 = vmatprep.subr.mxu0 0.0
  %811 = vmatpush1.xpose.msra.mxu0 0.0
  %812 = vmatprep.subr.mxu0 0.0
  %813 = vmatpush1.xpose.msra.mxu0 0.0
  %814 = vmatprep.subr.mxu0 0.0
  %815 = vmatpush1.xpose.msra.mxu0 0.0
  %816 = vmatprep.subr.mxu0 0.0
  %817 = vmatpush1.xpose.msra.mxu0 0.0
  %818 = vmatprep.subr.mxu0 0.0
  %819 = vmatpush1.xpose.msra.mxu0 0.0
  %820 = vmatprep.subr.mxu0 0.0
  %821 = vmatpush1.xpose.msra.mxu0 0.0
  %822 = vmatprep.subr.mxu0 0.0
  %823 = vmatpush1.xpose.msra.mxu0 0.0
  %824 = vmatprep.subr.mxu0 0.0
  %825 = vmatpush1.xpose.msra.mxu0 0.0
  %826 = vmatprep.subr.mxu0 0.0
  %827 = vmatpush1.xpose.msra.mxu0 0.0
  %828 = vmatprep.subr.mxu0 0.0
  %829 = vmatpush1.xpose.msra.mxu0 0.0
  %830 = vmatprep.subr.mxu0 0.0
  %831 = vmatpush1.xpose.msra.mxu0 0.0
  %832 = vmatprep.subr.mxu0 0.0
  %833 = vmatpush1.xpose.msra.mxu0 0.0
  %834 = vmatprep.subr.mxu0 0.0
  %835 = vmatpush1.xpose.msra.mxu0 0.0
  %836 = vmatprep.subr.mxu0 0.0
  %837 = vmatpush1.xpose.msra.mxu0 0.0
  %838 = vmatprep.subr.mxu0 0.0
  %839 = vmatpush1.xpose.msra.mxu0 0.0
  %840 = vmatprep.subr.mxu0 0.0
  %841 = vmatpush1.xpose.msra.mxu0 0.0
  %842 = vmatprep.subr.mxu0 0.0
  %843 = vmatpush1.xpose.msra.mxu0 0.0
  %844 = vmatprep.subr.mxu0 0.0
  %845 = vmatpush1.xpose.msra.mxu0 0.0
  %846 = vmatprep.subr.mxu0 0.0
  %847 = vmatpush1.xpose.msra.mxu0 0.0
  %848 = vmatprep.subr.mxu0 0.0
  %849 = vmatpush1.xpose.msra.mxu0 0.0
  %850 = vmatprep.mubr.f32.mxu0 0.0
  %851 = vmatmul.mubr.f32.gmra.mrb[0].mxu0 %v775
  %v852 = vpop.f32.mrb[0].mxu0
  %v853 = vadd.f32 %v46, %v852
  %v854 = vpop.f32.mrb[0].mxu0
  %855 = vmatprep.mubr.f32.mxu0 0.0
  %856 = vmatmul.mubr.f32.gmra.mrb[0].mxu0 %v778
  %v857 = vpop.f32.mrb[0].mxu0
  %v858 = vadd.f32 %v47, %v857
  %v859 = vpop.f32.mrb[0].mxu0
  %860 = vdwg.mxu0
  %v861 = vsel %vm403, %v853, -inf
  %862 = vmax.xlane.f32.xlu0 %v861
  %v863 = vpop.xlane.xlu0 %862
  %v864 = vsel %vm403, %v858, -inf
  %865 = vmax.xlane.f32.xlu0 %v864
  %v866 = vpop.xlane.xlu0 %865
  %v867 = vsub.f32 %v853, %v863
  %v868 = vsub.f32 %v858, %v866
  %v869 = vmul.f32 %v867, 1.442695
  %v870 = vpow.pop %v869
  %v871 = vmul.f32 %v868, 1.442695
  %v872 = vpow.pop %v871
  %v873 = vsel %vm403, %v870, 0.0
  %874 = vadd.xlane.f32.xlu0 %v873
  %v875 = vpop.xlane.xlu0 %874
  %v876 = vsel %vm403, %v872, 0.0
  %877 = vadd.xlane.f32.xlu0 %v876
  %v878 = vpop.xlane.xlu0 %877
  %v879 = vrcp.pop %v875
  %v880 = vmul.f32 1.0, %v879
  %v881 = vrcp.pop %v878
  %v882 = vmul.f32 1.0, %v881
  %v884 = vsel %vm403, %v870, 0
  %v887 = vsel %vm403, %v872, 0
  %889 = vmatprep.subr.mxu0 0.0
  %890 = vmatpush1.msra.mxu0 %v766
  %891 = vmatprep.subr.mxu0 0.0
  %892 = vmatpush1.msra.mxu0 %v771
  %893 = vmatprep.subr.mxu0 0.0
  %894 = vmatpush1.msra.mxu0 0.0
  %895 = vmatprep.subr.mxu0 0.0
  %896 = vmatpush1.msra.mxu0 0.0
  %897 = vmatprep.subr.mxu0 0.0
  %898 = vmatpush1.msra.mxu0 0.0
  %899 = vmatprep.subr.mxu0 0.0
  %900 = vmatpush1.msra.mxu0 0.0
  %901 = vmatprep.subr.mxu0 0.0
  %902 = vmatpush1.msra.mxu0 0.0
  %903 = vmatprep.subr.mxu0 0.0
  %904 = vmatpush1.msra.mxu0 0.0
  %905 = vmatprep.subr.mxu0 0.0
  %906 = vmatpush1.msra.mxu0 0.0
  %907 = vmatprep.subr.mxu0 0.0
  %908 = vmatpush1.msra.mxu0 0.0
  %909 = vmatprep.subr.mxu0 0.0
  %910 = vmatpush1.msra.mxu0 0.0
  %911 = vmatprep.subr.mxu0 0.0
  %912 = vmatpush1.msra.mxu0 0.0
  %913 = vmatprep.subr.mxu0 0.0
  %914 = vmatpush1.msra.mxu0 0.0
  %915 = vmatprep.subr.mxu0 0.0
  %916 = vmatpush1.msra.mxu0 0.0
  %917 = vmatprep.subr.mxu0 0.0
  %918 = vmatpush1.msra.mxu0 0.0
  %919 = vmatprep.subr.mxu0 0.0
  %920 = vmatpush1.msra.mxu0 0.0
  %921 = vmatprep.subr.mxu0 0.0
  %922 = vmatpush1.msra.mxu0 0.0
  %923 = vmatprep.subr.mxu0 0.0
  %924 = vmatpush1.msra.mxu0 0.0
  %925 = vmatprep.subr.mxu0 0.0
  %926 = vmatpush1.msra.mxu0 0.0
  %927 = vmatprep.subr.mxu0 0.0
  %928 = vmatpush1.msra.mxu0 0.0
  %929 = vmatprep.subr.mxu0 0.0
  %930 = vmatpush1.msra.mxu0 0.0
  %931 = vmatprep.subr.mxu0 0.0
  %932 = vmatpush1.msra.mxu0 0.0
  %933 = vmatprep.subr.mxu0 0.0
  %934 = vmatpush1.msra.mxu0 0.0
  %935 = vmatprep.subr.mxu0 0.0
  %936 = vmatpush1.msra.mxu0 0.0
  %937 = vmatprep.subr.mxu0 0.0
  %938 = vmatpush1.msra.mxu0 0.0
  %939 = vmatprep.subr.mxu0 0.0
  %940 = vmatpush1.msra.mxu0 0.0
  %941 = vmatprep.subr.mxu0 0.0
  %942 = vmatpush1.msra.mxu0 0.0
  %943 = vmatprep.subr.mxu0 0.0
  %944 = vmatpush1.msra.mxu0 0.0
  %945 = vmatprep.subr.mxu0 0.0
  %946 = vmatpush1.msra.mxu0 0.0
  %947 = vmatprep.subr.mxu0 0.0
  %948 = vmatpush1.msra.mxu0 0.0
  %949 = vmatprep.subr.mxu0 0.0
  %950 = vmatpush1.msra.mxu0 0.0
  %951 = vmatprep.subr.mxu0 0.0
  %952 = vmatpush1.msra.mxu0 0.0
  %953 = vmatprep.mubr.f32.mxu0 0.0
  %954 = vmatmul.mubr.f32.gmra.mrb[0].mxu0 %v884
  %v955 = vpop.f32.mrb[0].mxu0
  %v956 = vadd.f32 0.0, %v955
  %v957 = vpop.f32.mrb[0].mxu0
  %958 = vmatprep.mubr.f32.mxu0 0.0
  %959 = vmatmul.mubr.f32.gmra.mrb[0].mxu0 %v887
  %v960 = vpop.f32.mrb[0].mxu0
  %v961 = vadd.f32 0.0, %v960
  %v962 = vpop.f32.mrb[0].mxu0
  %963 = vdwg.mxu0
  %v964 = vmul.f32 %v956, %v880
  %v965 = vmul.f32 %v961, %v882
  %s966 = scalar_lea.vmem %s6, 8
  %v967 = vld [vmem:[%s966] sm:$0xff]
  %v969 = vsel %vm315, %v964, 0
  %v972 = vsel %vm315, %v965, 0
  %974 = vmatprep.subr.mxu0 0.0
  %975 = vmatpush1.msra.mxu0 %v967
  %976 = vmatprep.subr.mxu0 0.0
  %977 = vmatpush1.msra.mxu0 0.0
  %978 = vmatprep.subr.mxu0 0.0
  %979 = vmatpush1.msra.mxu0 0.0
  %980 = vmatprep.subr.mxu0 0.0
  %981 = vmatpush1.msra.mxu0 0.0
  %982 = vmatprep.subr.mxu0 0.0
  %983 = vmatpush1.msra.mxu0 0.0
  %984 = vmatprep.subr.mxu0 0.0
  %985 = vmatpush1.msra.mxu0 0.0
  %986 = vmatprep.subr.mxu0 0.0
  %987 = vmatpush1.msra.mxu0 0.0
  %988 = vmatprep.subr.mxu0 0.0
  %989 = vmatpush1.msra.mxu0 0.0
  %990 = vmatprep.subr.mxu0 0.0
  %991 = vmatpush1.msra.mxu0 0.0
  %992 = vmatprep.subr.mxu0 0.0
  %993 = vmatpush1.msra.mxu0 0.0
  %994 = vmatprep.subr.mxu0 0.0
  %995 = vmatpush1.msra.mxu0 0.0
  %996 = vmatprep.subr.mxu0 0.0
  %997 = vmatpush1.msra.mxu0 0.0
  %998 = vmatprep.subr.mxu0 0.0
  %999 = vmatpush1.msra.mxu0 0.0
  %1000 = vmatprep.subr.mxu0 0.0
  %1001 = vmatpush1.msra.mxu0 0.0
  %1002 = vmatprep.subr.mxu0 0.0
  %1003 = vmatpush1.msra.mxu0 0.0
  %1004 = vmatprep.subr.mxu0 0.0
  %1005 = vmatpush1.msra.mxu0 0.0
  %1006 = vmatprep.subr.mxu0 0.0
  %1007 = vmatpush1.msra.mxu0 0.0
  %1008 = vmatprep.subr.mxu0 0.0
  %1009 = vmatpush1.msra.mxu0 0.0
  %1010 = vmatprep.subr.mxu0 0.0
  %1011 = vmatpush1.msra.mxu0 0.0
  %1012 = vmatprep.subr.mxu0 0.0
  %1013 = vmatpush1.msra.mxu0 0.0
  %1014 = vmatprep.subr.mxu0 0.0
  %1015 = vmatpush1.msra.mxu0 0.0
  %1016 = vmatprep.subr.mxu0 0.0
  %1017 = vmatpush1.msra.mxu0 0.0
  %1018 = vmatprep.subr.mxu0 0.0
  %1019 = vmatpush1.msra.mxu0 0.0
  %1020 = vmatprep.subr.mxu0 0.0
  %1021 = vmatpush1.msra.mxu0 0.0
  %1022 = vmatprep.subr.mxu0 0.0
  %1023 = vmatpush1.msra.mxu0 0.0
  %1024 = vmatprep.subr.mxu0 0.0
  %1025 = vmatpush1.msra.mxu0 0.0
  %1026 = vmatprep.subr.mxu0 0.0
  %1027 = vmatpush1.msra.mxu0 0.0
  %1028 = vmatprep.subr.mxu0 0.0
  %1029 = vmatpush1.msra.mxu0 0.0
  %1030 = vmatprep.subr.mxu0 0.0
  %1031 = vmatpush1.msra.mxu0 0.0
  %1032 = vmatprep.subr.mxu0 0.0
  %1033 = vmatpush1.msra.mxu0 0.0
  %1034 = vmatprep.subr.mxu0 0.0
  %1035 = vmatpush1.msra.mxu0 0.0
  %1036 = vmatprep.subr.mxu0 0.0
  %1037 = vmatpush1.msra.mxu0 0.0
  %1038 = vmatprep.mubr.f32.mxu0 0.0
  %1039 = vmatmul.mubr.f32.gmra.mrb[0].mxu0 %v969
  %v1040 = vpop.f32.mrb[0].mxu0
  %v1041 = vadd.f32 0.0, %v1040
  %v1042 = vpop.f32.mrb[0].mxu0
  %1043 = vmatprep.mubr.f32.mxu0 0.0
  %1044 = vmatmul.mubr.f32.gmra.mrb[0].mxu0 %v972
  %v1045 = vpop.f32.mrb[0].mxu0
  %v1046 = vadd.f32 0.0, %v1045
  %v1047 = vpop.f32.mrb[0].mxu0
  %1048 = vdwg.mxu0
  %v1050 = vsel %vm315, %v507, 0
  %v1053 = vsel %vm315, %v508, 0
  %1055 = vmatprep.subr.mxu0 0.0
  %1056 = vmatpush1.msra.mxu0 %v509
  %1057 = vmatprep.subr.mxu0 0.0
  %1058 = vmatpush1.msra.mxu0 0.0
  %1059 = vmatprep.subr.mxu0 0.0
  %1060 = vmatpush1.msra.mxu0 0.0
  %1061 = vmatprep.subr.mxu0 0.0
  %1062 = vmatpush1.msra.mxu0 0.0
  %1063 = vmatprep.subr.mxu0 0.0
  %1064 = vmatpush1.msra.mxu0 0.0
  %1065 = vmatprep.subr.mxu0 0.0
  %1066 = vmatpush1.msra.mxu0 0.0
  %1067 = vmatprep.subr.mxu0 0.0
  %1068 = vmatpush1.msra.mxu0 0.0
  %1069 = vmatprep.subr.mxu0 0.0
  %1070 = vmatpush1.msra.mxu0 0.0
  %1071 = vmatprep.subr.mxu0 0.0
  %1072 = vmatpush1.msra.mxu0 0.0
  %1073 = vmatprep.subr.mxu0 0.0
  %1074 = vmatpush1.msra.mxu0 0.0
  %1075 = vmatprep.subr.mxu0 0.0
  %1076 = vmatpush1.msra.mxu0 0.0
  %1077 = vmatprep.subr.mxu0 0.0
  %1078 = vmatpush1.msra.mxu0 0.0
  %1079 = vmatprep.subr.mxu0 0.0
  %1080 = vmatpush1.msra.mxu0 0.0
  %1081 = vmatprep.subr.mxu0 0.0
  %1082 = vmatpush1.msra.mxu0 0.0
  %1083 = vmatprep.subr.mxu0 0.0
  %1084 = vmatpush1.msra.mxu0 0.0
  %1085 = vmatprep.subr.mxu0 0.0
  %1086 = vmatpush1.msra.mxu0 0.0
  %1087 = vmatprep.subr.mxu0 0.0
  %1088 = vmatpush1.msra.mxu0 0.0
  %1089 = vmatprep.subr.mxu0 0.0
  %1090 = vmatpush1.msra.mxu0 0.0
  %1091 = vmatprep.subr.mxu0 0.0
  %1092 = vmatpush1.msra.mxu0 0.0
  %1093 = vmatprep.subr.mxu0 0.0
  %1094 = vmatpush1.msra.mxu0 0.0
  %1095 = vmatprep.subr.mxu0 0.0
  %1096 = vmatpush1.msra.mxu0 0.0
  %1097 = vmatprep.subr.mxu0 0.0
  %1098 = vmatpush1.msra.mxu0 0.0
  %1099 = vmatprep.subr.mxu0 0.0
  %1100 = vmatpush1.msra.mxu0 0.0
  %1101 = vmatprep.subr.mxu0 0.0
  %1102 = vmatpush1.msra.mxu0 0.0
  %1103 = vmatprep.subr.mxu0 0.0
  %1104 = vmatpush1.msra.mxu0 0.0
  %1105 = vmatprep.subr.mxu0 0.0
  %1106 = vmatpush1.msra.mxu0 0.0
  %1107 = vmatprep.subr.mxu0 0.0
  %1108 = vmatpush1.msra.mxu0 0.0
  %1109 = vmatprep.subr.mxu0 0.0
  %1110 = vmatpush1.msra.mxu0 0.0
  %1111 = vmatprep.subr.mxu0 0.0
  %1112 = vmatpush1.msra.mxu0 0.0
  %1113 = vmatprep.subr.mxu0 0.0
  %1114 = vmatpush1.msra.mxu0 0.0
  %1115 = vmatprep.subr.mxu0 0.0
  %1116 = vmatpush1.msra.mxu0 0.0
  %1117 = vmatprep.subr.mxu0 0.0
  %1118 = vmatpush1.msra.mxu0 0.0
  %1119 = vmatprep.mubr.f32.mxu0 0.0
  %1120 = vmatmul.mubr.f32.gmra.mrb[0].mxu0 %v1050
  %v1121 = vpop.f32.mrb[0].mxu0
  %v1122 = vadd.f32 %v1041, %v1121
  %v1123 = vpop.f32.mrb[0].mxu0
  %1124 = vmatprep.mubr.f32.mxu0 0.0
  %1125 = vmatmul.mubr.f32.gmra.mrb[0].mxu0 %v1053
  %v1126 = vpop.f32.mrb[0].mxu0
  %v1127 = vadd.f32 %v1046, %v1126
  %v1128 = vpop.f32.mrb[0].mxu0
  %1129 = vdwg.mxu0
  %s1130 = scalar_lea.vmem %s2, 64
  %v1131 = vld [vmem:[%s1130] sm:$0xff]
  %v1132 = vld [vmem:[%s1130 + $0x8] sm:$0xff]
  %v1133 = vld [vmem:[%s1130 + $0x10] sm:$0xff]
  %v1134 = vld [vmem:[%s1130 + $0x18] sm:$0xff]
  %s1135 = scalar_lea.vmem %s5, 2
  %v1136 = vld [vmem:[%s1135] sm:$0x1]
  %v1138 = vlaneseq
  %v1139 = vshrl.u32 %v1138, 7
  %v1140 = vsub.s32 0, %v1139
  %v1141 = vrot.slane %v1136, %v1140
  %1143 = vmatprep.subr.mxu0 0.0
  %1144 = vmatpush1.msra.mxu0 %v1131
  %1145 = vmatprep.subr.mxu0 0.0
  %1146 = vmatpush1.msra.mxu0 %v1132
  %1147 = vmatprep.subr.mxu0 0.0
  %1148 = vmatpush1.msra.mxu0 %v1133
  %1149 = vmatprep.subr.mxu0 0.0
  %1150 = vmatpush1.msra.mxu0 %v1134
  %1151 = vmatprep.subr.mxu0 0.0
  %1152 = vmatpush1.msra.mxu0 0.0
  %1153 = vmatprep.subr.mxu0 0.0
  %1154 = vmatpush1.msra.mxu0 0.0
  %1155 = vmatprep.subr.mxu0 0.0
  %1156 = vmatpush1.msra.mxu0 0.0
  %1157 = vmatprep.subr.mxu0 0.0
  %1158 = vmatpush1.msra.mxu0 0.0
  %1159 = vmatprep.subr.mxu0 0.0
  %1160 = vmatpush1.msra.mxu0 0.0
  %1161 = vmatprep.subr.mxu0 0.0
  %1162 = vmatpush1.msra.mxu0 0.0
  %1163 = vmatprep.subr.mxu0 0.0
  %1164 = vmatpush1.msra.mxu0 0.0
  %1165 = vmatprep.subr.mxu0 0.0
  %1166 = vmatpush1.msra.mxu0 0.0
  %1167 = vmatprep.subr.mxu0 0.0
  %1168 = vmatpush1.msra.mxu0 0.0
  %1169 = vmatprep.subr.mxu0 0.0
  %1170 = vmatpush1.msra.mxu0 0.0
  %1171 = vmatprep.subr.mxu0 0.0
  %1172 = vmatpush1.msra.mxu0 0.0
  %1173 = vmatprep.subr.mxu0 0.0
  %1174 = vmatpush1.msra.mxu0 0.0
  %1175 = vmatprep.subr.mxu0 0.0
  %1176 = vmatpush1.msra.mxu0 0.0
  %1177 = vmatprep.subr.mxu0 0.0
  %1178 = vmatpush1.msra.mxu0 0.0
  %1179 = vmatprep.subr.mxu0 0.0
  %1180 = vmatpush1.msra.mxu0 0.0
  %1181 = vmatprep.subr.mxu0 0.0
  %1182 = vmatpush1.msra.mxu0 0.0
  %1183 = vmatprep.subr.mxu0 0.0
  %1184 = vmatpush1.msra.mxu0 0.0
  %1185 = vmatprep.subr.mxu0 0.0
  %1186 = vmatpush1.msra.mxu0 0.0
  %1187 = vmatprep.subr.mxu0 0.0
  %1188 = vmatpush1.msra.mxu0 0.0
  %1189 = vmatprep.subr.mxu0 0.0
  %1190 = vmatpush1.msra.mxu0 0.0
  %1191 = vmatprep.subr.mxu0 0.0
  %1192 = vmatpush1.msra.mxu0 0.0
  %1193 = vmatprep.subr.mxu0 0.0
  %1194 = vmatpush1.msra.mxu0 0.0
  %1195 = vmatprep.subr.mxu0 0.0
  %1196 = vmatpush1.msra.mxu0 0.0
  %1197 = vmatprep.subr.mxu0 0.0
  %1198 = vmatpush1.msra.mxu0 0.0
  %1199 = vmatprep.subr.mxu0 0.0
  %1200 = vmatpush1.msra.mxu0 0.0
  %1201 = vmatprep.subr.mxu0 0.0
  %1202 = vmatpush1.msra.mxu0 0.0
  %1203 = vmatprep.subr.mxu0 0.0
  %1204 = vmatpush1.msra.mxu0 0.0
  %1205 = vmatprep.subr.mxu0 0.0
  %1206 = vmatpush1.msra.mxu0 0.0
  %1207 = vmatprep.mubr.f32.mxu0 0.0
  %1208 = vmatmul.mubr.f32.gmra.mrb[0].mxu0 %v61
  %v1209 = vpop.f32.mrb[0].mxu0
  %v1210 = vadd.f32 %v1141, %v1209
  %v1211 = vpop.f32.mrb[0].mxu0
  %1212 = vmatprep.mubr.f32.mxu0 0.0
  %1213 = vmatmul.mubr.f32.gmra.mrb[0].mxu0 %v64
  %v1214 = vpop.f32.mrb[0].mxu0
  %v1215 = vadd.f32 %v1141, %v1214
  %v1216 = vpop.f32.mrb[0].mxu0
  %1217 = vdwg.mxu0
  %s1218 = scalar_lea.vmem %s3, 64
  %v1219 = vld [vmem:[%s1218] sm:$0xff]
  %v1220 = vld [vmem:[%s1218 + $0x8] sm:$0xff]
  %v1221 = vld [vmem:[%s1218 + $0x10] sm:$0xff]
  %v1222 = vld [vmem:[%s1218 + $0x18] sm:$0xff]
  %s1223 = scalar_lea.vmem %s5, 6
  %v1224 = vld [vmem:[%s1223] sm:$0x1]
  %v1226 = vlaneseq
  %v1227 = vshrl.u32 %v1226, 7
  %v1228 = vsub.s32 0, %v1227
  %v1229 = vrot.slane %v1224, %v1228
  %1231 = vmatprep.subr.mxu0 0.0
  %1232 = vmatpush1.msra.mxu0 %v1219
  %1233 = vmatprep.subr.mxu0 0.0
  %1234 = vmatpush1.msra.mxu0 %v1220
  %1235 = vmatprep.subr.mxu0 0.0
  %1236 = vmatpush1.msra.mxu0 %v1221
  %1237 = vmatprep.subr.mxu0 0.0
  %1238 = vmatpush1.msra.mxu0 %v1222
  %1239 = vmatprep.subr.mxu0 0.0
  %1240 = vmatpush1.msra.mxu0 0.0
  %1241 = vmatprep.subr.mxu0 0.0
  %1242 = vmatpush1.msra.mxu0 0.0
  %1243 = vmatprep.subr.mxu0 0.0
  %1244 = vmatpush1.msra.mxu0 0.0
  %1245 = vmatprep.subr.mxu0 0.0
  %1246 = vmatpush1.msra.mxu0 0.0
  %1247 = vmatprep.subr.mxu0 0.0
  %1248 = vmatpush1.msra.mxu0 0.0
  %1249 = vmatprep.subr.mxu0 0.0
  %1250 = vmatpush1.msra.mxu0 0.0
  %1251 = vmatprep.subr.mxu0 0.0
  %1252 = vmatpush1.msra.mxu0 0.0
  %1253 = vmatprep.subr.mxu0 0.0
  %1254 = vmatpush1.msra.mxu0 0.0
  %1255 = vmatprep.subr.mxu0 0.0
  %1256 = vmatpush1.msra.mxu0 0.0
  %1257 = vmatprep.subr.mxu0 0.0
  %1258 = vmatpush1.msra.mxu0 0.0
  %1259 = vmatprep.subr.mxu0 0.0
  %1260 = vmatpush1.msra.mxu0 0.0
  %1261 = vmatprep.subr.mxu0 0.0
  %1262 = vmatpush1.msra.mxu0 0.0
  %1263 = vmatprep.subr.mxu0 0.0
  %1264 = vmatpush1.msra.mxu0 0.0
  %1265 = vmatprep.subr.mxu0 0.0
  %1266 = vmatpush1.msra.mxu0 0.0
  %1267 = vmatprep.subr.mxu0 0.0
  %1268 = vmatpush1.msra.mxu0 0.0
  %1269 = vmatprep.subr.mxu0 0.0
  %1270 = vmatpush1.msra.mxu0 0.0
  %1271 = vmatprep.subr.mxu0 0.0
  %1272 = vmatpush1.msra.mxu0 0.0
  %1273 = vmatprep.subr.mxu0 0.0
  %1274 = vmatpush1.msra.mxu0 0.0
  %1275 = vmatprep.subr.mxu0 0.0
  %1276 = vmatpush1.msra.mxu0 0.0
  %1277 = vmatprep.subr.mxu0 0.0
  %1278 = vmatpush1.msra.mxu0 0.0
  %1279 = vmatprep.subr.mxu0 0.0
  %1280 = vmatpush1.msra.mxu0 0.0
  %1281 = vmatprep.subr.mxu0 0.0
  %1282 = vmatpush1.msra.mxu0 0.0
  %1283 = vmatprep.subr.mxu0 0.0
  %1284 = vmatpush1.msra.mxu0 0.0
  %1285 = vmatprep.subr.mxu0 0.0
  %1286 = vmatpush1.msra.mxu0 0.0
  %1287 = vmatprep.subr.mxu0 0.0
  %1288 = vmatpush1.msra.mxu0 0.0
  %1289 = vmatprep.subr.mxu0 0.0
  %1290 = vmatpush1.msra.mxu0 0.0
  %1291 = vmatprep.subr.mxu0 0.0
  %1292 = vmatpush1.msra.mxu0 0.0
  %1293 = vmatprep.subr.mxu0 0.0
  %1294 = vmatpush1.msra.mxu0 0.0
  %1295 = vmatprep.mubr.f32.mxu0 0.0
  %1296 = vmatmul.mubr.f32.gmra.mrb[0].mxu0 %v61
  %v1297 = vpop.f32.mrb[0].mxu0
  %v1298 = vadd.f32 %v1229, %v1297
  %v1299 = vpop.f32.mrb[0].mxu0
  %1300 = vmatprep.mubr.f32.mxu0 0.0
  %1301 = vmatmul.mubr.f32.gmra.mrb[0].mxu0 %v64
  %v1302 = vpop.f32.mrb[0].mxu0
  %v1303 = vadd.f32 %v1229, %v1302
  %v1304 = vpop.f32.mrb[0].mxu0
  %1305 = vdwg.mxu0
  %s1306 = scalar_lea.vmem %s4, 64
  %v1307 = vld [vmem:[%s1306] sm:$0xff]
  %v1308 = vld [vmem:[%s1306 + $0x8] sm:$0xff]
  %v1309 = vld [vmem:[%s1306 + $0x10] sm:$0xff]
  %v1310 = vld [vmem:[%s1306 + $0x18] sm:$0xff]
  %s1311 = scalar_lea.vmem %s5, 10
  %v1312 = vld [vmem:[%s1311] sm:$0x1]
  %v1314 = vlaneseq
  %v1315 = vshrl.u32 %v1314, 7
  %v1316 = vsub.s32 0, %v1315
  %v1317 = vrot.slane %v1312, %v1316
  %1319 = vmatprep.subr.mxu0 0.0
  %1320 = vmatpush1.msra.mxu0 %v1307
  %1321 = vmatprep.subr.mxu0 0.0
  %1322 = vmatpush1.msra.mxu0 %v1308
  %1323 = vmatprep.subr.mxu0 0.0
  %1324 = vmatpush1.msra.mxu0 %v1309
  %1325 = vmatprep.subr.mxu0 0.0
  %1326 = vmatpush1.msra.mxu0 %v1310
  %1327 = vmatprep.subr.mxu0 0.0
  %1328 = vmatpush1.msra.mxu0 0.0
  %1329 = vmatprep.subr.mxu0 0.0
  %1330 = vmatpush1.msra.mxu0 0.0
  %1331 = vmatprep.subr.mxu0 0.0
  %1332 = vmatpush1.msra.mxu0 0.0
  %1333 = vmatprep.subr.mxu0 0.0
  %1334 = vmatpush1.msra.mxu0 0.0
  %1335 = vmatprep.subr.mxu0 0.0
  %1336 = vmatpush1.msra.mxu0 0.0
  %1337 = vmatprep.subr.mxu0 0.0
  %1338 = vmatpush1.msra.mxu0 0.0
  %1339 = vmatprep.subr.mxu0 0.0
  %1340 = vmatpush1.msra.mxu0 0.0
  %1341 = vmatprep.subr.mxu0 0.0
  %1342 = vmatpush1.msra.mxu0 0.0
  %1343 = vmatprep.subr.mxu0 0.0
  %1344 = vmatpush1.msra.mxu0 0.0
  %1345 = vmatprep.subr.mxu0 0.0
  %1346 = vmatpush1.msra.mxu0 0.0
  %1347 = vmatprep.subr.mxu0 0.0
  %1348 = vmatpush1.msra.mxu0 0.0
  %1349 = vmatprep.subr.mxu0 0.0
  %1350 = vmatpush1.msra.mxu0 0.0
  %1351 = vmatprep.subr.mxu0 0.0
  %1352 = vmatpush1.msra.mxu0 0.0
  %1353 = vmatprep.subr.mxu0 0.0
  %1354 = vmatpush1.msra.mxu0 0.0
  %1355 = vmatprep.subr.mxu0 0.0
  %1356 = vmatpush1.msra.mxu0 0.0
  %1357 = vmatprep.subr.mxu0 0.0
  %1358 = vmatpush1.msra.mxu0 0.0
  %1359 = vmatprep.subr.mxu0 0.0
  %1360 = vmatpush1.msra.mxu0 0.0
  %1361 = vmatprep.subr.mxu0 0.0
  %1362 = vmatpush1.msra.mxu0 0.0
  %1363 = vmatprep.subr.mxu0 0.0
  %1364 = vmatpush1.msra.mxu0 0.0
  %1365 = vmatprep.subr.mxu0 0.0
  %1366 = vmatpush1.msra.mxu0 0.0
  %1367 = vmatprep.subr.mxu0 0.0
  %1368 = vmatpush1.msra.mxu0 0.0
  %1369 = vmatprep.subr.mxu0 0.0
  %1370 = vmatpush1.msra.mxu0 0.0
  %1371 = vmatprep.subr.mxu0 0.0
  %1372 = vmatpush1.msra.mxu0 0.0
  %1373 = vmatprep.subr.mxu0 0.0
  %1374 = vmatpush1.msra.mxu0 0.0
  %1375 = vmatprep.subr.mxu0 0.0
  %1376 = vmatpush1.msra.mxu0 0.0
  %1377 = vmatprep.subr.mxu0 0.0
  %1378 = vmatpush1.msra.mxu0 0.0
  %1379 = vmatprep.subr.mxu0 0.0
  %1380 = vmatpush1.msra.mxu0 0.0
  %1381 = vmatprep.subr.mxu0 0.0
  %1382 = vmatpush1.msra.mxu0 0.0
  %1383 = vmatprep.mubr.f32.mxu0 0.0
  %1384 = vmatmul.mubr.f32.gmra.mrb[0].mxu0 %v61
  %v1385 = vpop.f32.mrb[0].mxu0
  %v1386 = vadd.f32 %v1317, %v1385
  %v1387 = vpop.f32.mrb[0].mxu0
  %1388 = vmatprep.mubr.f32.mxu0 0.0
  %1389 = vmatmul.mubr.f32.gmra.mrb[0].mxu0 %v64
  %v1390 = vpop.f32.mrb[0].mxu0
  %v1391 = vadd.f32 %v1317, %v1390
  %v1392 = vpop.f32.mrb[0].mxu0
  %1393 = vdwg.mxu0
  %v1395 = vsel %vm315, %v1210, 0
  %v1398 = vsel %vm315, %v1215, 0
  %v1401 = vsel %vm315, %v1298, 0
  %v1404 = vsel %vm315, %v1303, 0
  %1406 = vmatprep.subr.mxu0 0.0
  %1407 = vmatpush1.xpose.msra.mxu0 %v1401
  %1408 = vmatprep.subr.mxu0 0.0
  %1409 = vmatpush1.xpose.msra.mxu0 %v1404
  %1410 = vmatprep.subr.mxu0 0.0
  %1411 = vmatpush1.xpose.msra.mxu0 0.0
  %1412 = vmatprep.subr.mxu0 0.0
  %1413 = vmatpush1.xpose.msra.mxu0 0.0
  %1414 = vmatprep.subr.mxu0 0.0
  %1415 = vmatpush1.xpose.msra.mxu0 0.0
  %1416 = vmatprep.subr.mxu0 0.0
  %1417 = vmatpush1.xpose.msra.mxu0 0.0
  %1418 = vmatprep.subr.mxu0 0.0
  %1419 = vmatpush1.xpose.msra.mxu0 0.0
  %1420 = vmatprep.subr.mxu0 0.0
  %1421 = vmatpush1.xpose.msra.mxu0 0.0
  %1422 = vmatprep.subr.mxu0 0.0
  %1423 = vmatpush1.xpose.msra.mxu0 0.0
  %1424 = vmatprep.subr.mxu0 0.0
  %1425 = vmatpush1.xpose.msra.mxu0 0.0
  %1426 = vmatprep.subr.mxu0 0.0
  %1427 = vmatpush1.xpose.msra.mxu0 0.0
  %1428 = vmatprep.subr.mxu0 0.0
  %1429 = vmatpush1.xpose.msra.mxu0 0.0
  %1430 = vmatprep.subr.mxu0 0.0
  %1431 = vmatpush1.xpose.msra.mxu0 0.0
  %1432 = vmatprep.subr.mxu0 0.0
  %1433 = vmatpush1.xpose.msra.mxu0 0.0
  %1434 = vmatprep.subr.mxu0 0.0
  %1435 = vmatpush1.xpose.msra.mxu0 0.0
  %1436 = vmatprep.subr.mxu0 0.0
  %1437 = vmatpush1.xpose.msra.mxu0 0.0
  %1438 = vmatprep.subr.mxu0 0.0
  %1439 = vmatpush1.xpose.msra.mxu0 0.0
  %1440 = vmatprep.subr.mxu0 0.0
  %1441 = vmatpush1.xpose.msra.mxu0 0.0
  %1442 = vmatprep.subr.mxu0 0.0
  %1443 = vmatpush1.xpose.msra.mxu0 0.0
  %1444 = vmatprep.subr.mxu0 0.0
  %1445 = vmatpush1.xpose.msra.mxu0 0.0
  %1446 = vmatprep.subr.mxu0 0.0
  %1447 = vmatpush1.xpose.msra.mxu0 0.0
  %1448 = vmatprep.subr.mxu0 0.0
  %1449 = vmatpush1.xpose.msra.mxu0 0.0
  %1450 = vmatprep.subr.mxu0 0.0
  %1451 = vmatpush1.xpose.msra.mxu0 0.0
  %1452 = vmatprep.subr.mxu0 0.0
  %1453 = vmatpush1.xpose.msra.mxu0 0.0
  %1454 = vmatprep.subr.mxu0 0.0
  %1455 = vmatpush1.xpose.msra.mxu0 0.0
  %1456 = vmatprep.subr.mxu0 0.0
  %1457 = vmatpush1.xpose.msra.mxu0 0.0
  %1458 = vmatprep.subr.mxu0 0.0
  %1459 = vmatpush1.xpose.msra.mxu0 0.0
  %1460 = vmatprep.subr.mxu0 0.0
  %1461 = vmatpush1.xpose.msra.mxu0 0.0
  %1462 = vmatprep.subr.mxu0 0.0
  %1463 = vmatpush1.xpose.msra.mxu0 0.0
  %1464 = vmatprep.subr.mxu0 0.0
  %1465 = vmatpush1.xpose.msra.mxu0 0.0
  %1466 = vmatprep.subr.mxu0 0.0
  %1467 = vmatpush1.xpose.msra.mxu0 0.0
  %1468 = vmatprep.subr.mxu0 0.0
  %1469 = vmatpush1.xpose.msra.mxu0 0.0
  %1470 = vmatprep.mubr.f32.mxu0 0.0
  %1471 = vmatmul.mubr.f32.gmra.mrb[0].mxu0 %v1395
  %v1472 = vpop.f32.mrb[0].mxu0
  %v1473 = vadd.f32 %v46, %v1472
  %v1474 = vpop.f32.mrb[0].mxu0
  %1475 = vmatprep.mubr.f32.mxu0 0.0
  %1476 = vmatmul.mubr.f32.gmra.mrb[0].mxu0 %v1398
  %v1477 = vpop.f32.mrb[0].mxu0
  %v1478 = vadd.f32 %v47, %v1477
  %v1479 = vpop.f32.mrb[0].mxu0
  %1480 = vdwg.mxu0
  %v1481 = vsel %vm403, %v1473, -inf
  %1482 = vmax.xlane.f32.xlu0 %v1481
  %v1483 = vpop.xlane.xlu0 %1482
  %v1484 = vsel %vm403, %v1478, -inf
  %1485 = vmax.xlane.f32.xlu0 %v1484
  %v1486 = vpop.xlane.xlu0 %1485
  %v1487 = vsub.f32 %v1473, %v1483
  %v1488 = vsub.f32 %v1478, %v1486
  %v1489 = vmul.f32 %v1487, 1.442695
  %v1490 = vpow.pop %v1489
  %v1491 = vmul.f32 %v1488, 1.442695
  %v1492 = vpow.pop %v1491
  %v1493 = vsel %vm403, %v1490, 0.0
  %1494 = vadd.xlane.f32.xlu0 %v1493
  %v1495 = vpop.xlane.xlu0 %1494
  %v1496 = vsel %vm403, %v1492, 0.0
  %1497 = vadd.xlane.f32.xlu0 %v1496
  %v1498 = vpop.xlane.xlu0 %1497
  %v1499 = vrcp.pop %v1495
  %v1500 = vmul.f32 1.0, %v1499
  %v1501 = vrcp.pop %v1498
  %v1502 = vmul.f32 1.0, %v1501
  %v1504 = vsel %vm403, %v1490, 0
  %v1507 = vsel %vm403, %v1492, 0
  %1509 = vmatprep.subr.mxu0 0.0
  %1510 = vmatpush1.msra.mxu0 %v1386
  %1511 = vmatprep.subr.mxu0 0.0
  %1512 = vmatpush1.msra.mxu0 %v1391
  %1513 = vmatprep.subr.mxu0 0.0
  %1514 = vmatpush1.msra.mxu0 0.0
  %1515 = vmatprep.subr.mxu0 0.0
  %1516 = vmatpush1.msra.mxu0 0.0
  %1517 = vmatprep.subr.mxu0 0.0
  %1518 = vmatpush1.msra.mxu0 0.0
  %1519 = vmatprep.subr.mxu0 0.0
  %1520 = vmatpush1.msra.mxu0 0.0
  %1521 = vmatprep.subr.mxu0 0.0
  %1522 = vmatpush1.msra.mxu0 0.0
  %1523 = vmatprep.subr.mxu0 0.0
  %1524 = vmatpush1.msra.mxu0 0.0
  %1525 = vmatprep.subr.mxu0 0.0
  %1526 = vmatpush1.msra.mxu0 0.0
  %1527 = vmatprep.subr.mxu0 0.0
  %1528 = vmatpush1.msra.mxu0 0.0
  %1529 = vmatprep.subr.mxu0 0.0
  %1530 = vmatpush1.msra.mxu0 0.0
  %1531 = vmatprep.subr.mxu0 0.0
  %1532 = vmatpush1.msra.mxu0 0.0
  %1533 = vmatprep.subr.mxu0 0.0
  %1534 = vmatpush1.msra.mxu0 0.0
  %1535 = vmatprep.subr.mxu0 0.0
  %1536 = vmatpush1.msra.mxu0 0.0
  %1537 = vmatprep.subr.mxu0 0.0
  %1538 = vmatpush1.msra.mxu0 0.0
  %1539 = vmatprep.subr.mxu0 0.0
  %1540 = vmatpush1.msra.mxu0 0.0
  %1541 = vmatprep.subr.mxu0 0.0
  %1542 = vmatpush1.msra.mxu0 0.0
  %1543 = vmatprep.subr.mxu0 0.0
  %1544 = vmatpush1.msra.mxu0 0.0
  %1545 = vmatprep.subr.mxu0 0.0
  %1546 = vmatpush1.msra.mxu0 0.0
  %1547 = vmatprep.subr.mxu0 0.0
  %1548 = vmatpush1.msra.mxu0 0.0
  %1549 = vmatprep.subr.mxu0 0.0
  %1550 = vmatpush1.msra.mxu0 0.0
  %1551 = vmatprep.subr.mxu0 0.0
  %1552 = vmatpush1.msra.mxu0 0.0
  %1553 = vmatprep.subr.mxu0 0.0
  %1554 = vmatpush1.msra.mxu0 0.0
  %1555 = vmatprep.subr.mxu0 0.0
  %1556 = vmatpush1.msra.mxu0 0.0
  %1557 = vmatprep.subr.mxu0 0.0
  %1558 = vmatpush1.msra.mxu0 0.0
  %1559 = vmatprep.subr.mxu0 0.0
  %1560 = vmatpush1.msra.mxu0 0.0
  %1561 = vmatprep.subr.mxu0 0.0
  %1562 = vmatpush1.msra.mxu0 0.0
  %1563 = vmatprep.subr.mxu0 0.0
  %1564 = vmatpush1.msra.mxu0 0.0
  %1565 = vmatprep.subr.mxu0 0.0
  %1566 = vmatpush1.msra.mxu0 0.0
  %1567 = vmatprep.subr.mxu0 0.0
  %1568 = vmatpush1.msra.mxu0 0.0
  %1569 = vmatprep.subr.mxu0 0.0
  %1570 = vmatpush1.msra.mxu0 0.0
  %1571 = vmatprep.subr.mxu0 0.0
  %1572 = vmatpush1.msra.mxu0 0.0
  %1573 = vmatprep.mubr.f32.mxu0 0.0
  %1574 = vmatmul.mubr.f32.gmra.mrb[0].mxu0 %v1504
  %v1575 = vpop.f32.mrb[0].mxu0
  %v1576 = vadd.f32 0.0, %v1575
  %v1577 = vpop.f32.mrb[0].mxu0
  %1578 = vmatprep.mubr.f32.mxu0 0.0
  %1579 = vmatmul.mubr.f32.gmra.mrb[0].mxu0 %v1507
  %v1580 = vpop.f32.mrb[0].mxu0
  %v1581 = vadd.f32 0.0, %v1580
  %v1582 = vpop.f32.mrb[0].mxu0
  %1583 = vdwg.mxu0
  %v1584 = vmul.f32 %v1576, %v1500
  %v1585 = vmul.f32 %v1581, %v1502
  %s1586 = scalar_lea.vmem %s6, 16
  %v1587 = vld [vmem:[%s1586] sm:$0xff]
  %v1589 = vsel %vm315, %v1584, 0
  %v1592 = vsel %vm315, %v1585, 0
  %1594 = vmatprep.subr.mxu0 0.0
  %1595 = vmatpush1.msra.mxu0 %v1587
  %1596 = vmatprep.subr.mxu0 0.0
  %1597 = vmatpush1.msra.mxu0 0.0
  %1598 = vmatprep.subr.mxu0 0.0
  %1599 = vmatpush1.msra.mxu0 0.0
  %1600 = vmatprep.subr.mxu0 0.0
  %1601 = vmatpush1.msra.mxu0 0.0
  %1602 = vmatprep.subr.mxu0 0.0
  %1603 = vmatpush1.msra.mxu0 0.0
  %1604 = vmatprep.subr.mxu0 0.0
  %1605 = vmatpush1.msra.mxu0 0.0
  %1606 = vmatprep.subr.mxu0 0.0
  %1607 = vmatpush1.msra.mxu0 0.0
  %1608 = vmatprep.subr.mxu0 0.0
  %1609 = vmatpush1.msra.mxu0 0.0
  %1610 = vmatprep.subr.mxu0 0.0
  %1611 = vmatpush1.msra.mxu0 0.0
  %1612 = vmatprep.subr.mxu0 0.0
  %1613 = vmatpush1.msra.mxu0 0.0
  %1614 = vmatprep.subr.mxu0 0.0
  %1615 = vmatpush1.msra.mxu0 0.0
  %1616 = vmatprep.subr.mxu0 0.0
  %1617 = vmatpush1.msra.mxu0 0.0
  %1618 = vmatprep.subr.mxu0 0.0
  %1619 = vmatpush1.msra.mxu0 0.0
  %1620 = vmatprep.subr.mxu0 0.0
  %1621 = vmatpush1.msra.mxu0 0.0
  %1622 = vmatprep.subr.mxu0 0.0
  %1623 = vmatpush1.msra.mxu0 0.0
  %1624 = vmatprep.subr.mxu0 0.0
  %1625 = vmatpush1.msra.mxu0 0.0
  %1626 = vmatprep.subr.mxu0 0.0
  %1627 = vmatpush1.msra.mxu0 0.0
  %1628 = vmatprep.subr.mxu0 0.0
  %1629 = vmatpush1.msra.mxu0 0.0
  %1630 = vmatprep.subr.mxu0 0.0
  %1631 = vmatpush1.msra.mxu0 0.0
  %1632 = vmatprep.subr.mxu0 0.0
  %1633 = vmatpush1.msra.mxu0 0.0
  %1634 = vmatprep.subr.mxu0 0.0
  %1635 = vmatpush1.msra.mxu0 0.0
  %1636 = vmatprep.subr.mxu0 0.0
  %1637 = vmatpush1.msra.mxu0 0.0
  %1638 = vmatprep.subr.mxu0 0.0
  %1639 = vmatpush1.msra.mxu0 0.0
  %1640 = vmatprep.subr.mxu0 0.0
  %1641 = vmatpush1.msra.mxu0 0.0
  %1642 = vmatprep.subr.mxu0 0.0
  %1643 = vmatpush1.msra.mxu0 0.0
  %1644 = vmatprep.subr.mxu0 0.0
  %1645 = vmatpush1.msra.mxu0 0.0
  %1646 = vmatprep.subr.mxu0 0.0
  %1647 = vmatpush1.msra.mxu0 0.0
  %1648 = vmatprep.subr.mxu0 0.0
  %1649 = vmatpush1.msra.mxu0 0.0
  %1650 = vmatprep.subr.mxu0 0.0
  %1651 = vmatpush1.msra.mxu0 0.0
  %1652 = vmatprep.subr.mxu0 0.0
  %1653 = vmatpush1.msra.mxu0 0.0
  %1654 = vmatprep.subr.mxu0 0.0
  %1655 = vmatpush1.msra.mxu0 0.0
  %1656 = vmatprep.subr.mxu0 0.0
  %1657 = vmatpush1.msra.mxu0 0.0
  %1658 = vmatprep.mubr.f32.mxu0 0.0
  %1659 = vmatmul.mubr.f32.gmra.mrb[0].mxu0 %v1589
  %v1660 = vpop.f32.mrb[0].mxu0
  %v1661 = vadd.f32 0.0, %v1660
  %v1662 = vpop.f32.mrb[0].mxu0
  %1663 = vmatprep.mubr.f32.mxu0 0.0
  %1664 = vmatmul.mubr.f32.gmra.mrb[0].mxu0 %v1592
  %v1665 = vpop.f32.mrb[0].mxu0
  %v1666 = vadd.f32 0.0, %v1665
  %v1667 = vpop.f32.mrb[0].mxu0
  %1668 = vdwg.mxu0
  %v1669 = vadd.f32 %v1122, %v1661
  %v1670 = vadd.f32 %v1127, %v1666
  %s1671 = scalar_lea.vmem %s2, 96
  %v1672 = vld [vmem:[%s1671] sm:$0xff]
  %v1673 = vld [vmem:[%s1671 + $0x8] sm:$0xff]
  %v1674 = vld [vmem:[%s1671 + $0x10] sm:$0xff]
  %v1675 = vld [vmem:[%s1671 + $0x18] sm:$0xff]
  %s1676 = scalar_lea.vmem %s5, 3
  %v1677 = vld [vmem:[%s1676] sm:$0x1]
  %v1679 = vlaneseq
  %v1680 = vshrl.u32 %v1679, 7
  %v1681 = vsub.s32 0, %v1680
  %v1682 = vrot.slane %v1677, %v1681
  %1684 = vmatprep.subr.mxu0 0.0
  %1685 = vmatpush1.msra.mxu0 %v1672
  %1686 = vmatprep.subr.mxu0 0.0
  %1687 = vmatpush1.msra.mxu0 %v1673
  %1688 = vmatprep.subr.mxu0 0.0
  %1689 = vmatpush1.msra.mxu0 %v1674
  %1690 = vmatprep.subr.mxu0 0.0
  %1691 = vmatpush1.msra.mxu0 %v1675
  %1692 = vmatprep.subr.mxu0 0.0
  %1693 = vmatpush1.msra.mxu0 0.0
  %1694 = vmatprep.subr.mxu0 0.0
  %1695 = vmatpush1.msra.mxu0 0.0
  %1696 = vmatprep.subr.mxu0 0.0
  %1697 = vmatpush1.msra.mxu0 0.0
  %1698 = vmatprep.subr.mxu0 0.0
  %1699 = vmatpush1.msra.mxu0 0.0
  %1700 = vmatprep.subr.mxu0 0.0
  %1701 = vmatpush1.msra.mxu0 0.0
  %1702 = vmatprep.subr.mxu0 0.0
  %1703 = vmatpush1.msra.mxu0 0.0
  %1704 = vmatprep.subr.mxu0 0.0
  %1705 = vmatpush1.msra.mxu0 0.0
  %1706 = vmatprep.subr.mxu0 0.0
  %1707 = vmatpush1.msra.mxu0 0.0
  %1708 = vmatprep.subr.mxu0 0.0
  %1709 = vmatpush1.msra.mxu0 0.0
  %1710 = vmatprep.subr.mxu0 0.0
  %1711 = vmatpush1.msra.mxu0 0.0
  %1712 = vmatprep.subr.mxu0 0.0
  %1713 = vmatpush1.msra.mxu0 0.0
  %1714 = vmatprep.subr.mxu0 0.0
  %1715 = vmatpush1.msra.mxu0 0.0
  %1716 = vmatprep.subr.mxu0 0.0
  %1717 = vmatpush1.msra.mxu0 0.0
  %1718 = vmatprep.subr.mxu0 0.0
  %1719 = vmatpush1.msra.mxu0 0.0
  %1720 = vmatprep.subr.mxu0 0.0
  %1721 = vmatpush1.msra.mxu0 0.0
  %1722 = vmatprep.subr.mxu0 0.0
  %1723 = vmatpush1.msra.mxu0 0.0
  %1724 = vmatprep.subr.mxu0 0.0
  %1725 = vmatpush1.msra.mxu0 0.0
  %1726 = vmatprep.subr.mxu0 0.0
  %1727 = vmatpush1.msra.mxu0 0.0
  %1728 = vmatprep.subr.mxu0 0.0
  %1729 = vmatpush1.msra.mxu0 0.0
  %1730 = vmatprep.subr.mxu0 0.0
  %1731 = vmatpush1.msra.mxu0 0.0
  %1732 = vmatprep.subr.mxu0 0.0
  %1733 = vmatpush1.msra.mxu0 0.0
  %1734 = vmatprep.subr.mxu0 0.0
  %1735 = vmatpush1.msra.mxu0 0.0
  %1736 = vmatprep.subr.mxu0 0.0
  %1737 = vmatpush1.msra.mxu0 0.0
  %1738 = vmatprep.subr.mxu0 0.0
  %1739 = vmatpush1.msra.mxu0 0.0
  %1740 = vmatprep.subr.mxu0 0.0
  %1741 = vmatpush1.msra.mxu0 0.0
  %1742 = vmatprep.subr.mxu0 0.0
  %1743 = vmatpush1.msra.mxu0 0.0
  %1744 = vmatprep.subr.mxu0 0.0
  %1745 = vmatpush1.msra.mxu0 0.0
  %1746 = vmatprep.subr.mxu0 0.0
  %1747 = vmatpush1.msra.mxu0 0.0
  %1748 = vmatprep.mubr.f32.mxu0 0.0
  %1749 = vmatmul.mubr.f32.gmra.mrb[0].mxu0 %v61
  %v1750 = vpop.f32.mrb[0].mxu0
  %v1751 = vadd.f32 %v1682, %v1750
  %v1752 = vpop.f32.mrb[0].mxu0
  %1753 = vmatprep.mubr.f32.mxu0 0.0
  %1754 = vmatmul.mubr.f32.gmra.mrb[0].mxu0 %v64
  %v1755 = vpop.f32.mrb[0].mxu0
  %v1756 = vadd.f32 %v1682, %v1755
  %v1757 = vpop.f32.mrb[0].mxu0
  %1758 = vdwg.mxu0
  %s1759 = scalar_lea.vmem %s3, 96
  %v1760 = vld [vmem:[%s1759] sm:$0xff]
  %v1761 = vld [vmem:[%s1759 + $0x8] sm:$0xff]
  %v1762 = vld [vmem:[%s1759 + $0x10] sm:$0xff]
  %v1763 = vld [vmem:[%s1759 + $0x18] sm:$0xff]
  %s1764 = scalar_lea.vmem %s5, 7
  %v1765 = vld [vmem:[%s1764] sm:$0x1]
  %v1767 = vlaneseq
  %v1768 = vshrl.u32 %v1767, 7
  %v1769 = vsub.s32 0, %v1768
  %v1770 = vrot.slane %v1765, %v1769
  %1772 = vmatprep.subr.mxu0 0.0
  %1773 = vmatpush1.msra.mxu0 %v1760
  %1774 = vmatprep.subr.mxu0 0.0
  %1775 = vmatpush1.msra.mxu0 %v1761
  %1776 = vmatprep.subr.mxu0 0.0
  %1777 = vmatpush1.msra.mxu0 %v1762
  %1778 = vmatprep.subr.mxu0 0.0
  %1779 = vmatpush1.msra.mxu0 %v1763
  %1780 = vmatprep.subr.mxu0 0.0
  %1781 = vmatpush1.msra.mxu0 0.0
  %1782 = vmatprep.subr.mxu0 0.0
  %1783 = vmatpush1.msra.mxu0 0.0
  %1784 = vmatprep.subr.mxu0 0.0
  %1785 = vmatpush1.msra.mxu0 0.0
  %1786 = vmatprep.subr.mxu0 0.0
  %1787 = vmatpush1.msra.mxu0 0.0
  %1788 = vmatprep.subr.mxu0 0.0
  %1789 = vmatpush1.msra.mxu0 0.0
  %1790 = vmatprep.subr.mxu0 0.0
  %1791 = vmatpush1.msra.mxu0 0.0
  %1792 = vmatprep.subr.mxu0 0.0
  %1793 = vmatpush1.msra.mxu0 0.0
  %1794 = vmatprep.subr.mxu0 0.0
  %1795 = vmatpush1.msra.mxu0 0.0
  %1796 = vmatprep.subr.mxu0 0.0
  %1797 = vmatpush1.msra.mxu0 0.0
  %1798 = vmatprep.subr.mxu0 0.0
  %1799 = vmatpush1.msra.mxu0 0.0
  %1800 = vmatprep.subr.mxu0 0.0
  %1801 = vmatpush1.msra.mxu0 0.0
  %1802 = vmatprep.subr.mxu0 0.0
  %1803 = vmatpush1.msra.mxu0 0.0
  %1804 = vmatprep.subr.mxu0 0.0
  %1805 = vmatpush1.msra.mxu0 0.0
  %1806 = vmatprep.subr.mxu0 0.0
  %1807 = vmatpush1.msra.mxu0 0.0
  %1808 = vmatprep.subr.mxu0 0.0
  %1809 = vmatpush1.msra.mxu0 0.0
  %1810 = vmatprep.subr.mxu0 0.0
  %1811 = vmatpush1.msra.mxu0 0.0
  %1812 = vmatprep.subr.mxu0 0.0
  %1813 = vmatpush1.msra.mxu0 0.0
  %1814 = vmatprep.subr.mxu0 0.0
  %1815 = vmatpush1.msra.mxu0 0.0
  %1816 = vmatprep.subr.mxu0 0.0
  %1817 = vmatpush1.msra.mxu0 0.0
  %1818 = vmatprep.subr.mxu0 0.0
  %1819 = vmatpush1.msra.mxu0 0.0
  %1820 = vmatprep.subr.mxu0 0.0
  %1821 = vmatpush1.msra.mxu0 0.0
  %1822 = vmatprep.subr.mxu0 0.0
  %1823 = vmatpush1.msra.mxu0 0.0
  %1824 = vmatprep.subr.mxu0 0.0
  %1825 = vmatpush1.msra.mxu0 0.0
  %1826 = vmatprep.subr.mxu0 0.0
  %1827 = vmatpush1.msra.mxu0 0.0
  %1828 = vmatprep.subr.mxu0 0.0
  %1829 = vmatpush1.msra.mxu0 0.0
  %1830 = vmatprep.subr.mxu0 0.0
  %1831 = vmatpush1.msra.mxu0 0.0
  %1832 = vmatprep.subr.mxu0 0.0
  %1833 = vmatpush1.msra.mxu0 0.0
  %1834 = vmatprep.subr.mxu0 0.0
  %1835 = vmatpush1.msra.mxu0 0.0
  %1836 = vmatprep.mubr.f32.mxu0 0.0
  %1837 = vmatmul.mubr.f32.gmra.mrb[0].mxu0 %v61
  %v1838 = vpop.f32.mrb[0].mxu0
  %v1839 = vadd.f32 %v1770, %v1838
  %v1840 = vpop.f32.mrb[0].mxu0
  %1841 = vmatprep.mubr.f32.mxu0 0.0
  %1842 = vmatmul.mubr.f32.gmra.mrb[0].mxu0 %v64
  %v1843 = vpop.f32.mrb[0].mxu0
  %v1844 = vadd.f32 %v1770, %v1843
  %v1845 = vpop.f32.mrb[0].mxu0
  %1846 = vdwg.mxu0
  %s1847 = scalar_lea.vmem %s4, 96
  %v1848 = vld [vmem:[%s1847] sm:$0xff]
  %v1849 = vld [vmem:[%s1847 + $0x8] sm:$0xff]
  %v1850 = vld [vmem:[%s1847 + $0x10] sm:$0xff]
  %v1851 = vld [vmem:[%s1847 + $0x18] sm:$0xff]
  %s1852 = scalar_lea.vmem %s5, 11
  %v1853 = vld [vmem:[%s1852] sm:$0x1]
  %v1855 = vlaneseq
  %v1856 = vshrl.u32 %v1855, 7
  %v1857 = vsub.s32 0, %v1856
  %v1858 = vrot.slane %v1853, %v1857
  %1860 = vmatprep.subr.mxu0 0.0
  %1861 = vmatpush1.msra.mxu0 %v1848
  %1862 = vmatprep.subr.mxu0 0.0
  %1863 = vmatpush1.msra.mxu0 %v1849
  %1864 = vmatprep.subr.mxu0 0.0
  %1865 = vmatpush1.msra.mxu0 %v1850
  %1866 = vmatprep.subr.mxu0 0.0
  %1867 = vmatpush1.msra.mxu0 %v1851
  %1868 = vmatprep.subr.mxu0 0.0
  %1869 = vmatpush1.msra.mxu0 0.0
  %1870 = vmatprep.subr.mxu0 0.0
  %1871 = vmatpush1.msra.mxu0 0.0
  %1872 = vmatprep.subr.mxu0 0.0
  %1873 = vmatpush1.msra.mxu0 0.0
  %1874 = vmatprep.subr.mxu0 0.0
  %1875 = vmatpush1.msra.mxu0 0.0
  %1876 = vmatprep.subr.mxu0 0.0
  %1877 = vmatpush1.msra.mxu0 0.0
  %1878 = vmatprep.subr.mxu0 0.0
  %1879 = vmatpush1.msra.mxu0 0.0
  %1880 = vmatprep.subr.mxu0 0.0
  %1881 = vmatpush1.msra.mxu0 0.0
  %1882 = vmatprep.subr.mxu0 0.0
  %1883 = vmatpush1.msra.mxu0 0.0
  %1884 = vmatprep.subr.mxu0 0.0
  %1885 = vmatpush1.msra.mxu0 0.0
  %1886 = vmatprep.subr.mxu0 0.0
  %1887 = vmatpush1.msra.mxu0 0.0
  %1888 = vmatprep.subr.mxu0 0.0
  %1889 = vmatpush1.msra.mxu0 0.0
  %1890 = vmatprep.subr.mxu0 0.0
  %1891 = vmatpush1.msra.mxu0 0.0
  %1892 = vmatprep.subr.mxu0 0.0
  %1893 = vmatpush1.msra.mxu0 0.0
  %1894 = vmatprep.subr.mxu0 0.0
  %1895 = vmatpush1.msra.mxu0 0.0
  %1896 = vmatprep.subr.mxu0 0.0
  %1897 = vmatpush1.msra.mxu0 0.0
  %1898 = vmatprep.subr.mxu0 0.0
  %1899 = vmatpush1.msra.mxu0 0.0
  %1900 = vmatprep.subr.mxu0 0.0
  %1901 = vmatpush1.msra.mxu0 0.0
  %1902 = vmatprep.subr.mxu0 0.0
  %1903 = vmatpush1.msra.mxu0 0.0
  %1904 = vmatprep.subr.mxu0 0.0
  %1905 = vmatpush1.msra.mxu0 0.0
  %1906 = vmatprep.subr.mxu0 0.0
  %1907 = vmatpush1.msra.mxu0 0.0
  %1908 = vmatprep.subr.mxu0 0.0
  %1909 = vmatpush1.msra.mxu0 0.0
  %1910 = vmatprep.subr.mxu0 0.0
  %1911 = vmatpush1.msra.mxu0 0.0
  %1912 = vmatprep.subr.mxu0 0.0
  %1913 = vmatpush1.msra.mxu0 0.0
  %1914 = vmatprep.subr.mxu0 0.0
  %1915 = vmatpush1.msra.mxu0 0.0
  %1916 = vmatprep.subr.mxu0 0.0
  %1917 = vmatpush1.msra.mxu0 0.0
  %1918 = vmatprep.subr.mxu0 0.0
  %1919 = vmatpush1.msra.mxu0 0.0
  %1920 = vmatprep.subr.mxu0 0.0
  %1921 = vmatpush1.msra.mxu0 0.0
  %1922 = vmatprep.subr.mxu0 0.0
  %1923 = vmatpush1.msra.mxu0 0.0
  %1924 = vmatprep.mubr.f32.mxu0 0.0
  %1925 = vmatmul.mubr.f32.gmra.mrb[0].mxu0 %v61
  %v1926 = vpop.f32.mrb[0].mxu0
  %v1927 = vadd.f32 %v1858, %v1926
  %v1928 = vpop.f32.mrb[0].mxu0
  %1929 = vmatprep.mubr.f32.mxu0 0.0
  %1930 = vmatmul.mubr.f32.gmra.mrb[0].mxu0 %v64
  %v1931 = vpop.f32.mrb[0].mxu0
  %v1932 = vadd.f32 %v1858, %v1931
  %v1933 = vpop.f32.mrb[0].mxu0
  %1934 = vdwg.mxu0
  %v1936 = vsel %vm315, %v1751, 0
  %v1939 = vsel %vm315, %v1756, 0
  %v1942 = vsel %vm315, %v1839, 0
  %v1945 = vsel %vm315, %v1844, 0
  %1947 = vmatprep.subr.mxu0 0.0
  %1948 = vmatpush1.xpose.msra.mxu0 %v1942
  %1949 = vmatprep.subr.mxu0 0.0
  %1950 = vmatpush1.xpose.msra.mxu0 %v1945
  %1951 = vmatprep.subr.mxu0 0.0
  %1952 = vmatpush1.xpose.msra.mxu0 0.0
  %1953 = vmatprep.subr.mxu0 0.0
  %1954 = vmatpush1.xpose.msra.mxu0 0.0
  %1955 = vmatprep.subr.mxu0 0.0
  %1956 = vmatpush1.xpose.msra.mxu0 0.0
  %1957 = vmatprep.subr.mxu0 0.0
  %1958 = vmatpush1.xpose.msra.mxu0 0.0
  %1959 = vmatprep.subr.mxu0 0.0
  %1960 = vmatpush1.xpose.msra.mxu0 0.0
  %1961 = vmatprep.subr.mxu0 0.0
  %1962 = vmatpush1.xpose.msra.mxu0 0.0
  %1963 = vmatprep.subr.mxu0 0.0
  %1964 = vmatpush1.xpose.msra.mxu0 0.0
  %1965 = vmatprep.subr.mxu0 0.0
  %1966 = vmatpush1.xpose.msra.mxu0 0.0
  %1967 = vmatprep.subr.mxu0 0.0
  %1968 = vmatpush1.xpose.msra.mxu0 0.0
  %1969 = vmatprep.subr.mxu0 0.0
  %1970 = vmatpush1.xpose.msra.mxu0 0.0
  %1971 = vmatprep.subr.mxu0 0.0
  %1972 = vmatpush1.xpose.msra.mxu0 0.0
  %1973 = vmatprep.subr.mxu0 0.0
  %1974 = vmatpush1.xpose.msra.mxu0 0.0
  %1975 = vmatprep.subr.mxu0 0.0
  %1976 = vmatpush1.xpose.msra.mxu0 0.0
  %1977 = vmatprep.subr.mxu0 0.0
  %1978 = vmatpush1.xpose.msra.mxu0 0.0
  %1979 = vmatprep.subr.mxu0 0.0
  %1980 = vmatpush1.xpose.msra.mxu0 0.0
  %1981 = vmatprep.subr.mxu0 0.0
  %1982 = vmatpush1.xpose.msra.mxu0 0.0
  %1983 = vmatprep.subr.mxu0 0.0
  %1984 = vmatpush1.xpose.msra.mxu0 0.0
  %1985 = vmatprep.subr.mxu0 0.0
  %1986 = vmatpush1.xpose.msra.mxu0 0.0
  %1987 = vmatprep.subr.mxu0 0.0
  %1988 = vmatpush1.xpose.msra.mxu0 0.0
  %1989 = vmatprep.subr.mxu0 0.0
  %1990 = vmatpush1.xpose.msra.mxu0 0.0
  %1991 = vmatprep.subr.mxu0 0.0
  %1992 = vmatpush1.xpose.msra.mxu0 0.0
  %1993 = vmatprep.subr.mxu0 0.0
  %1994 = vmatpush1.xpose.msra.mxu0 0.0
  %1995 = vmatprep.subr.mxu0 0.0
  %1996 = vmatpush1.xpose.msra.mxu0 0.0
  %1997 = vmatprep.subr.mxu0 0.0
  %1998 = vmatpush1.xpose.msra.mxu0 0.0
  %1999 = vmatprep.subr.mxu0 0.0
  %2000 = vmatpush1.xpose.msra.mxu0 0.0
  %2001 = vmatprep.subr.mxu0 0.0
  %2002 = vmatpush1.xpose.msra.mxu0 0.0
  %2003 = vmatprep.subr.mxu0 0.0
  %2004 = vmatpush1.xpose.msra.mxu0 0.0
  %2005 = vmatprep.subr.mxu0 0.0
  %2006 = vmatpush1.xpose.msra.mxu0 0.0
  %2007 = vmatprep.subr.mxu0 0.0
  %2008 = vmatpush1.xpose.msra.mxu0 0.0
  %2009 = vmatprep.subr.mxu0 0.0
  %2010 = vmatpush1.xpose.msra.mxu0 0.0
  %2011 = vmatprep.mubr.f32.mxu0 0.0
  %2012 = vmatmul.mubr.f32.gmra.mrb[0].mxu0 %v1936
  %v2013 = vpop.f32.mrb[0].mxu0
  %v2014 = vadd.f32 %v46, %v2013
  %v2015 = vpop.f32.mrb[0].mxu0
  %2016 = vmatprep.mubr.f32.mxu0 0.0
  %2017 = vmatmul.mubr.f32.gmra.mrb[0].mxu0 %v1939
  %v2018 = vpop.f32.mrb[0].mxu0
  %v2019 = vadd.f32 %v47, %v2018
  %v2020 = vpop.f32.mrb[0].mxu0
  %2021 = vdwg.mxu0
  %v2022 = vsel %vm403, %v2014, -inf
  %2023 = vmax.xlane.f32.xlu0 %v2022
  %v2024 = vpop.xlane.xlu0 %2023
  %v2025 = vsel %vm403, %v2019, -inf
  %2026 = vmax.xlane.f32.xlu0 %v2025
  %v2027 = vpop.xlane.xlu0 %2026
  %v2028 = vsub.f32 %v2014, %v2024
  %v2029 = vsub.f32 %v2019, %v2027
  %v2030 = vmul.f32 %v2028, 1.442695
  %v2031 = vpow.pop %v2030
  %v2032 = vmul.f32 %v2029, 1.442695
  %v2033 = vpow.pop %v2032
  %v2034 = vsel %vm403, %v2031, 0.0
  %2035 = vadd.xlane.f32.xlu0 %v2034
  %v2036 = vpop.xlane.xlu0 %2035
  %v2037 = vsel %vm403, %v2033, 0.0
  %2038 = vadd.xlane.f32.xlu0 %v2037
  %v2039 = vpop.xlane.xlu0 %2038
  %v2040 = vrcp.pop %v2036
  %v2041 = vmul.f32 1.0, %v2040
  %v2042 = vrcp.pop %v2039
  %v2043 = vmul.f32 1.0, %v2042
  %v2045 = vsel %vm403, %v2031, 0
  %v2048 = vsel %vm403, %v2033, 0
  %2050 = vmatprep.subr.mxu0 0.0
  %2051 = vmatpush1.msra.mxu0 %v1927
  %2052 = vmatprep.subr.mxu0 0.0
  %2053 = vmatpush1.msra.mxu0 %v1932
  %2054 = vmatprep.subr.mxu0 0.0
  %2055 = vmatpush1.msra.mxu0 0.0
  %2056 = vmatprep.subr.mxu0 0.0
  %2057 = vmatpush1.msra.mxu0 0.0
  %2058 = vmatprep.subr.mxu0 0.0
  %2059 = vmatpush1.msra.mxu0 0.0
  %2060 = vmatprep.subr.mxu0 0.0
  %2061 = vmatpush1.msra.mxu0 0.0
  %2062 = vmatprep.subr.mxu0 0.0
  %2063 = vmatpush1.msra.mxu0 0.0
  %2064 = vmatprep.subr.mxu0 0.0
  %2065 = vmatpush1.msra.mxu0 0.0
  %2066 = vmatprep.subr.mxu0 0.0
  %2067 = vmatpush1.msra.mxu0 0.0
  %2068 = vmatprep.subr.mxu0 0.0
  %2069 = vmatpush1.msra.mxu0 0.0
  %2070 = vmatprep.subr.mxu0 0.0
  %2071 = vmatpush1.msra.mxu0 0.0
  %2072 = vmatprep.subr.mxu0 0.0
  %2073 = vmatpush1.msra.mxu0 0.0
  %2074 = vmatprep.subr.mxu0 0.0
  %2075 = vmatpush1.msra.mxu0 0.0
  %2076 = vmatprep.subr.mxu0 0.0
  %2077 = vmatpush1.msra.mxu0 0.0
  %2078 = vmatprep.subr.mxu0 0.0
  %2079 = vmatpush1.msra.mxu0 0.0
  %2080 = vmatprep.subr.mxu0 0.0
  %2081 = vmatpush1.msra.mxu0 0.0
  %2082 = vmatprep.subr.mxu0 0.0
  %2083 = vmatpush1.msra.mxu0 0.0
  %2084 = vmatprep.subr.mxu0 0.0
  %2085 = vmatpush1.msra.mxu0 0.0
  %2086 = vmatprep.subr.mxu0 0.0
  %2087 = vmatpush1.msra.mxu0 0.0
  %2088 = vmatprep.subr.mxu0 0.0
  %2089 = vmatpush1.msra.mxu0 0.0
  %2090 = vmatprep.subr.mxu0 0.0
  %2091 = vmatpush1.msra.mxu0 0.0
  %2092 = vmatprep.subr.mxu0 0.0
  %2093 = vmatpush1.msra.mxu0 0.0
  %2094 = vmatprep.subr.mxu0 0.0
  %2095 = vmatpush1.msra.mxu0 0.0
  %2096 = vmatprep.subr.mxu0 0.0
  %2097 = vmatpush1.msra.mxu0 0.0
  %2098 = vmatprep.subr.mxu0 0.0
  %2099 = vmatpush1.msra.mxu0 0.0
  %2100 = vmatprep.subr.mxu0 0.0
  %2101 = vmatpush1.msra.mxu0 0.0
  %2102 = vmatprep.subr.mxu0 0.0
  %2103 = vmatpush1.msra.mxu0 0.0
  %2104 = vmatprep.subr.mxu0 0.0
  %2105 = vmatpush1.msra.mxu0 0.0
  %2106 = vmatprep.subr.mxu0 0.0
  %2107 = vmatpush1.msra.mxu0 0.0
  %2108 = vmatprep.subr.mxu0 0.0
  %2109 = vmatpush1.msra.mxu0 0.0
  %2110 = vmatprep.subr.mxu0 0.0
  %2111 = vmatpush1.msra.mxu0 0.0
  %2112 = vmatprep.subr.mxu0 0.0
  %2113 = vmatpush1.msra.mxu0 0.0
  %2114 = vmatprep.mubr.f32.mxu0 0.0
  %2115 = vmatmul.mubr.f32.gmra.mrb[0].mxu0 %v2045
  %v2116 = vpop.f32.mrb[0].mxu0
  %v2117 = vadd.f32 0.0, %v2116
  %v2118 = vpop.f32.mrb[0].mxu0
  %2119 = vmatprep.mubr.f32.mxu0 0.0
  %2120 = vmatmul.mubr.f32.gmra.mrb[0].mxu0 %v2048
  %v2121 = vpop.f32.mrb[0].mxu0
  %v2122 = vadd.f32 0.0, %v2121
  %v2123 = vpop.f32.mrb[0].mxu0
  %2124 = vdwg.mxu0
  %v2125 = vmul.f32 %v2117, %v2041
  %v2126 = vmul.f32 %v2122, %v2043
  %s2127 = scalar_lea.vmem %s6, 24
  %v2128 = vld [vmem:[%s2127] sm:$0xff]
  %v2130 = vsel %vm315, %v2125, 0
  %v2133 = vsel %vm315, %v2126, 0
  %2135 = vmatprep.subr.mxu0 0.0
  %2136 = vmatpush1.msra.mxu0 %v2128
  %2137 = vmatprep.subr.mxu0 0.0
  %2138 = vmatpush1.msra.mxu0 0.0
  %2139 = vmatprep.subr.mxu0 0.0
  %2140 = vmatpush1.msra.mxu0 0.0
  %2141 = vmatprep.subr.mxu0 0.0
  %2142 = vmatpush1.msra.mxu0 0.0
  %2143 = vmatprep.subr.mxu0 0.0
  %2144 = vmatpush1.msra.mxu0 0.0
  %2145 = vmatprep.subr.mxu0 0.0
  %2146 = vmatpush1.msra.mxu0 0.0
  %2147 = vmatprep.subr.mxu0 0.0
  %2148 = vmatpush1.msra.mxu0 0.0
  %2149 = vmatprep.subr.mxu0 0.0
  %2150 = vmatpush1.msra.mxu0 0.0
  %2151 = vmatprep.subr.mxu0 0.0
  %2152 = vmatpush1.msra.mxu0 0.0
  %2153 = vmatprep.subr.mxu0 0.0
  %2154 = vmatpush1.msra.mxu0 0.0
  %2155 = vmatprep.subr.mxu0 0.0
  %2156 = vmatpush1.msra.mxu0 0.0
  %2157 = vmatprep.subr.mxu0 0.0
  %2158 = vmatpush1.msra.mxu0 0.0
  %2159 = vmatprep.subr.mxu0 0.0
  %2160 = vmatpush1.msra.mxu0 0.0
  %2161 = vmatprep.subr.mxu0 0.0
  %2162 = vmatpush1.msra.mxu0 0.0
  %2163 = vmatprep.subr.mxu0 0.0
  %2164 = vmatpush1.msra.mxu0 0.0
  %2165 = vmatprep.subr.mxu0 0.0
  %2166 = vmatpush1.msra.mxu0 0.0
  %2167 = vmatprep.subr.mxu0 0.0
  %2168 = vmatpush1.msra.mxu0 0.0
  %2169 = vmatprep.subr.mxu0 0.0
  %2170 = vmatpush1.msra.mxu0 0.0
  %2171 = vmatprep.subr.mxu0 0.0
  %2172 = vmatpush1.msra.mxu0 0.0
  %2173 = vmatprep.subr.mxu0 0.0
  %2174 = vmatpush1.msra.mxu0 0.0
  %2175 = vmatprep.subr.mxu0 0.0
  %2176 = vmatpush1.msra.mxu0 0.0
  %2177 = vmatprep.subr.mxu0 0.0
  %2178 = vmatpush1.msra.mxu0 0.0
  %2179 = vmatprep.subr.mxu0 0.0
  %2180 = vmatpush1.msra.mxu0 0.0
  %2181 = vmatprep.subr.mxu0 0.0
  %2182 = vmatpush1.msra.mxu0 0.0
  %2183 = vmatprep.subr.mxu0 0.0
  %2184 = vmatpush1.msra.mxu0 0.0
  %2185 = vmatprep.subr.mxu0 0.0
  %2186 = vmatpush1.msra.mxu0 0.0
  %2187 = vmatprep.subr.mxu0 0.0
  %2188 = vmatpush1.msra.mxu0 0.0
  %2189 = vmatprep.subr.mxu0 0.0
  %2190 = vmatpush1.msra.mxu0 0.0
  %2191 = vmatprep.subr.mxu0 0.0
  %2192 = vmatpush1.msra.mxu0 0.0
  %2193 = vmatprep.subr.mxu0 0.0
  %2194 = vmatpush1.msra.mxu0 0.0
  %2195 = vmatprep.subr.mxu0 0.0
  %2196 = vmatpush1.msra.mxu0 0.0
  %2197 = vmatprep.subr.mxu0 0.0
  %2198 = vmatpush1.msra.mxu0 0.0
  %2199 = vmatprep.mubr.f32.mxu0 0.0
  %2200 = vmatmul.mubr.f32.gmra.mrb[0].mxu0 %v2130
  %v2201 = vpop.f32.mrb[0].mxu0
  %v2202 = vadd.f32 0.0, %v2201
  %v2203 = vpop.f32.mrb[0].mxu0
  %2204 = vmatprep.mubr.f32.mxu0 0.0
  %2205 = vmatmul.mubr.f32.gmra.mrb[0].mxu0 %v2133
  %v2206 = vpop.f32.mrb[0].mxu0
  %v2207 = vadd.f32 0.0, %v2206
  %v2208 = vpop.f32.mrb[0].mxu0
  %2209 = vdwg.mxu0
  %v2210 = vadd.f32 %v1669, %v2202
  %v2211 = vadd.f32 %v1670, %v2207
  %v2212 = vld [vmem:[%s7] sm:$0x1]
  %v2213 = vlaneseq
  %v2214 = vshrl.u32 %v2213, 7
  %v2215 = vsub.s32 0, %v2214
  %v2216 = vrot.slane %v2212, %v2215
  %v2217 = vadd.f32 %v2210, %v2216
  %v2218 = vadd.f32 %v2211, %v2216
  %v2219 = vadd.f32 %v44, %v2217
  %v2220 = vadd.f32 %v45, %v2218
  %v2221 = vld [vmem:[%s7 + $0x1] sm:$0x1]
  %v2222 = vld [vmem:[%s7 + $0x2] sm:$0x1]
  %v2223 = vsel %vm59, %v2219, 0.0
  %2224 = vadd.xlane.f32.xlu0 %v2223
  %v2225 = vpop.xlane.xlu0 %2224
  %v2226 = vsel %vm59, %v2220, 0.0
  %2227 = vadd.xlane.f32.xlu0 %v2226
  %v2228 = vpop.xlane.xlu0 %2227
  %v2229 = vrcp.pop 32.0
  %v2230 = vmul.f32 %v2225, %v2229
  %v2231 = vmul.f32 %v2228, %v2229
  %v2232 = vsub.f32 %v2219, %v2230
  %v2233 = vsub.f32 %v2220, %v2231
  %v2234 = vmul.f32 %v2232, %v2232
  %v2235 = vmul.f32 %v2233, %v2233
  %v2236 = vsel %vm59, %v2234, 0.0
  %2237 = vadd.xlane.f32.xlu0 %v2236
  %v2238 = vpop.xlane.xlu0 %2237
  %v2239 = vsel %vm59, %v2235, 0.0
  %2240 = vadd.xlane.f32.xlu0 %v2239
  %v2241 = vpop.xlane.xlu0 %2240
  %v2242 = vmul.f32 %v2238, %v2229
  %v2243 = vmul.f32 %v2241, %v2229
  %v2244 = vadd.f32 %v2242, 1e-05
  %v2245 = vadd.f32 %v2243, 1e-05
  %v2246 = vrsqrt.pop %v2244
  %v2247 = vrsqrt.pop %v2245
  %v2248 = vmul.f32 %v2232, %v2246
  %v2249 = vmul.f32 %v2233, %v2247
  %v2250 = vlaneseq
  %v2251 = vshrl.u32 %v2250, 7
  %v2252 = vsub.s32 0, %v2251
  %v2253 = vrot.slane %v2221, %v2252
  %v2254 = vmul.f32 %v2248, %v2253
  %v2255 = vmul.f32 %v2249, %v2253
  %v2256 = vlaneseq
  %v2257 = vshrl.u32 %v2256, 7
  %v2258 = vsub.s32 0, %v2257
  %v2259 = vrot.slane %v2222, %v2258
  %v2260 = vadd.f32 %v2254, %v2259
  %v2261 = vadd.f32 %v2255, %v2259
  %v2262 = vld [vmem:[%s8] sm:$0xff]
  %v2263 = vld [vmem:[%s8 + $0x8] sm:$0xff]
  %v2264 = vld [vmem:[%s8 + $0x10] sm:$0xff]
  %v2265 = vld [vmem:[%s8 + $0x18] sm:$0xff]
  %v2266 = vld [vmem:[%s9] sm:$0x1]
  %v2268 = vlaneseq
  %v2269 = vshrl.u32 %v2268, 7
  %v2270 = vsub.s32 0, %v2269
  %v2271 = vrot.slane %v2266, %v2270
  %v2274 = vsel %vm59, %v2260, 0
  %v2277 = vsel %vm59, %v2261, 0
  %2279 = vmatprep.subr.mxu0 0.0
  %2280 = vmatpush1.msra.mxu0 %v2262
  %2281 = vmatprep.subr.mxu0 0.0
  %2282 = vmatpush1.msra.mxu0 %v2263
  %2283 = vmatprep.subr.mxu0 0.0
  %2284 = vmatpush1.msra.mxu0 %v2264
  %2285 = vmatprep.subr.mxu0 0.0
  %2286 = vmatpush1.msra.mxu0 %v2265
  %2287 = vmatprep.subr.mxu0 0.0
  %2288 = vmatpush1.msra.mxu0 0.0
  %2289 = vmatprep.subr.mxu0 0.0
  %2290 = vmatpush1.msra.mxu0 0.0
  %2291 = vmatprep.subr.mxu0 0.0
  %2292 = vmatpush1.msra.mxu0 0.0
  %2293 = vmatprep.subr.mxu0 0.0
  %2294 = vmatpush1.msra.mxu0 0.0
  %2295 = vmatprep.subr.mxu0 0.0
  %2296 = vmatpush1.msra.mxu0 0.0
  %2297 = vmatprep.subr.mxu0 0.0
  %2298 = vmatpush1.msra.mxu0 0.0
  %2299 = vmatprep.subr.mxu0 0.0
  %2300 = vmatpush1.msra.mxu0 0.0
  %2301 = vmatprep.subr.mxu0 0.0
  %2302 = vmatpush1.msra.mxu0 0.0
  %2303 = vmatprep.subr.mxu0 0.0
  %2304 = vmatpush1.msra.mxu0 0.0
  %2305 = vmatprep.subr.mxu0 0.0
  %2306 = vmatpush1.msra.mxu0 0.0
  %2307 = vmatprep.subr.mxu0 0.0
  %2308 = vmatpush1.msra.mxu0 0.0
  %2309 = vmatprep.subr.mxu0 0.0
  %2310 = vmatpush1.msra.mxu0 0.0
  %2311 = vmatprep.subr.mxu0 0.0
  %2312 = vmatpush1.msra.mxu0 0.0
  %2313 = vmatprep.subr.mxu0 0.0
  %2314 = vmatpush1.msra.mxu0 0.0
  %2315 = vmatprep.subr.mxu0 0.0
  %2316 = vmatpush1.msra.mxu0 0.0
  %2317 = vmatprep.subr.mxu0 0.0
  %2318 = vmatpush1.msra.mxu0 0.0
  %2319 = vmatprep.subr.mxu0 0.0
  %2320 = vmatpush1.msra.mxu0 0.0
  %2321 = vmatprep.subr.mxu0 0.0
  %2322 = vmatpush1.msra.mxu0 0.0
  %2323 = vmatprep.subr.mxu0 0.0
  %2324 = vmatpush1.msra.mxu0 0.0
  %2325 = vmatprep.subr.mxu0 0.0
  %2326 = vmatpush1.msra.mxu0 0.0
  %2327 = vmatprep.subr.mxu0 0.0
  %2328 = vmatpush1.msra.mxu0 0.0
  %2329 = vmatprep.subr.mxu0 0.0
  %2330 = vmatpush1.msra.mxu0 0.0
  %2331 = vmatprep.subr.mxu0 0.0
  %2332 = vmatpush1.msra.mxu0 0.0
  %2333 = vmatprep.subr.mxu0 0.0
  %2334 = vmatpush1.msra.mxu0 0.0
  %2335 = vmatprep.subr.mxu0 0.0
  %2336 = vmatpush1.msra.mxu0 0.0
  %2337 = vmatprep.subr.mxu0 0.0
  %2338 = vmatpush1.msra.mxu0 0.0
  %2339 = vmatprep.subr.mxu0 0.0
  %2340 = vmatpush1.msra.mxu0 0.0
  %2341 = vmatprep.subr.mxu0 0.0
  %2342 = vmatpush1.msra.mxu0 0.0
  %2343 = vmatprep.mubr.f32.mxu0 0.0
  %2344 = vmatmul.mubr.f32.gmra.mrb[0].mxu0 %v2274
  %v2345 = vpop.f32.mrb[0].mxu0
  %v2346 = vadd.f32 %v2271, %v2345
  %v2347 = vpop.f32.mrb[0].mxu0
  %2348 = vmatprep.mubr.f32.mxu0 0.0
  %2349 = vmatmul.mubr.f32.gmra.mrb[0].mxu0 %v2277
  %v2350 = vpop.f32.mrb[0].mxu0
  %v2351 = vadd.f32 %v2271, %v2350
  %v2352 = vpop.f32.mrb[0].mxu0
  %2353 = vdwg.mxu0
  %v2354 = vmax.f32 %v2346, 0.0
  %v2355 = vmax.f32 %v2351, 0.0
  %v2356 = vld [vmem:[%s10] sm:$0xff]
  %v2357 = vld [vmem:[%s10 + $0x8] sm:$0xff]
  %v2358 = vld [vmem:[%s10 + $0x10] sm:$0xff]
  %v2359 = vld [vmem:[%s10 + $0x18] sm:$0xff]
  %v2360 = vld [vmem:[%s10 + $0x20] sm:$0xff]
  %v2361 = vld [vmem:[%s10 + $0x28] sm:$0xff]
  %v2362 = vld [vmem:[%s10 + $0x30] sm:$0xff]
  %v2363 = vld [vmem:[%s10 + $0x38] sm:$0xff]
  %v2364 = vld [vmem:[%s10 + $0x40] sm:$0xff]
  %v2365 = vld [vmem:[%s10 + $0x48] sm:$0xff]
  %v2366 = vld [vmem:[%s10 + $0x50] sm:$0xff]
  %v2367 = vld [vmem:[%s10 + $0x58] sm:$0xff]
  %v2368 = vld [vmem:[%s10 + $0x60] sm:$0xff]
  %v2369 = vld [vmem:[%s10 + $0x68] sm:$0xff]
  %v2370 = vld [vmem:[%s10 + $0x70] sm:$0xff]
  %v2371 = vld [vmem:[%s10 + $0x78] sm:$0xff]
  %v2372 = vld [vmem:[%s7 + $0x3] sm:$0x1]
  %v2373 = vlaneseq
  %v2374 = vshrl.u32 %v2373, 7
  %v2375 = vsub.s32 0, %v2374
  %v2376 = vrot.slane %v2372, %v2375
  %2377 = vmatprep.subr.mxu0 0.0
  %2378 = vmatpush1.msra.mxu0 %v2356
  %2379 = vmatprep.subr.mxu0 0.0
  %2380 = vmatpush1.msra.mxu0 %v2357
  %2381 = vmatprep.subr.mxu0 0.0
  %2382 = vmatpush1.msra.mxu0 %v2358
  %2383 = vmatprep.subr.mxu0 0.0
  %2384 = vmatpush1.msra.mxu0 %v2359
  %2385 = vmatprep.subr.mxu0 0.0
  %2386 = vmatpush1.msra.mxu0 %v2360
  %2387 = vmatprep.subr.mxu0 0.0
  %2388 = vmatpush1.msra.mxu0 %v2361
  %2389 = vmatprep.subr.mxu0 0.0
  %2390 = vmatpush1.msra.mxu0 %v2362
  %2391 = vmatprep.subr.mxu0 0.0
  %2392 = vmatpush1.msra.mxu0 %v2363
  %2393 = vmatprep.subr.mxu0 0.0
  %2394 = vmatpush1.msra.mxu0 %v2364
  %2395 = vmatprep.subr.mxu0 0.0
  %2396 = vmatpush1.msra.mxu0 %v2365
  %2397 = vmatprep.subr.mxu0 0.0
  %2398 = vmatpush1.msra.mxu0 %v2366
  %2399 = vmatprep.subr.mxu0 0.0
  %2400 = vmatpush1.msra.mxu0 %v2367
  %2401 = vmatprep.subr.mxu0 0.0
  %2402 = vmatpush1.msra.mxu0 %v2368
  %2403 = vmatprep.subr.mxu0 0.0
  %2404 = vmatpush1.msra.mxu0 %v2369
  %2405 = vmatprep.subr.mxu0 0.0
  %2406 = vmatpush1.msra.mxu0 %v2370
  %2407 = vmatprep.subr.mxu0 0.0
  %2408 = vmatpush1.msra.mxu0 %v2371
  %2409 = vmatprep.subr.mxu0 0.0
  %2410 = vmatpush1.msra.mxu0 0.0
  %2411 = vmatprep.subr.mxu0 0.0
  %2412 = vmatpush1.msra.mxu0 0.0
  %2413 = vmatprep.subr.mxu0 0.0
  %2414 = vmatpush1.msra.mxu0 0.0
  %2415 = vmatprep.subr.mxu0 0.0
  %2416 = vmatpush1.msra.mxu0 0.0
  %2417 = vmatprep.subr.mxu0 0.0
  %2418 = vmatpush1.msra.mxu0 0.0
  %2419 = vmatprep.subr.mxu0 0.0
  %2420 = vmatpush1.msra.mxu0 0.0
  %2421 = vmatprep.subr.mxu0 0.0
  %2422 = vmatpush1.msra.mxu0 0.0
  %2423 = vmatprep.subr.mxu0 0.0
  %2424 = vmatpush1.msra.mxu0 0.0
  %2425 = vmatprep.subr.mxu0 0.0
  %2426 = vmatpush1.msra.mxu0 0.0
  %2427 = vmatprep.subr.mxu0 0.0
  %2428 = vmatpush1.msra.mxu0 0.0
  %2429 = vmatprep.subr.mxu0 0.0
  %2430 = vmatpush1.msra.mxu0 0.0
  %2431 = vmatprep.subr.mxu0 0.0
  %2432 = vmatpush1.msra.mxu0 0.0
  %2433 = vmatprep.subr.mxu0 0.0
  %2434 = vmatpush1.msra.mxu0 0.0
  %2435 = vmatprep.subr.mxu0 0.0
  %2436 = vmatpush1.msra.mxu0 0.0
  %2437 = vmatprep.subr.mxu0 0.0
  %2438 = vmatpush1.msra.mxu0 0.0
  %2439 = vmatprep.subr.mxu0 0.0
  %2440 = vmatpush1.msra.mxu0 0.0
  %2441 = vmatprep.mubr.f32.mxu0 0.0
  %2442 = vmatmul.mubr.f32.gmra.mrb[0].mxu0 %v2354
  %v2443 = vpop.f32.mrb[0].mxu0
  %v2444 = vadd.f32 %v2376, %v2443
  %v2445 = vpop.f32.mrb[0].mxu0
  %2446 = vmatprep.mubr.f32.mxu0 0.0
  %2447 = vmatmul.mubr.f32.gmra.mrb[0].mxu0 %v2355
  %v2448 = vpop.f32.mrb[0].mxu0
  %v2449 = vadd.f32 %v2376, %v2448
  %v2450 = vpop.f32.mrb[0].mxu0
  %2451 = vdwg.mxu0
  %v2452 = vadd.f32 %v2260, %v2444
  %v2453 = vadd.f32 %v2261, %v2449
  %v2454 = vld [vmem:[%s7 + $0x4] sm:$0x1]
  %v2455 = vld [vmem:[%s7 + $0x5] sm:$0x1]
  %v2456 = vsel %vm59, %v2452, 0.0
  %2457 = vadd.xlane.f32.xlu0 %v2456
  %v2458 = vpop.xlane.xlu0 %2457
  %v2459 = vsel %vm59, %v2453, 0.0
  %2460 = vadd.xlane.f32.xlu0 %v2459
  %v2461 = vpop.xlane.xlu0 %2460
  %v2462 = vmul.f32 %v2458, %v2229
  %v2463 = vmul.f32 %v2461, %v2229
  %v2464 = vsub.f32 %v2452, %v2462
  %v2465 = vsub.f32 %v2453, %v2463
  %v2466 = vmul.f32 %v2464, %v2464
  %v2467 = vmul.f32 %v2465, %v2465
  %v2468 = vsel %vm59, %v2466, 0.0
  %2469 = vadd.xlane.f32.xlu0 %v2468
  %v2470 = vpop.xlane.xlu0 %2469
  %v2471 = vsel %vm59, %v2467, 0.0
  %2472 = vadd.xlane.f32.xlu0 %v2471
  %v2473 = vpop.xlane.xlu0 %2472
  %v2474 = vmul.f32 %v2470, %v2229
  %v2475 = vmul.f32 %v2473, %v2229
  %v2476 = vadd.f32 %v2474, 1e-05
  %v2477 = vadd.f32 %v2475, 1e-05
  %v2478 = vrsqrt.pop %v2476
  %v2479 = vrsqrt.pop %v2477
  %v2480 = vmul.f32 %v2464, %v2478
  %v2481 = vmul.f32 %v2465, %v2479
  %v2482 = vlaneseq
  %v2483 = vshrl.u32 %v2482, 7
  %v2484 = vsub.s32 0, %v2483
  %v2485 = vrot.slane %v2454, %v2484
  %v2486 = vmul.f32 %v2480, %v2485
  %v2487 = vmul.f32 %v2481, %v2485
  %v2488 = vlaneseq
  %v2489 = vshrl.u32 %v2488, 7
  %v2490 = vsub.s32 0, %v2489
  %v2491 = vrot.slane %v2455, %v2490
  %v2492 = vadd.f32 %v2486, %v2491
  %v2493 = vadd.f32 %v2487, %v2491
  %s2494 = scalar_lea.vmem %s2, 128
  %v2495 = vld [vmem:[%s2494] sm:$0xff]
  %v2496 = vld [vmem:[%s2494 + $0x8] sm:$0xff]
  %v2497 = vld [vmem:[%s2494 + $0x10] sm:$0xff]
  %v2498 = vld [vmem:[%s2494 + $0x18] sm:$0xff]
  %s2499 = scalar_lea.vmem %s5, 12
  %v2500 = vld [vmem:[%s2499] sm:$0x1]
  %v2502 = vlaneseq
  %v2503 = vshrl.u32 %v2502, 7
  %v2504 = vsub.s32 0, %v2503
  %v2505 = vrot.slane %v2500, %v2504
  %v2508 = vsel %vm59, %v2492, 0
  %v2511 = vsel %vm59, %v2493, 0
  %2513 = vmatprep.subr.mxu0 0.0
  %2514 = vmatpush1.msra.mxu0 %v2495
  %2515 = vmatprep.subr.mxu0 0.0
  %2516 = vmatpush1.msra.mxu0 %v2496
  %2517 = vmatprep.subr.mxu0 0.0
  %2518 = vmatpush1.msra.mxu0 %v2497
  %2519 = vmatprep.subr.mxu0 0.0
  %2520 = vmatpush1.msra.mxu0 %v2498
  %2521 = vmatprep.subr.mxu0 0.0
  %2522 = vmatpush1.msra.mxu0 0.0
  %2523 = vmatprep.subr.mxu0 0.0
  %2524 = vmatpush1.msra.mxu0 0.0
  %2525 = vmatprep.subr.mxu0 0.0
  %2526 = vmatpush1.msra.mxu0 0.0
  %2527 = vmatprep.subr.mxu0 0.0
  %2528 = vmatpush1.msra.mxu0 0.0
  %2529 = vmatprep.subr.mxu0 0.0
  %2530 = vmatpush1.msra.mxu0 0.0
  %2531 = vmatprep.subr.mxu0 0.0
  %2532 = vmatpush1.msra.mxu0 0.0
  %2533 = vmatprep.subr.mxu0 0.0
  %2534 = vmatpush1.msra.mxu0 0.0
  %2535 = vmatprep.subr.mxu0 0.0
  %2536 = vmatpush1.msra.mxu0 0.0
  %2537 = vmatprep.subr.mxu0 0.0
  %2538 = vmatpush1.msra.mxu0 0.0
  %2539 = vmatprep.subr.mxu0 0.0
  %2540 = vmatpush1.msra.mxu0 0.0
  %2541 = vmatprep.subr.mxu0 0.0
  %2542 = vmatpush1.msra.mxu0 0.0
  %2543 = vmatprep.subr.mxu0 0.0
  %2544 = vmatpush1.msra.mxu0 0.0
  %2545 = vmatprep.subr.mxu0 0.0
  %2546 = vmatpush1.msra.mxu0 0.0
  %2547 = vmatprep.subr.mxu0 0.0
  %2548 = vmatpush1.msra.mxu0 0.0
  %2549 = vmatprep.subr.mxu0 0.0
  %2550 = vmatpush1.msra.mxu0 0.0
  %2551 = vmatprep.subr.mxu0 0.0
  %2552 = vmatpush1.msra.mxu0 0.0
  %2553 = vmatprep.subr.mxu0 0.0
  %2554 = vmatpush1.msra.mxu0 0.0
  %2555 = vmatprep.subr.mxu0 0.0
  %2556 = vmatpush1.msra.mxu0 0.0
  %2557 = vmatprep.subr.mxu0 0.0
  %2558 = vmatpush1.msra.mxu0 0.0
  %2559 = vmatprep.subr.mxu0 0.0
  %2560 = vmatpush1.msra.mxu0 0.0
  %2561 = vmatprep.subr.mxu0 0.0
  %2562 = vmatpush1.msra.mxu0 0.0
  %2563 = vmatprep.subr.mxu0 0.0
  %2564 = vmatpush1.msra.mxu0 0.0
  %2565 = vmatprep.subr.mxu0 0.0
  %2566 = vmatpush1.msra.mxu0 0.0
  %2567 = vmatprep.subr.mxu0 0.0
  %2568 = vmatpush1.msra.mxu0 0.0
  %2569 = vmatprep.subr.mxu0 0.0
  %2570 = vmatpush1.msra.mxu0 0.0
  %2571 = vmatprep.subr.mxu0 0.0
  %2572 = vmatpush1.msra.mxu0 0.0
  %2573 = vmatprep.subr.mxu0 0.0
  %2574 = vmatpush1.msra.mxu0 0.0
  %2575 = vmatprep.subr.mxu0 0.0
  %2576 = vmatpush1.msra.mxu0 0.0
  %2577 = vmatprep.mubr.f32.mxu0 0.0
  %2578 = vmatmul.mubr.f32.gmra.mrb[0].mxu0 %v2508
  %v2579 = vpop.f32.mrb[0].mxu0
  %v2580 = vadd.f32 %v2505, %v2579
  %v2581 = vpop.f32.mrb[0].mxu0
  %2582 = vmatprep.mubr.f32.mxu0 0.0
  %2583 = vmatmul.mubr.f32.gmra.mrb[0].mxu0 %v2511
  %v2584 = vpop.f32.mrb[0].mxu0
  %v2585 = vadd.f32 %v2505, %v2584
  %v2586 = vpop.f32.mrb[0].mxu0
  %2587 = vdwg.mxu0
  %s2588 = scalar_lea.vmem %s3, 128
  %v2589 = vld [vmem:[%s2588] sm:$0xff]
  %v2590 = vld [vmem:[%s2588 + $0x8] sm:$0xff]
  %v2591 = vld [vmem:[%s2588 + $0x10] sm:$0xff]
  %v2592 = vld [vmem:[%s2588 + $0x18] sm:$0xff]
  %s2593 = scalar_lea.vmem %s5, 16
  %v2594 = vld [vmem:[%s2593] sm:$0x1]
  %v2596 = vlaneseq
  %v2597 = vshrl.u32 %v2596, 7
  %v2598 = vsub.s32 0, %v2597
  %v2599 = vrot.slane %v2594, %v2598
  %2601 = vmatprep.subr.mxu0 0.0
  %2602 = vmatpush1.msra.mxu0 %v2589
  %2603 = vmatprep.subr.mxu0 0.0
  %2604 = vmatpush1.msra.mxu0 %v2590
  %2605 = vmatprep.subr.mxu0 0.0
  %2606 = vmatpush1.msra.mxu0 %v2591
  %2607 = vmatprep.subr.mxu0 0.0
  %2608 = vmatpush1.msra.mxu0 %v2592
  %2609 = vmatprep.subr.mxu0 0.0
  %2610 = vmatpush1.msra.mxu0 0.0
  %2611 = vmatprep.subr.mxu0 0.0
  %2612 = vmatpush1.msra.mxu0 0.0
  %2613 = vmatprep.subr.mxu0 0.0
  %2614 = vmatpush1.msra.mxu0 0.0
  %2615 = vmatprep.subr.mxu0 0.0
  %2616 = vmatpush1.msra.mxu0 0.0
  %2617 = vmatprep.subr.mxu0 0.0
  %2618 = vmatpush1.msra.mxu0 0.0
  %2619 = vmatprep.subr.mxu0 0.0
  %2620 = vmatpush1.msra.mxu0 0.0
  %2621 = vmatprep.subr.mxu0 0.0
  %2622 = vmatpush1.msra.mxu0 0.0
  %2623 = vmatprep.subr.mxu0 0.0
  %2624 = vmatpush1.msra.mxu0 0.0
  %2625 = vmatprep.subr.mxu0 0.0
  %2626 = vmatpush1.msra.mxu0 0.0
  %2627 = vmatprep.subr.mxu0 0.0
  %2628 = vmatpush1.msra.mxu0 0.0
  %2629 = vmatprep.subr.mxu0 0.0
  %2630 = vmatpush1.msra.mxu0 0.0
  %2631 = vmatprep.subr.mxu0 0.0
  %2632 = vmatpush1.msra.mxu0 0.0
  %2633 = vmatprep.subr.mxu0 0.0
  %2634 = vmatpush1.msra.mxu0 0.0
  %2635 = vmatprep.subr.mxu0 0.0
  %2636 = vmatpush1.msra.mxu0 0.0
  %2637 = vmatprep.subr.mxu0 0.0
  %2638 = vmatpush1.msra.mxu0 0.0
  %2639 = vmatprep.subr.mxu0 0.0
  %2640 = vmatpush1.msra.mxu0 0.0
  %2641 = vmatprep.subr.mxu0 0.0
  %2642 = vmatpush1.msra.mxu0 0.0
  %2643 = vmatprep.subr.mxu0 0.0
  %2644 = vmatpush1.msra.mxu0 0.0
  %2645 = vmatprep.subr.mxu0 0.0
  %2646 = vmatpush1.msra.mxu0 0.0
  %2647 = vmatprep.subr.mxu0 0.0
  %2648 = vmatpush1.msra.mxu0 0.0
  %2649 = vmatprep.subr.mxu0 0.0
  %2650 = vmatpush1.msra.mxu0 0.0
  %2651 = vmatprep.subr.mxu0 0.0
  %2652 = vmatpush1.msra.mxu0 0.0
  %2653 = vmatprep.subr.mxu0 0.0
  %2654 = vmatpush1.msra.mxu0 0.0
  %2655 = vmatprep.subr.mxu0 0.0
  %2656 = vmatpush1.msra.mxu0 0.0
  %2657 = vmatprep.subr.mxu0 0.0
  %2658 = vmatpush1.msra.mxu0 0.0
  %2659 = vmatprep.subr.mxu0 0.0
  %2660 = vmatpush1.msra.mxu0 0.0
  %2661 = vmatprep.subr.mxu0 0.0
  %2662 = vmatpush1.msra.mxu0 0.0
  %2663 = vmatprep.subr.mxu0 0.0
  %2664 = vmatpush1.msra.mxu0 0.0
  %2665 = vmatprep.mubr.f32.mxu0 0.0
  %2666 = vmatmul.mubr.f32.gmra.mrb[0].mxu0 %v2508
  %v2667 = vpop.f32.mrb[0].mxu0
  %v2668 = vadd.f32 %v2599, %v2667
  %v2669 = vpop.f32.mrb[0].mxu0
  %2670 = vmatprep.mubr.f32.mxu0 0.0
  %2671 = vmatmul.mubr.f32.gmra.mrb[0].mxu0 %v2511
  %v2672 = vpop.f32.mrb[0].mxu0
  %v2673 = vadd.f32 %v2599, %v2672
  %v2674 = vpop.f32.mrb[0].mxu0
  %2675 = vdwg.mxu0
  %s2676 = scalar_lea.vmem %s4, 128
  %v2677 = vld [vmem:[%s2676] sm:$0xff]
  %v2678 = vld [vmem:[%s2676 + $0x8] sm:$0xff]
  %v2679 = vld [vmem:[%s2676 + $0x10] sm:$0xff]
  %v2680 = vld [vmem:[%s2676 + $0x18] sm:$0xff]
  %s2681 = scalar_lea.vmem %s5, 20
  %v2682 = vld [vmem:[%s2681] sm:$0x1]
  %v2684 = vlaneseq
  %v2685 = vshrl.u32 %v2684, 7
  %v2686 = vsub.s32 0, %v2685
  %v2687 = vrot.slane %v2682, %v2686
  %2689 = vmatprep.subr.mxu0 0.0
  %2690 = vmatpush1.msra.mxu0 %v2677
  %2691 = vmatprep.subr.mxu0 0.0
  %2692 = vmatpush1.msra.mxu0 %v2678
  %2693 = vmatprep.subr.mxu0 0.0
  %2694 = vmatpush1.msra.mxu0 %v2679
  %2695 = vmatprep.subr.mxu0 0.0
  %2696 = vmatpush1.msra.mxu0 %v2680
  %2697 = vmatprep.subr.mxu0 0.0
  %2698 = vmatpush1.msra.mxu0 0.0
  %2699 = vmatprep.subr.mxu0 0.0
  %2700 = vmatpush1.msra.mxu0 0.0
  %2701 = vmatprep.subr.mxu0 0.0
  %2702 = vmatpush1.msra.mxu0 0.0
  %2703 = vmatprep.subr.mxu0 0.0
  %2704 = vmatpush1.msra.mxu0 0.0
  %2705 = vmatprep.subr.mxu0 0.0
  %2706 = vmatpush1.msra.mxu0 0.0
  %2707 = vmatprep.subr.mxu0 0.0
  %2708 = vmatpush1.msra.mxu0 0.0
  %2709 = vmatprep.subr.mxu0 0.0
  %2710 = vmatpush1.msra.mxu0 0.0
  %2711 = vmatprep.subr.mxu0 0.0
  %2712 = vmatpush1.msra.mxu0 0.0
  %2713 = vmatprep.subr.mxu0 0.0
  %2714 = vmatpush1.msra.mxu0 0.0
  %2715 = vmatprep.subr.mxu0 0.0
  %2716 = vmatpush1.msra.mxu0 0.0
  %2717 = vmatprep.subr.mxu0 0.0
  %2718 = vmatpush1.msra.mxu0 0.0
  %2719 = vmatprep.subr.mxu0 0.0
  %2720 = vmatpush1.msra.mxu0 0.0
  %2721 = vmatprep.subr.mxu0 0.0
  %2722 = vmatpush1.msra.mxu0 0.0
  %2723 = vmatprep.subr.mxu0 0.0
  %2724 = vmatpush1.msra.mxu0 0.0
  %2725 = vmatprep.subr.mxu0 0.0
  %2726 = vmatpush1.msra.mxu0 0.0
  %2727 = vmatprep.subr.mxu0 0.0
  %2728 = vmatpush1.msra.mxu0 0.0
  %2729 = vmatprep.subr.mxu0 0.0
  %2730 = vmatpush1.msra.mxu0 0.0
  %2731 = vmatprep.subr.mxu0 0.0
  %2732 = vmatpush1.msra.mxu0 0.0
  %2733 = vmatprep.subr.mxu0 0.0
  %2734 = vmatpush1.msra.mxu0 0.0
  %2735 = vmatprep.subr.mxu0 0.0
  %2736 = vmatpush1.msra.mxu0 0.0
  %2737 = vmatprep.subr.mxu0 0.0
  %2738 = vmatpush1.msra.mxu0 0.0
  %2739 = vmatprep.subr.mxu0 0.0
  %2740 = vmatpush1.msra.mxu0 0.0
  %2741 = vmatprep.subr.mxu0 0.0
  %2742 = vmatpush1.msra.mxu0 0.0
  %2743 = vmatprep.subr.mxu0 0.0
  %2744 = vmatpush1.msra.mxu0 0.0
  %2745 = vmatprep.subr.mxu0 0.0
  %2746 = vmatpush1.msra.mxu0 0.0
  %2747 = vmatprep.subr.mxu0 0.0
  %2748 = vmatpush1.msra.mxu0 0.0
  %2749 = vmatprep.subr.mxu0 0.0
  %2750 = vmatpush1.msra.mxu0 0.0
  %2751 = vmatprep.subr.mxu0 0.0
  %2752 = vmatpush1.msra.mxu0 0.0
  %2753 = vmatprep.mubr.f32.mxu0 0.0
  %2754 = vmatmul.mubr.f32.gmra.mrb[0].mxu0 %v2508
  %v2755 = vpop.f32.mrb[0].mxu0
  %v2756 = vadd.f32 %v2687, %v2755
  %v2757 = vpop.f32.mrb[0].mxu0
  %2758 = vmatprep.mubr.f32.mxu0 0.0
  %2759 = vmatmul.mubr.f32.gmra.mrb[0].mxu0 %v2511
  %v2760 = vpop.f32.mrb[0].mxu0
  %v2761 = vadd.f32 %v2687, %v2760
  %v2762 = vpop.f32.mrb[0].mxu0
  %2763 = vdwg.mxu0
  %v2765 = vsel %vm315, %v2580, 0
  %v2768 = vsel %vm315, %v2585, 0
  %v2771 = vsel %vm315, %v2668, 0
  %v2774 = vsel %vm315, %v2673, 0
  %2776 = vmatprep.subr.mxu0 0.0
  %2777 = vmatpush1.xpose.msra.mxu0 %v2771
  %2778 = vmatprep.subr.mxu0 0.0
  %2779 = vmatpush1.xpose.msra.mxu0 %v2774
  %2780 = vmatprep.subr.mxu0 0.0
  %2781 = vmatpush1.xpose.msra.mxu0 0.0
  %2782 = vmatprep.subr.mxu0 0.0
  %2783 = vmatpush1.xpose.msra.mxu0 0.0
  %2784 = vmatprep.subr.mxu0 0.0
  %2785 = vmatpush1.xpose.msra.mxu0 0.0
  %2786 = vmatprep.subr.mxu0 0.0
  %2787 = vmatpush1.xpose.msra.mxu0 0.0
  %2788 = vmatprep.subr.mxu0 0.0
  %2789 = vmatpush1.xpose.msra.mxu0 0.0
  %2790 = vmatprep.subr.mxu0 0.0
  %2791 = vmatpush1.xpose.msra.mxu0 0.0
  %2792 = vmatprep.subr.mxu0 0.0
  %2793 = vmatpush1.xpose.msra.mxu0 0.0
  %2794 = vmatprep.subr.mxu0 0.0
  %2795 = vmatpush1.xpose.msra.mxu0 0.0
  %2796 = vmatprep.subr.mxu0 0.0
  %2797 = vmatpush1.xpose.msra.mxu0 0.0
  %2798 = vmatprep.subr.mxu0 0.0
  %2799 = vmatpush1.xpose.msra.mxu0 0.0
  %2800 = vmatprep.subr.mxu0 0.0
  %2801 = vmatpush1.xpose.msra.mxu0 0.0
  %2802 = vmatprep.subr.mxu0 0.0
  %2803 = vmatpush1.xpose.msra.mxu0 0.0
  %2804 = vmatprep.subr.mxu0 0.0
  %2805 = vmatpush1.xpose.msra.mxu0 0.0
  %2806 = vmatprep.subr.mxu0 0.0
  %2807 = vmatpush1.xpose.msra.mxu0 0.0
  %2808 = vmatprep.subr.mxu0 0.0
  %2809 = vmatpush1.xpose.msra.mxu0 0.0
  %2810 = vmatprep.subr.mxu0 0.0
  %2811 = vmatpush1.xpose.msra.mxu0 0.0
  %2812 = vmatprep.subr.mxu0 0.0
  %2813 = vmatpush1.xpose.msra.mxu0 0.0
  %2814 = vmatprep.subr.mxu0 0.0
  %2815 = vmatpush1.xpose.msra.mxu0 0.0
  %2816 = vmatprep.subr.mxu0 0.0
  %2817 = vmatpush1.xpose.msra.mxu0 0.0
  %2818 = vmatprep.subr.mxu0 0.0
  %2819 = vmatpush1.xpose.msra.mxu0 0.0
  %2820 = vmatprep.subr.mxu0 0.0
  %2821 = vmatpush1.xpose.msra.mxu0 0.0
  %2822 = vmatprep.subr.mxu0 0.0
  %2823 = vmatpush1.xpose.msra.mxu0 0.0
  %2824 = vmatprep.subr.mxu0 0.0
  %2825 = vmatpush1.xpose.msra.mxu0 0.0
  %2826 = vmatprep.subr.mxu0 0.0
  %2827 = vmatpush1.xpose.msra.mxu0 0.0
  %2828 = vmatprep.subr.mxu0 0.0
  %2829 = vmatpush1.xpose.msra.mxu0 0.0
  %2830 = vmatprep.subr.mxu0 0.0
  %2831 = vmatpush1.xpose.msra.mxu0 0.0
  %2832 = vmatprep.subr.mxu0 0.0
  %2833 = vmatpush1.xpose.msra.mxu0 0.0
  %2834 = vmatprep.subr.mxu0 0.0
  %2835 = vmatpush1.xpose.msra.mxu0 0.0
  %2836 = vmatprep.subr.mxu0 0.0
  %2837 = vmatpush1.xpose.msra.mxu0 0.0
  %2838 = vmatprep.subr.mxu0 0.0
  %2839 = vmatpush1.xpose.msra.mxu0 0.0
  %2840 = vmatprep.mubr.f32.mxu0 0.0
  %2841 = vmatmul.mubr.f32.gmra.mrb[0].mxu0 %v2765
  %v2842 = vpop.f32.mrb[0].mxu0
  %v2843 = vadd.f32 %v46, %v2842
  %v2844 = vpop.f32.mrb[0].mxu0
  %2845 = vmatprep.mubr.f32.mxu0 0.0
  %2846 = vmatmul.mubr.f32.gmra.mrb[0].mxu0 %v2768
  %v2847 = vpop.f32.mrb[0].mxu0
  %v2848 = vadd.f32 %v47, %v2847
  %v2849 = vpop.f32.mrb[0].mxu0
  %2850 = vdwg.mxu0
  %v2851 = vsel %vm403, %v2843, -inf
  %2852 = vmax.xlane.f32.xlu0 %v2851
  %v2853 = vpop.xlane.xlu0 %2852
  %v2854 = vsel %vm403, %v2848, -inf
  %2855 = vmax.xlane.f32.xlu0 %v2854
  %v2856 = vpop.xlane.xlu0 %2855
  %v2857 = vsub.f32 %v2843, %v2853
  %v2858 = vsub.f32 %v2848, %v2856
  %v2859 = vmul.f32 %v2857, 1.442695
  %v2860 = vpow.pop %v2859
  %v2861 = vmul.f32 %v2858, 1.442695
  %v2862 = vpow.pop %v2861
  %v2863 = vsel %vm403, %v2860, 0.0
  %2864 = vadd.xlane.f32.xlu0 %v2863
  %v2865 = vpop.xlane.xlu0 %2864
  %v2866 = vsel %vm403, %v2862, 0.0
  %2867 = vadd.xlane.f32.xlu0 %v2866
  %v2868 = vpop.xlane.xlu0 %2867
  %v2869 = vrcp.pop %v2865
  %v2870 = vmul.f32 1.0, %v2869
  %v2871 = vrcp.pop %v2868
  %v2872 = vmul.f32 1.0, %v2871
  %v2874 = vsel %vm403, %v2860, 0
  %v2877 = vsel %vm403, %v2862, 0
  %2879 = vmatprep.subr.mxu0 0.0
  %2880 = vmatpush1.msra.mxu0 %v2756
  %2881 = vmatprep.subr.mxu0 0.0
  %2882 = vmatpush1.msra.mxu0 %v2761
  %2883 = vmatprep.subr.mxu0 0.0
  %2884 = vmatpush1.msra.mxu0 0.0
  %2885 = vmatprep.subr.mxu0 0.0
  %2886 = vmatpush1.msra.mxu0 0.0
  %2887 = vmatprep.subr.mxu0 0.0
  %2888 = vmatpush1.msra.mxu0 0.0
  %2889 = vmatprep.subr.mxu0 0.0
  %2890 = vmatpush1.msra.mxu0 0.0
  %2891 = vmatprep.subr.mxu0 0.0
  %2892 = vmatpush1.msra.mxu0 0.0
  %2893 = vmatprep.subr.mxu0 0.0
  %2894 = vmatpush1.msra.mxu0 0.0
  %2895 = vmatprep.subr.mxu0 0.0
  %2896 = vmatpush1.msra.mxu0 0.0
  %2897 = vmatprep.subr.mxu0 0.0
  %2898 = vmatpush1.msra.mxu0 0.0
  %2899 = vmatprep.subr.mxu0 0.0
  %2900 = vmatpush1.msra.mxu0 0.0
  %2901 = vmatprep.subr.mxu0 0.0
  %2902 = vmatpush1.msra.mxu0 0.0
  %2903 = vmatprep.subr.mxu0 0.0
  %2904 = vmatpush1.msra.mxu0 0.0
  %2905 = vmatprep.subr.mxu0 0.0
  %2906 = vmatpush1.msra.mxu0 0.0
  %2907 = vmatprep.subr.mxu0 0.0
  %2908 = vmatpush1.msra.mxu0 0.0
  %2909 = vmatprep.subr.mxu0 0.0
  %2910 = vmatpush1.msra.mxu0 0.0
  %2911 = vmatprep.subr.mxu0 0.0
  %2912 = vmatpush1.msra.mxu0 0.0
  %2913 = vmatprep.subr.mxu0 0.0
  %2914 = vmatpush1.msra.mxu0 0.0
  %2915 = vmatprep.subr.mxu0 0.0
  %2916 = vmatpush1.msra.mxu0 0.0
  %2917 = vmatprep.subr.mxu0 0.0
  %2918 = vmatpush1.msra.mxu0 0.0
  %2919 = vmatprep.subr.mxu0 0.0
  %2920 = vmatpush1.msra.mxu0 0.0
  %2921 = vmatprep.subr.mxu0 0.0
  %2922 = vmatpush1.msra.mxu0 0.0
  %2923 = vmatprep.subr.mxu0 0.0
  %2924 = vmatpush1.msra.mxu0 0.0
  %2925 = vmatprep.subr.mxu0 0.0
  %2926 = vmatpush1.msra.mxu0 0.0
  %2927 = vmatprep.subr.mxu0 0.0
  %2928 = vmatpush1.msra.mxu0 0.0
  %2929 = vmatprep.subr.mxu0 0.0
  %2930 = vmatpush1.msra.mxu0 0.0
  %2931 = vmatprep.subr.mxu0 0.0
  %2932 = vmatpush1.msra.mxu0 0.0
  %2933 = vmatprep.subr.mxu0 0.0
  %2934 = vmatpush1.msra.mxu0 0.0
  %2935 = vmatprep.subr.mxu0 0.0
  %2936 = vmatpush1.msra.mxu0 0.0
  %2937 = vmatprep.subr.mxu0 0.0
  %2938 = vmatpush1.msra.mxu0 0.0
  %2939 = vmatprep.subr.mxu0 0.0
  %2940 = vmatpush1.msra.mxu0 0.0
  %2941 = vmatprep.subr.mxu0 0.0
  %2942 = vmatpush1.msra.mxu0 0.0
  %2943 = vmatprep.mubr.f32.mxu0 0.0
  %2944 = vmatmul.mubr.f32.gmra.mrb[0].mxu0 %v2874
  %v2945 = vpop.f32.mrb[0].mxu0
  %v2946 = vadd.f32 0.0, %v2945
  %v2947 = vpop.f32.mrb[0].mxu0
  %2948 = vmatprep.mubr.f32.mxu0 0.0
  %2949 = vmatmul.mubr.f32.gmra.mrb[0].mxu0 %v2877
  %v2950 = vpop.f32.mrb[0].mxu0
  %v2951 = vadd.f32 0.0, %v2950
  %v2952 = vpop.f32.mrb[0].mxu0
  %2953 = vdwg.mxu0
  %v2954 = vmul.f32 %v2946, %v2870
  %v2955 = vmul.f32 %v2951, %v2872
  %s2956 = scalar_lea.vmem %s6, 32
  %v2957 = vld [vmem:[%s2956] sm:$0xff]
  %s2958 = scalar_lea.vmem %s2, 160
  %v2959 = vld [vmem:[%s2958] sm:$0xff]
  %v2960 = vld [vmem:[%s2958 + $0x8] sm:$0xff]
  %v2961 = vld [vmem:[%s2958 + $0x10] sm:$0xff]
  %v2962 = vld [vmem:[%s2958 + $0x18] sm:$0xff]
  %s2963 = scalar_lea.vmem %s5, 13
  %v2964 = vld [vmem:[%s2963] sm:$0x1]
  %v2966 = vlaneseq
  %v2967 = vshrl.u32 %v2966, 7
  %v2968 = vsub.s32 0, %v2967
  %v2969 = vrot.slane %v2964, %v2968
  %2971 = vmatprep.subr.mxu0 0.0
  %2972 = vmatpush1.msra.mxu0 %v2959
  %2973 = vmatprep.subr.mxu0 0.0
  %2974 = vmatpush1.msra.mxu0 %v2960
  %2975 = vmatprep.subr.mxu0 0.0
  %2976 = vmatpush1.msra.mxu0 %v2961
  %2977 = vmatprep.subr.mxu0 0.0
  %2978 = vmatpush1.msra.mxu0 %v2962
  %2979 = vmatprep.subr.mxu0 0.0
  %2980 = vmatpush1.msra.mxu0 0.0
  %2981 = vmatprep.subr.mxu0 0.0
  %2982 = vmatpush1.msra.mxu0 0.0
  %2983 = vmatprep.subr.mxu0 0.0
  %2984 = vmatpush1.msra.mxu0 0.0
  %2985 = vmatprep.subr.mxu0 0.0
  %2986 = vmatpush1.msra.mxu0 0.0
  %2987 = vmatprep.subr.mxu0 0.0
  %2988 = vmatpush1.msra.mxu0 0.0
  %2989 = vmatprep.subr.mxu0 0.0
  %2990 = vmatpush1.msra.mxu0 0.0
  %2991 = vmatprep.subr.mxu0 0.0
  %2992 = vmatpush1.msra.mxu0 0.0
  %2993 = vmatprep.subr.mxu0 0.0
  %2994 = vmatpush1.msra.mxu0 0.0
  %2995 = vmatprep.subr.mxu0 0.0
  %2996 = vmatpush1.msra.mxu0 0.0
  %2997 = vmatprep.subr.mxu0 0.0
  %2998 = vmatpush1.msra.mxu0 0.0
  %2999 = vmatprep.subr.mxu0 0.0
  %3000 = vmatpush1.msra.mxu0 0.0
  %3001 = vmatprep.subr.mxu0 0.0
  %3002 = vmatpush1.msra.mxu0 0.0
  %3003 = vmatprep.subr.mxu0 0.0
  %3004 = vmatpush1.msra.mxu0 0.0
  %3005 = vmatprep.subr.mxu0 0.0
  %3006 = vmatpush1.msra.mxu0 0.0
  %3007 = vmatprep.subr.mxu0 0.0
  %3008 = vmatpush1.msra.mxu0 0.0
  %3009 = vmatprep.subr.mxu0 0.0
  %3010 = vmatpush1.msra.mxu0 0.0
  %3011 = vmatprep.subr.mxu0 0.0
  %3012 = vmatpush1.msra.mxu0 0.0
  %3013 = vmatprep.subr.mxu0 0.0
  %3014 = vmatpush1.msra.mxu0 0.0
  %3015 = vmatprep.subr.mxu0 0.0
  %3016 = vmatpush1.msra.mxu0 0.0
  %3017 = vmatprep.subr.mxu0 0.0
  %3018 = vmatpush1.msra.mxu0 0.0
  %3019 = vmatprep.subr.mxu0 0.0
  %3020 = vmatpush1.msra.mxu0 0.0
  %3021 = vmatprep.subr.mxu0 0.0
  %3022 = vmatpush1.msra.mxu0 0.0
  %3023 = vmatprep.subr.mxu0 0.0
  %3024 = vmatpush1.msra.mxu0 0.0
  %3025 = vmatprep.subr.mxu0 0.0
  %3026 = vmatpush1.msra.mxu0 0.0
  %3027 = vmatprep.subr.mxu0 0.0
  %3028 = vmatpush1.msra.mxu0 0.0
  %3029 = vmatprep.subr.mxu0 0.0
  %3030 = vmatpush1.msra.mxu0 0.0
  %3031 = vmatprep.subr.mxu0 0.0
  %3032 = vmatpush1.msra.mxu0 0.0
  %3033 = vmatprep.subr.mxu0 0.0
  %3034 = vmatpush1.msra.mxu0 0.0
  %3035 = vmatprep.mubr.f32.mxu0 0.0
  %3036 = vmatmul.mubr.f32.gmra.mrb[0].mxu0 %v2508
  %v3037 = vpop.f32.mrb[0].mxu0
  %v3038 = vadd.f32 %v2969, %v3037
  %v3039 = vpop.f32.mrb[0].mxu0
  %3040 = vmatprep.mubr.f32.mxu0 0.0
  %3041 = vmatmul.mubr.f32.gmra.mrb[0].mxu0 %v2511
  %v3042 = vpop.f32.mrb[0].mxu0
  %v3043 = vadd.f32 %v2969, %v3042
  %v3044 = vpop.f32.mrb[0].mxu0
  %3045 = vdwg.mxu0
  %s3046 = scalar_lea.vmem %s3, 160
  %v3047 = vld [vmem:[%s3046] sm:$0xff]
  %v3048 = vld [vmem:[%s3046 + $0x8] sm:$0xff]
  %v3049 = vld [vmem:[%s3046 + $0x10] sm:$0xff]
  %v3050 = vld [vmem:[%s3046 + $0x18] sm:$0xff]
  %s3051 = scalar_lea.vmem %s5, 17
  %v3052 = vld [vmem:[%s3051] sm:$0x1]
  %v3054 = vlaneseq
  %v3055 = vshrl.u32 %v3054, 7
  %v3056 = vsub.s32 0, %v3055
  %v3057 = vrot.slane %v3052, %v3056
  %3059 = vmatprep.subr.mxu0 0.0
  %3060 = vmatpush1.msra.mxu0 %v3047
  %3061 = vmatprep.subr.mxu0 0.0
  %3062 = vmatpush1.msra.mxu0 %v3048
  %3063 = vmatprep.subr.mxu0 0.0
  %3064 = vmatpush1.msra.mxu0 %v3049
  %3065 = vmatprep.subr.mxu0 0.0
  %3066 = vmatpush1.msra.mxu0 %v3050
  %3067 = vmatprep.subr.mxu0 0.0
  %3068 = vmatpush1.msra.mxu0 0.0
  %3069 = vmatprep.subr.mxu0 0.0
  %3070 = vmatpush1.msra.mxu0 0.0
  %3071 = vmatprep.subr.mxu0 0.0
  %3072 = vmatpush1.msra.mxu0 0.0
  %3073 = vmatprep.subr.mxu0 0.0
  %3074 = vmatpush1.msra.mxu0 0.0
  %3075 = vmatprep.subr.mxu0 0.0
  %3076 = vmatpush1.msra.mxu0 0.0
  %3077 = vmatprep.subr.mxu0 0.0
  %3078 = vmatpush1.msra.mxu0 0.0
  %3079 = vmatprep.subr.mxu0 0.0
  %3080 = vmatpush1.msra.mxu0 0.0
  %3081 = vmatprep.subr.mxu0 0.0
  %3082 = vmatpush1.msra.mxu0 0.0
  %3083 = vmatprep.subr.mxu0 0.0
  %3084 = vmatpush1.msra.mxu0 0.0
  %3085 = vmatprep.subr.mxu0 0.0
  %3086 = vmatpush1.msra.mxu0 0.0
  %3087 = vmatprep.subr.mxu0 0.0
  %3088 = vmatpush1.msra.mxu0 0.0
  %3089 = vmatprep.subr.mxu0 0.0
  %3090 = vmatpush1.msra.mxu0 0.0
  %3091 = vmatprep.subr.mxu0 0.0
  %3092 = vmatpush1.msra.mxu0 0.0
  %3093 = vmatprep.subr.mxu0 0.0
  %3094 = vmatpush1.msra.mxu0 0.0
  %3095 = vmatprep.subr.mxu0 0.0
  %3096 = vmatpush1.msra.mxu0 0.0
  %3097 = vmatprep.subr.mxu0 0.0
  %3098 = vmatpush1.msra.mxu0 0.0
  %3099 = vmatprep.subr.mxu0 0.0
  %3100 = vmatpush1.msra.mxu0 0.0
  %3101 = vmatprep.subr.mxu0 0.0
  %3102 = vmatpush1.msra.mxu0 0.0
  %3103 = vmatprep.subr.mxu0 0.0
  %3104 = vmatpush1.msra.mxu0 0.0
  %3105 = vmatprep.subr.mxu0 0.0
  %3106 = vmatpush1.msra.mxu0 0.0
  %3107 = vmatprep.subr.mxu0 0.0
  %3108 = vmatpush1.msra.mxu0 0.0
  %3109 = vmatprep.subr.mxu0 0.0
  %3110 = vmatpush1.msra.mxu0 0.0
  %3111 = vmatprep.subr.mxu0 0.0
  %3112 = vmatpush1.msra.mxu0 0.0
  %3113 = vmatprep.subr.mxu0 0.0
  %3114 = vmatpush1.msra.mxu0 0.0
  %3115 = vmatprep.subr.mxu0 0.0
  %3116 = vmatpush1.msra.mxu0 0.0
  %3117 = vmatprep.subr.mxu0 0.0
  %3118 = vmatpush1.msra.mxu0 0.0
  %3119 = vmatprep.subr.mxu0 0.0
  %3120 = vmatpush1.msra.mxu0 0.0
  %3121 = vmatprep.subr.mxu0 0.0
  %3122 = vmatpush1.msra.mxu0 0.0
  %3123 = vmatprep.mubr.f32.mxu0 0.0
  %3124 = vmatmul.mubr.f32.gmra.mrb[0].mxu0 %v2508
  %v3125 = vpop.f32.mrb[0].mxu0
  %v3126 = vadd.f32 %v3057, %v3125
  %v3127 = vpop.f32.mrb[0].mxu0
  %3128 = vmatprep.mubr.f32.mxu0 0.0
  %3129 = vmatmul.mubr.f32.gmra.mrb[0].mxu0 %v2511
  %v3130 = vpop.f32.mrb[0].mxu0
  %v3131 = vadd.f32 %v3057, %v3130
  %v3132 = vpop.f32.mrb[0].mxu0
  %3133 = vdwg.mxu0
  %s3134 = scalar_lea.vmem %s4, 160
  %v3135 = vld [vmem:[%s3134] sm:$0xff]
  %v3136 = vld [vmem:[%s3134 + $0x8] sm:$0xff]
  %v3137 = vld [vmem:[%s3134 + $0x10] sm:$0xff]
  %v3138 = vld [vmem:[%s3134 + $0x18] sm:$0xff]
  %s3139 = scalar_lea.vmem %s5, 21
  %v3140 = vld [vmem:[%s3139] sm:$0x1]
  %v3142 = vlaneseq
  %v3143 = vshrl.u32 %v3142, 7
  %v3144 = vsub.s32 0, %v3143
  %v3145 = vrot.slane %v3140, %v3144
  %3147 = vmatprep.subr.mxu0 0.0
  %3148 = vmatpush1.msra.mxu0 %v3135
  %3149 = vmatprep.subr.mxu0 0.0
  %3150 = vmatpush1.msra.mxu0 %v3136
  %3151 = vmatprep.subr.mxu0 0.0
  %3152 = vmatpush1.msra.mxu0 %v3137
  %3153 = vmatprep.subr.mxu0 0.0
  %3154 = vmatpush1.msra.mxu0 %v3138
  %3155 = vmatprep.subr.mxu0 0.0
  %3156 = vmatpush1.msra.mxu0 0.0
  %3157 = vmatprep.subr.mxu0 0.0
  %3158 = vmatpush1.msra.mxu0 0.0
  %3159 = vmatprep.subr.mxu0 0.0
  %3160 = vmatpush1.msra.mxu0 0.0
  %3161 = vmatprep.subr.mxu0 0.0
  %3162 = vmatpush1.msra.mxu0 0.0
  %3163 = vmatprep.subr.mxu0 0.0
  %3164 = vmatpush1.msra.mxu0 0.0
  %3165 = vmatprep.subr.mxu0 0.0
  %3166 = vmatpush1.msra.mxu0 0.0
  %3167 = vmatprep.subr.mxu0 0.0
  %3168 = vmatpush1.msra.mxu0 0.0
  %3169 = vmatprep.subr.mxu0 0.0
  %3170 = vmatpush1.msra.mxu0 0.0
  %3171 = vmatprep.subr.mxu0 0.0
  %3172 = vmatpush1.msra.mxu0 0.0
  %3173 = vmatprep.subr.mxu0 0.0
  %3174 = vmatpush1.msra.mxu0 0.0
  %3175 = vmatprep.subr.mxu0 0.0
  %3176 = vmatpush1.msra.mxu0 0.0
  %3177 = vmatprep.subr.mxu0 0.0
  %3178 = vmatpush1.msra.mxu0 0.0
  %3179 = vmatprep.subr.mxu0 0.0
  %3180 = vmatpush1.msra.mxu0 0.0
  %3181 = vmatprep.subr.mxu0 0.0
  %3182 = vmatpush1.msra.mxu0 0.0
  %3183 = vmatprep.subr.mxu0 0.0
  %3184 = vmatpush1.msra.mxu0 0.0
  %3185 = vmatprep.subr.mxu0 0.0
  %3186 = vmatpush1.msra.mxu0 0.0
  %3187 = vmatprep.subr.mxu0 0.0
  %3188 = vmatpush1.msra.mxu0 0.0
  %3189 = vmatprep.subr.mxu0 0.0
  %3190 = vmatpush1.msra.mxu0 0.0
  %3191 = vmatprep.subr.mxu0 0.0
  %3192 = vmatpush1.msra.mxu0 0.0
  %3193 = vmatprep.subr.mxu0 0.0
  %3194 = vmatpush1.msra.mxu0 0.0
  %3195 = vmatprep.subr.mxu0 0.0
  %3196 = vmatpush1.msra.mxu0 0.0
  %3197 = vmatprep.subr.mxu0 0.0
  %3198 = vmatpush1.msra.mxu0 0.0
  %3199 = vmatprep.subr.mxu0 0.0
  %3200 = vmatpush1.msra.mxu0 0.0
  %3201 = vmatprep.subr.mxu0 0.0
  %3202 = vmatpush1.msra.mxu0 0.0
  %3203 = vmatprep.subr.mxu0 0.0
  %3204 = vmatpush1.msra.mxu0 0.0
  %3205 = vmatprep.subr.mxu0 0.0
  %3206 = vmatpush1.msra.mxu0 0.0
  %3207 = vmatprep.subr.mxu0 0.0
  %3208 = vmatpush1.msra.mxu0 0.0
  %3209 = vmatprep.subr.mxu0 0.0
  %3210 = vmatpush1.msra.mxu0 0.0
  %3211 = vmatprep.mubr.f32.mxu0 0.0
  %3212 = vmatmul.mubr.f32.gmra.mrb[0].mxu0 %v2508
  %v3213 = vpop.f32.mrb[0].mxu0
  %v3214 = vadd.f32 %v3145, %v3213
  %v3215 = vpop.f32.mrb[0].mxu0
  %3216 = vmatprep.mubr.f32.mxu0 0.0
  %3217 = vmatmul.mubr.f32.gmra.mrb[0].mxu0 %v2511
  %v3218 = vpop.f32.mrb[0].mxu0
  %v3219 = vadd.f32 %v3145, %v3218
  %v3220 = vpop.f32.mrb[0].mxu0
  %3221 = vdwg.mxu0
  %v3223 = vsel %vm315, %v3038, 0
  %v3226 = vsel %vm315, %v3043, 0
  %v3229 = vsel %vm315, %v3126, 0
  %v3232 = vsel %vm315, %v3131, 0
  %3234 = vmatprep.subr.mxu0 0.0
  %3235 = vmatpush1.xpose.msra.mxu0 %v3229
  %3236 = vmatprep.subr.mxu0 0.0
  %3237 = vmatpush1.xpose.msra.mxu0 %v3232
  %3238 = vmatprep.subr.mxu0 0.0
  %3239 = vmatpush1.xpose.msra.mxu0 0.0
  %3240 = vmatprep.subr.mxu0 0.0
  %3241 = vmatpush1.xpose.msra.mxu0 0.0
  %3242 = vmatprep.subr.mxu0 0.0
  %3243 = vmatpush1.xpose.msra.mxu0 0.0
  %3244 = vmatprep.subr.mxu0 0.0
  %3245 = vmatpush1.xpose.msra.mxu0 0.0
  %3246 = vmatprep.subr.mxu0 0.0
  %3247 = vmatpush1.xpose.msra.mxu0 0.0
  %3248 = vmatprep.subr.mxu0 0.0
  %3249 = vmatpush1.xpose.msra.mxu0 0.0
  %3250 = vmatprep.subr.mxu0 0.0
  %3251 = vmatpush1.xpose.msra.mxu0 0.0
  %3252 = vmatprep.subr.mxu0 0.0
  %3253 = vmatpush1.xpose.msra.mxu0 0.0
  %3254 = vmatprep.subr.mxu0 0.0
  %3255 = vmatpush1.xpose.msra.mxu0 0.0
  %3256 = vmatprep.subr.mxu0 0.0
  %3257 = vmatpush1.xpose.msra.mxu0 0.0
  %3258 = vmatprep.subr.mxu0 0.0
  %3259 = vmatpush1.xpose.msra.mxu0 0.0
  %3260 = vmatprep.subr.mxu0 0.0
  %3261 = vmatpush1.xpose.msra.mxu0 0.0
  %3262 = vmatprep.subr.mxu0 0.0
  %3263 = vmatpush1.xpose.msra.mxu0 0.0
  %3264 = vmatprep.subr.mxu0 0.0
  %3265 = vmatpush1.xpose.msra.mxu0 0.0
  %3266 = vmatprep.subr.mxu0 0.0
  %3267 = vmatpush1.xpose.msra.mxu0 0.0
  %3268 = vmatprep.subr.mxu0 0.0
  %3269 = vmatpush1.xpose.msra.mxu0 0.0
  %3270 = vmatprep.subr.mxu0 0.0
  %3271 = vmatpush1.xpose.msra.mxu0 0.0
  %3272 = vmatprep.subr.mxu0 0.0
  %3273 = vmatpush1.xpose.msra.mxu0 0.0
  %3274 = vmatprep.subr.mxu0 0.0
  %3275 = vmatpush1.xpose.msra.mxu0 0.0
  %3276 = vmatprep.subr.mxu0 0.0
  %3277 = vmatpush1.xpose.msra.mxu0 0.0
  %3278 = vmatprep.subr.mxu0 0.0
  %3279 = vmatpush1.xpose.msra.mxu0 0.0
  %3280 = vmatprep.subr.mxu0 0.0
  %3281 = vmatpush1.xpose.msra.mxu0 0.0
  %3282 = vmatprep.subr.mxu0 0.0
  %3283 = vmatpush1.xpose.msra.mxu0 0.0
  %3284 = vmatprep.subr.mxu0 0.0
  %3285 = vmatpush1.xpose.msra.mxu0 0.0
  %3286 = vmatprep.subr.mxu0 0.0
  %3287 = vmatpush1.xpose.msra.mxu0 0.0
  %3288 = vmatprep.subr.mxu0 0.0
  %3289 = vmatpush1.xpose.msra.mxu0 0.0
  %3290 = vmatprep.subr.mxu0 0.0
  %3291 = vmatpush1.xpose.msra.mxu0 0.0
  %3292 = vmatprep.subr.mxu0 0.0
  %3293 = vmatpush1.xpose.msra.mxu0 0.0
  %3294 = vmatprep.subr.mxu0 0.0
  %3295 = vmatpush1.xpose.msra.mxu0 0.0
  %3296 = vmatprep.subr.mxu0 0.0
  %3297 = vmatpush1.xpose.msra.mxu0 0.0
  %3298 = vmatprep.mubr.f32.mxu0 0.0
  %3299 = vmatmul.mubr.f32.gmra.mrb[0].mxu0 %v3223
  %v3300 = vpop.f32.mrb[0].mxu0
  %v3301 = vadd.f32 %v46, %v3300
  %v3302 = vpop.f32.mrb[0].mxu0
  %3303 = vmatprep.mubr.f32.mxu0 0.0
  %3304 = vmatmul.mubr.f32.gmra.mrb[0].mxu0 %v3226
  %v3305 = vpop.f32.mrb[0].mxu0
  %v3306 = vadd.f32 %v47, %v3305
  %v3307 = vpop.f32.mrb[0].mxu0
  %3308 = vdwg.mxu0
  %v3309 = vsel %vm403, %v3301, -inf
  %3310 = vmax.xlane.f32.xlu0 %v3309
  %v3311 = vpop.xlane.xlu0 %3310
  %v3312 = vsel %vm403, %v3306, -inf
  %3313 = vmax.xlane.f32.xlu0 %v3312
  %v3314 = vpop.xlane.xlu0 %3313
  %v3315 = vsub.f32 %v3301, %v3311
  %v3316 = vsub.f32 %v3306, %v3314
  %v3317 = vmul.f32 %v3315, 1.442695
  %v3318 = vpow.pop %v3317
  %v3319 = vmul.f32 %v3316, 1.442695
  %v3320 = vpow.pop %v3319
  %v3321 = vsel %vm403, %v3318, 0.0
  %3322 = vadd.xlane.f32.xlu0 %v3321
  %v3323 = vpop.xlane.xlu0 %3322
  %v3324 = vsel %vm403, %v3320, 0.0
  %3325 = vadd.xlane.f32.xlu0 %v3324
  %v3326 = vpop.xlane.xlu0 %3325
  %v3327 = vrcp.pop %v3323
  %v3328 = vmul.f32 1.0, %v3327
  %v3329 = vrcp.pop %v3326
  %v3330 = vmul.f32 1.0, %v3329
  %v3332 = vsel %vm403, %v3318, 0
  %v3335 = vsel %vm403, %v3320, 0
  %3337 = vmatprep.subr.mxu0 0.0
  %3338 = vmatpush1.msra.mxu0 %v3214
  %3339 = vmatprep.subr.mxu0 0.0
  %3340 = vmatpush1.msra.mxu0 %v3219
  %3341 = vmatprep.subr.mxu0 0.0
  %3342 = vmatpush1.msra.mxu0 0.0
  %3343 = vmatprep.subr.mxu0 0.0
  %3344 = vmatpush1.msra.mxu0 0.0
  %3345 = vmatprep.subr.mxu0 0.0
  %3346 = vmatpush1.msra.mxu0 0.0
  %3347 = vmatprep.subr.mxu0 0.0
  %3348 = vmatpush1.msra.mxu0 0.0
  %3349 = vmatprep.subr.mxu0 0.0
  %3350 = vmatpush1.msra.mxu0 0.0
  %3351 = vmatprep.subr.mxu0 0.0
  %3352 = vmatpush1.msra.mxu0 0.0
  %3353 = vmatprep.subr.mxu0 0.0
  %3354 = vmatpush1.msra.mxu0 0.0
  %3355 = vmatprep.subr.mxu0 0.0
  %3356 = vmatpush1.msra.mxu0 0.0
  %3357 = vmatprep.subr.mxu0 0.0
  %3358 = vmatpush1.msra.mxu0 0.0
  %3359 = vmatprep.subr.mxu0 0.0
  %3360 = vmatpush1.msra.mxu0 0.0
  %3361 = vmatprep.subr.mxu0 0.0
  %3362 = vmatpush1.msra.mxu0 0.0
  %3363 = vmatprep.subr.mxu0 0.0
  %3364 = vmatpush1.msra.mxu0 0.0
  %3365 = vmatprep.subr.mxu0 0.0
  %3366 = vmatpush1.msra.mxu0 0.0
  %3367 = vmatprep.subr.mxu0 0.0
  %3368 = vmatpush1.msra.mxu0 0.0
  %3369 = vmatprep.subr.mxu0 0.0
  %3370 = vmatpush1.msra.mxu0 0.0
  %3371 = vmatprep.subr.mxu0 0.0
  %3372 = vmatpush1.msra.mxu0 0.0
  %3373 = vmatprep.subr.mxu0 0.0
  %3374 = vmatpush1.msra.mxu0 0.0
  %3375 = vmatprep.subr.mxu0 0.0
  %3376 = vmatpush1.msra.mxu0 0.0
  %3377 = vmatprep.subr.mxu0 0.0
  %3378 = vmatpush1.msra.mxu0 0.0
  %3379 = vmatprep.subr.mxu0 0.0
  %3380 = vmatpush1.msra.mxu0 0.0
  %3381 = vmatprep.subr.mxu0 0.0
  %3382 = vmatpush1.msra.mxu0 0.0
  %3383 = vmatprep.subr.mxu0 0.0
  %3384 = vmatpush1.msra.mxu0 0.0
  %3385 = vmatprep.subr.mxu0 0.0
  %3386 = vmatpush1.msra.mxu0 0.0
  %3387 = vmatprep.subr.mxu0 0.0
  %3388 = vmatpush1.msra.mxu0 0.0
  %3389 = vmatprep.subr.mxu0 0.0
  %3390 = vmatpush1.msra.mxu0 0.0
  %3391 = vmatprep.subr.mxu0 0.0
  %3392 = vmatpush1.msra.mxu0 0.0
  %3393 = vmatprep.subr.mxu0 0.0
  %3394 = vmatpush1.msra.mxu0 0.0
  %3395 = vmatprep.subr.mxu0 0.0
  %3396 = vmatpush1.msra.mxu0 0.0
  %3397 = vmatprep.subr.mxu0 0.0
  %3398 = vmatpush1.msra.mxu0 0.0
  %3399 = vmatprep.subr.mxu0 0.0
  %3400 = vmatpush1.msra.mxu0 0.0
  %3401 = vmatprep.mubr.f32.mxu0 0.0
  %3402 = vmatmul.mubr.f32.gmra.mrb[0].mxu0 %v3332
  %v3403 = vpop.f32.mrb[0].mxu0
  %v3404 = vadd.f32 0.0, %v3403
  %v3405 = vpop.f32.mrb[0].mxu0
  %3406 = vmatprep.mubr.f32.mxu0 0.0
  %3407 = vmatmul.mubr.f32.gmra.mrb[0].mxu0 %v3335
  %v3408 = vpop.f32.mrb[0].mxu0
  %v3409 = vadd.f32 0.0, %v3408
  %v3410 = vpop.f32.mrb[0].mxu0
  %3411 = vdwg.mxu0
  %v3412 = vmul.f32 %v3404, %v3328
  %v3413 = vmul.f32 %v3409, %v3330
  %s3414 = scalar_lea.vmem %s6, 40
  %v3415 = vld [vmem:[%s3414] sm:$0xff]
  %v3417 = vsel %vm315, %v3412, 0
  %v3420 = vsel %vm315, %v3413, 0
  %3422 = vmatprep.subr.mxu0 0.0
  %3423 = vmatpush1.msra.mxu0 %v3415
  %3424 = vmatprep.subr.mxu0 0.0
  %3425 = vmatpush1.msra.mxu0 0.0
  %3426 = vmatprep.subr.mxu0 0.0
  %3427 = vmatpush1.msra.mxu0 0.0
  %3428 = vmatprep.subr.mxu0 0.0
  %3429 = vmatpush1.msra.mxu0 0.0
  %3430 = vmatprep.subr.mxu0 0.0
  %3431 = vmatpush1.msra.mxu0 0.0
  %3432 = vmatprep.subr.mxu0 0.0
  %3433 = vmatpush1.msra.mxu0 0.0
  %3434 = vmatprep.subr.mxu0 0.0
  %3435 = vmatpush1.msra.mxu0 0.0
  %3436 = vmatprep.subr.mxu0 0.0
  %3437 = vmatpush1.msra.mxu0 0.0
  %3438 = vmatprep.subr.mxu0 0.0
  %3439 = vmatpush1.msra.mxu0 0.0
  %3440 = vmatprep.subr.mxu0 0.0
  %3441 = vmatpush1.msra.mxu0 0.0
  %3442 = vmatprep.subr.mxu0 0.0
  %3443 = vmatpush1.msra.mxu0 0.0
  %3444 = vmatprep.subr.mxu0 0.0
  %3445 = vmatpush1.msra.mxu0 0.0
  %3446 = vmatprep.subr.mxu0 0.0
  %3447 = vmatpush1.msra.mxu0 0.0
  %3448 = vmatprep.subr.mxu0 0.0
  %3449 = vmatpush1.msra.mxu0 0.0
  %3450 = vmatprep.subr.mxu0 0.0
  %3451 = vmatpush1.msra.mxu0 0.0
  %3452 = vmatprep.subr.mxu0 0.0
  %3453 = vmatpush1.msra.mxu0 0.0
  %3454 = vmatprep.subr.mxu0 0.0
  %3455 = vmatpush1.msra.mxu0 0.0
  %3456 = vmatprep.subr.mxu0 0.0
  %3457 = vmatpush1.msra.mxu0 0.0
  %3458 = vmatprep.subr.mxu0 0.0
  %3459 = vmatpush1.msra.mxu0 0.0
  %3460 = vmatprep.subr.mxu0 0.0
  %3461 = vmatpush1.msra.mxu0 0.0
  %3462 = vmatprep.subr.mxu0 0.0
  %3463 = vmatpush1.msra.mxu0 0.0
  %3464 = vmatprep.subr.mxu0 0.0
  %3465 = vmatpush1.msra.mxu0 0.0
  %3466 = vmatprep.subr.mxu0 0.0
  %3467 = vmatpush1.msra.mxu0 0.0
  %3468 = vmatprep.subr.mxu0 0.0
  %3469 = vmatpush1.msra.mxu0 0.0
  %3470 = vmatprep.subr.mxu0 0.0
  %3471 = vmatpush1.msra.mxu0 0.0
  %3472 = vmatprep.subr.mxu0 0.0
  %3473 = vmatpush1.msra.mxu0 0.0
  %3474 = vmatprep.subr.mxu0 0.0
  %3475 = vmatpush1.msra.mxu0 0.0
  %3476 = vmatprep.subr.mxu0 0.0
  %3477 = vmatpush1.msra.mxu0 0.0
  %3478 = vmatprep.subr.mxu0 0.0
  %3479 = vmatpush1.msra.mxu0 0.0
  %3480 = vmatprep.subr.mxu0 0.0
  %3481 = vmatpush1.msra.mxu0 0.0
  %3482 = vmatprep.subr.mxu0 0.0
  %3483 = vmatpush1.msra.mxu0 0.0
  %3484 = vmatprep.subr.mxu0 0.0
  %3485 = vmatpush1.msra.mxu0 0.0
  %3486 = vmatprep.mubr.f32.mxu0 0.0
  %3487 = vmatmul.mubr.f32.gmra.mrb[0].mxu0 %v3417
  %v3488 = vpop.f32.mrb[0].mxu0
  %v3489 = vadd.f32 0.0, %v3488
  %v3490 = vpop.f32.mrb[0].mxu0
  %3491 = vmatprep.mubr.f32.mxu0 0.0
  %3492 = vmatmul.mubr.f32.gmra.mrb[0].mxu0 %v3420
  %v3493 = vpop.f32.mrb[0].mxu0
  %v3494 = vadd.f32 0.0, %v3493
  %v3495 = vpop.f32.mrb[0].mxu0
  %3496 = vdwg.mxu0
  %v3498 = vsel %vm315, %v2954, 0
  %v3501 = vsel %vm315, %v2955, 0
  %3503 = vmatprep.subr.mxu0 0.0
  %3504 = vmatpush1.msra.mxu0 %v2957
  %3505 = vmatprep.subr.mxu0 0.0
  %3506 = vmatpush1.msra.mxu0 0.0
  %3507 = vmatprep.subr.mxu0 0.0
  %3508 = vmatpush1.msra.mxu0 0.0
  %3509 = vmatprep.subr.mxu0 0.0
  %3510 = vmatpush1.msra.mxu0 0.0
  %3511 = vmatprep.subr.mxu0 0.0
  %3512 = vmatpush1.msra.mxu0 0.0
  %3513 = vmatprep.subr.mxu0 0.0
  %3514 = vmatpush1.msra.mxu0 0.0
  %3515 = vmatprep.subr.mxu0 0.0
  %3516 = vmatpush1.msra.mxu0 0.0
  %3517 = vmatprep.subr.mxu0 0.0
  %3518 = vmatpush1.msra.mxu0 0.0
  %3519 = vmatprep.subr.mxu0 0.0
  %3520 = vmatpush1.msra.mxu0 0.0
  %3521 = vmatprep.subr.mxu0 0.0
  %3522 = vmatpush1.msra.mxu0 0.0
  %3523 = vmatprep.subr.mxu0 0.0
  %3524 = vmatpush1.msra.mxu0 0.0
  %3525 = vmatprep.subr.mxu0 0.0
  %3526 = vmatpush1.msra.mxu0 0.0
  %3527 = vmatprep.subr.mxu0 0.0
  %3528 = vmatpush1.msra.mxu0 0.0
  %3529 = vmatprep.subr.mxu0 0.0
  %3530 = vmatpush1.msra.mxu0 0.0
  %3531 = vmatprep.subr.mxu0 0.0
  %3532 = vmatpush1.msra.mxu0 0.0
  %3533 = vmatprep.subr.mxu0 0.0
  %3534 = vmatpush1.msra.mxu0 0.0
  %3535 = vmatprep.subr.mxu0 0.0
  %3536 = vmatpush1.msra.mxu0 0.0
  %3537 = vmatprep.subr.mxu0 0.0
  %3538 = vmatpush1.msra.mxu0 0.0
  %3539 = vmatprep.subr.mxu0 0.0
  %3540 = vmatpush1.msra.mxu0 0.0
  %3541 = vmatprep.subr.mxu0 0.0
  %3542 = vmatpush1.msra.mxu0 0.0
  %3543 = vmatprep.subr.mxu0 0.0
  %3544 = vmatpush1.msra.mxu0 0.0
  %3545 = vmatprep.subr.mxu0 0.0
  %3546 = vmatpush1.msra.mxu0 0.0
  %3547 = vmatprep.subr.mxu0 0.0
  %3548 = vmatpush1.msra.mxu0 0.0
  %3549 = vmatprep.subr.mxu0 0.0
  %3550 = vmatpush1.msra.mxu0 0.0
  %3551 = vmatprep.subr.mxu0 0.0
  %3552 = vmatpush1.msra.mxu0 0.0
  %3553 = vmatprep.subr.mxu0 0.0
  %3554 = vmatpush1.msra.mxu0 0.0
  %3555 = vmatprep.subr.mxu0 0.0
  %3556 = vmatpush1.msra.mxu0 0.0
  %3557 = vmatprep.subr.mxu0 0.0
  %3558 = vmatpush1.msra.mxu0 0.0
  %3559 = vmatprep.subr.mxu0 0.0
  %3560 = vmatpush1.msra.mxu0 0.0
  %3561 = vmatprep.subr.mxu0 0.0
  %3562 = vmatpush1.msra.mxu0 0.0
  %3563 = vmatprep.subr.mxu0 0.0
  %3564 = vmatpush1.msra.mxu0 0.0
  %3565 = vmatprep.subr.mxu0 0.0
  %3566 = vmatpush1.msra.mxu0 0.0
  %3567 = vmatprep.mubr.f32.mxu0 0.0
  %3568 = vmatmul.mubr.f32.gmra.mrb[0].mxu0 %v3498
  %v3569 = vpop.f32.mrb[0].mxu0
  %v3570 = vadd.f32 %v3489, %v3569
  %v3571 = vpop.f32.mrb[0].mxu0
  %3572 = vmatprep.mubr.f32.mxu0 0.0
  %3573 = vmatmul.mubr.f32.gmra.mrb[0].mxu0 %v3501
  %v3574 = vpop.f32.mrb[0].mxu0
  %v3575 = vadd.f32 %v3494, %v3574
  %v3576 = vpop.f32.mrb[0].mxu0
  %3577 = vdwg.mxu0
  %s3578 = scalar_lea.vmem %s2, 192
  %v3579 = vld [vmem:[%s3578] sm:$0xff]
  %v3580 = vld [vmem:[%s3578 + $0x8] sm:$0xff]
  %v3581 = vld [vmem:[%s3578 + $0x10] sm:$0xff]
  %v3582 = vld [vmem:[%s3578 + $0x18] sm:$0xff]
  %s3583 = scalar_lea.vmem %s5, 14
  %v3584 = vld [vmem:[%s3583] sm:$0x1]
  %v3586 = vlaneseq
  %v3587 = vshrl.u32 %v3586, 7
  %v3588 = vsub.s32 0, %v3587
  %v3589 = vrot.slane %v3584, %v3588
  %3591 = vmatprep.subr.mxu0 0.0
  %3592 = vmatpush1.msra.mxu0 %v3579
  %3593 = vmatprep.subr.mxu0 0.0
  %3594 = vmatpush1.msra.mxu0 %v3580
  %3595 = vmatprep.subr.mxu0 0.0
  %3596 = vmatpush1.msra.mxu0 %v3581
  %3597 = vmatprep.subr.mxu0 0.0
  %3598 = vmatpush1.msra.mxu0 %v3582
  %3599 = vmatprep.subr.mxu0 0.0
  %3600 = vmatpush1.msra.mxu0 0.0
  %3601 = vmatprep.subr.mxu0 0.0
  %3602 = vmatpush1.msra.mxu0 0.0
  %3603 = vmatprep.subr.mxu0 0.0
  %3604 = vmatpush1.msra.mxu0 0.0
  %3605 = vmatprep.subr.mxu0 0.0
  %3606 = vmatpush1.msra.mxu0 0.0
  %3607 = vmatprep.subr.mxu0 0.0
  %3608 = vmatpush1.msra.mxu0 0.0
  %3609 = vmatprep.subr.mxu0 0.0
  %3610 = vmatpush1.msra.mxu0 0.0
  %3611 = vmatprep.subr.mxu0 0.0
  %3612 = vmatpush1.msra.mxu0 0.0
  %3613 = vmatprep.subr.mxu0 0.0
  %3614 = vmatpush1.msra.mxu0 0.0
  %3615 = vmatprep.subr.mxu0 0.0
  %3616 = vmatpush1.msra.mxu0 0.0
  %3617 = vmatprep.subr.mxu0 0.0
  %3618 = vmatpush1.msra.mxu0 0.0
  %3619 = vmatprep.subr.mxu0 0.0
  %3620 = vmatpush1.msra.mxu0 0.0
  %3621 = vmatprep.subr.mxu0 0.0
  %3622 = vmatpush1.msra.mxu0 0.0
  %3623 = vmatprep.subr.mxu0 0.0
  %3624 = vmatpush1.msra.mxu0 0.0
  %3625 = vmatprep.subr.mxu0 0.0
  %3626 = vmatpush1.msra.mxu0 0.0
  %3627 = vmatprep.subr.mxu0 0.0
  %3628 = vmatpush1.msra.mxu0 0.0
  %3629 = vmatprep.subr.mxu0 0.0
  %3630 = vmatpush1.msra.mxu0 0.0
  %3631 = vmatprep.subr.mxu0 0.0
  %3632 = vmatpush1.msra.mxu0 0.0
  %3633 = vmatprep.subr.mxu0 0.0
  %3634 = vmatpush1.msra.mxu0 0.0
  %3635 = vmatprep.subr.mxu0 0.0
  %3636 = vmatpush1.msra.mxu0 0.0
  %3637 = vmatprep.subr.mxu0 0.0
  %3638 = vmatpush1.msra.mxu0 0.0
  %3639 = vmatprep.subr.mxu0 0.0
  %3640 = vmatpush1.msra.mxu0 0.0
  %3641 = vmatprep.subr.mxu0 0.0
  %3642 = vmatpush1.msra.mxu0 0.0
  %3643 = vmatprep.subr.mxu0 0.0
  %3644 = vmatpush1.msra.mxu0 0.0
  %3645 = vmatprep.subr.mxu0 0.0
  %3646 = vmatpush1.msra.mxu0 0.0
  %3647 = vmatprep.subr.mxu0 0.0
  %3648 = vmatpush1.msra.mxu0 0.0
  %3649 = vmatprep.subr.mxu0 0.0
  %3650 = vmatpush1.msra.mxu0 0.0
  %3651 = vmatprep.subr.mxu0 0.0
  %3652 = vmatpush1.msra.mxu0 0.0
  %3653 = vmatprep.subr.mxu0 0.0
  %3654 = vmatpush1.msra.mxu0 0.0
  %3655 = vmatprep.mubr.f32.mxu0 0.0
  %3656 = vmatmul.mubr.f32.gmra.mrb[0].mxu0 %v2508
  %v3657 = vpop.f32.mrb[0].mxu0
  %v3658 = vadd.f32 %v3589, %v3657
  %v3659 = vpop.f32.mrb[0].mxu0
  %3660 = vmatprep.mubr.f32.mxu0 0.0
  %3661 = vmatmul.mubr.f32.gmra.mrb[0].mxu0 %v2511
  %v3662 = vpop.f32.mrb[0].mxu0
  %v3663 = vadd.f32 %v3589, %v3662
  %v3664 = vpop.f32.mrb[0].mxu0
  %3665 = vdwg.mxu0
  %s3666 = scalar_lea.vmem %s3, 192
  %v3667 = vld [vmem:[%s3666] sm:$0xff]
  %v3668 = vld [vmem:[%s3666 + $0x8] sm:$0xff]
  %v3669 = vld [vmem:[%s3666 + $0x10] sm:$0xff]
  %v3670 = vld [vmem:[%s3666 + $0x18] sm:$0xff]
  %s3671 = scalar_lea.vmem %s5, 18
  %v3672 = vld [vmem:[%s3671] sm:$0x1]
  %v3674 = vlaneseq
  %v3675 = vshrl.u32 %v3674, 7
  %v3676 = vsub.s32 0, %v3675
  %v3677 = vrot.slane %v3672, %v3676
  %3679 = vmatprep.subr.mxu0 0.0
  %3680 = vmatpush1.msra.mxu0 %v3667
  %3681 = vmatprep.subr.mxu0 0.0
  %3682 = vmatpush1.msra.mxu0 %v3668
  %3683 = vmatprep.subr.mxu0 0.0
  %3684 = vmatpush1.msra.mxu0 %v3669
  %3685 = vmatprep.subr.mxu0 0.0
  %3686 = vmatpush1.msra.mxu0 %v3670
  %3687 = vmatprep.subr.mxu0 0.0
  %3688 = vmatpush1.msra.mxu0 0.0
  %3689 = vmatprep.subr.mxu0 0.0
  %3690 = vmatpush1.msra.mxu0 0.0
  %3691 = vmatprep.subr.mxu0 0.0
  %3692 = vmatpush1.msra.mxu0 0.0
  %3693 = vmatprep.subr.mxu0 0.0
  %3694 = vmatpush1.msra.mxu0 0.0
  %3695 = vmatprep.subr.mxu0 0.0
  %3696 = vmatpush1.msra.mxu0 0.0
  %3697 = vmatprep.subr.mxu0 0.0
  %3698 = vmatpush1.msra.mxu0 0.0
  %3699 = vmatprep.subr.mxu0 0.0
  %3700 = vmatpush1.msra.mxu0 0.0
  %3701 = vmatprep.subr.mxu0 0.0
  %3702 = vmatpush1.msra.mxu0 0.0
  %3703 = vmatprep.subr.mxu0 0.0
  %3704 = vmatpush1.msra.mxu0 0.0
  %3705 = vmatprep.subr.mxu0 0.0
  %3706 = vmatpush1.msra.mxu0 0.0
  %3707 = vmatprep.subr.mxu0 0.0
  %3708 = vmatpush1.msra.mxu0 0.0
  %3709 = vmatprep.subr.mxu0 0.0
  %3710 = vmatpush1.msra.mxu0 0.0
  %3711 = vmatprep.subr.mxu0 0.0
  %3712 = vmatpush1.msra.mxu0 0.0
  %3713 = vmatprep.subr.mxu0 0.0
  %3714 = vmatpush1.msra.mxu0 0.0
  %3715 = vmatprep.subr.mxu0 0.0
  %3716 = vmatpush1.msra.mxu0 0.0
  %3717 = vmatprep.subr.mxu0 0.0
  %3718 = vmatpush1.msra.mxu0 0.0
  %3719 = vmatprep.subr.mxu0 0.0
  %3720 = vmatpush1.msra.mxu0 0.0
  %3721 = vmatprep.subr.mxu0 0.0
  %3722 = vmatpush1.msra.mxu0 0.0
  %3723 = vmatprep.subr.mxu0 0.0
  %3724 = vmatpush1.msra.mxu0 0.0
  %3725 = vmatprep.subr.mxu0 0.0
  %3726 = vmatpush1.msra.mxu0 0.0
  %3727 = vmatprep.subr.mxu0 0.0
  %3728 = vmatpush1.msra.mxu0 0.0
  %3729 = vmatprep.subr.mxu0 0.0
  %3730 = vmatpush1.msra.mxu0 0.0
  %3731 = vmatprep.subr.mxu0 0.0
  %3732 = vmatpush1.msra.mxu0 0.0
  %3733 = vmatprep.subr.mxu0 0.0
  %3734 = vmatpush1.msra.mxu0 0.0
  %3735 = vmatprep.subr.mxu0 0.0
  %3736 = vmatpush1.msra.mxu0 0.0
  %3737 = vmatprep.subr.mxu0 0.0
  %3738 = vmatpush1.msra.mxu0 0.0
  %3739 = vmatprep.subr.mxu0 0.0
  %3740 = vmatpush1.msra.mxu0 0.0
  %3741 = vmatprep.subr.mxu0 0.0
  %3742 = vmatpush1.msra.mxu0 0.0
  %3743 = vmatprep.mubr.f32.mxu0 0.0
  %3744 = vmatmul.mubr.f32.gmra.mrb[0].mxu0 %v2508
  %v3745 = vpop.f32.mrb[0].mxu0
  %v3746 = vadd.f32 %v3677, %v3745
  %v3747 = vpop.f32.mrb[0].mxu0
  %3748 = vmatprep.mubr.f32.mxu0 0.0
  %3749 = vmatmul.mubr.f32.gmra.mrb[0].mxu0 %v2511
  %v3750 = vpop.f32.mrb[0].mxu0
  %v3751 = vadd.f32 %v3677, %v3750
  %v3752 = vpop.f32.mrb[0].mxu0
  %3753 = vdwg.mxu0
  %s3754 = scalar_lea.vmem %s4, 192
  %v3755 = vld [vmem:[%s3754] sm:$0xff]
  %v3756 = vld [vmem:[%s3754 + $0x8] sm:$0xff]
  %v3757 = vld [vmem:[%s3754 + $0x10] sm:$0xff]
  %v3758 = vld [vmem:[%s3754 + $0x18] sm:$0xff]
  %s3759 = scalar_lea.vmem %s5, 22
  %v3760 = vld [vmem:[%s3759] sm:$0x1]
  %v3762 = vlaneseq
  %v3763 = vshrl.u32 %v3762, 7
  %v3764 = vsub.s32 0, %v3763
  %v3765 = vrot.slane %v3760, %v3764
  %3767 = vmatprep.subr.mxu0 0.0
  %3768 = vmatpush1.msra.mxu0 %v3755
  %3769 = vmatprep.subr.mxu0 0.0
  %3770 = vmatpush1.msra.mxu0 %v3756
  %3771 = vmatprep.subr.mxu0 0.0
  %3772 = vmatpush1.msra.mxu0 %v3757
  %3773 = vmatprep.subr.mxu0 0.0
  %3774 = vmatpush1.msra.mxu0 %v3758
  %3775 = vmatprep.subr.mxu0 0.0
  %3776 = vmatpush1.msra.mxu0 0.0
  %3777 = vmatprep.subr.mxu0 0.0
  %3778 = vmatpush1.msra.mxu0 0.0
  %3779 = vmatprep.subr.mxu0 0.0
  %3780 = vmatpush1.msra.mxu0 0.0
  %3781 = vmatprep.subr.mxu0 0.0
  %3782 = vmatpush1.msra.mxu0 0.0
  %3783 = vmatprep.subr.mxu0 0.0
  %3784 = vmatpush1.msra.mxu0 0.0
  %3785 = vmatprep.subr.mxu0 0.0
  %3786 = vmatpush1.msra.mxu0 0.0
  %3787 = vmatprep.subr.mxu0 0.0
  %3788 = vmatpush1.msra.mxu0 0.0
  %3789 = vmatprep.subr.mxu0 0.0
  %3790 = vmatpush1.msra.mxu0 0.0
  %3791 = vmatprep.subr.mxu0 0.0
  %3792 = vmatpush1.msra.mxu0 0.0
  %3793 = vmatprep.subr.mxu0 0.0
  %3794 = vmatpush1.msra.mxu0 0.0
  %3795 = vmatprep.subr.mxu0 0.0
  %3796 = vmatpush1.msra.mxu0 0.0
  %3797 = vmatprep.subr.mxu0 0.0
  %3798 = vmatpush1.msra.mxu0 0.0
  %3799 = vmatprep.subr.mxu0 0.0
  %3800 = vmatpush1.msra.mxu0 0.0
  %3801 = vmatprep.subr.mxu0 0.0
  %3802 = vmatpush1.msra.mxu0 0.0
  %3803 = vmatprep.subr.mxu0 0.0
  %3804 = vmatpush1.msra.mxu0 0.0
  %3805 = vmatprep.subr.mxu0 0.0
  %3806 = vmatpush1.msra.mxu0 0.0
  %3807 = vmatprep.subr.mxu0 0.0
  %3808 = vmatpush1.msra.mxu0 0.0
  %3809 = vmatprep.subr.mxu0 0.0
  %3810 = vmatpush1.msra.mxu0 0.0
  %3811 = vmatprep.subr.mxu0 0.0
  %3812 = vmatpush1.msra.mxu0 0.0
  %3813 = vmatprep.subr.mxu0 0.0
  %3814 = vmatpush1.msra.mxu0 0.0
  %3815 = vmatprep.subr.mxu0 0.0
  %3816 = vmatpush1.msra.mxu0 0.0
  %3817 = vmatprep.subr.mxu0 0.0
  %3818 = vmatpush1.msra.mxu0 0.0
  %3819 = vmatprep.subr.mxu0 0.0
  %3820 = vmatpush1.msra.mxu0 0.0
  %3821 = vmatprep.subr.mxu0 0.0
  %3822 = vmatpush1.msra.mxu0 0.0
  %3823 = vmatprep.subr.mxu0 0.0
  %3824 = vmatpush1.msra.mxu0 0.0
  %3825 = vmatprep.subr.mxu0 0.0
  %3826 = vmatpush1.msra.mxu0 0.0
  %3827 = vmatprep.subr.mxu0 0.0
  %3828 = vmatpush1.msra.mxu0 0.0
  %3829 = vmatprep.subr.mxu0 0.0
  %3830 = vmatpush1.msra.mxu0 0.0
  %3831 = vmatprep.mubr.f32.mxu0 0.0
  %3832 = vmatmul.mubr.f32.gmra.mrb[0].mxu0 %v2508
  %v3833 = vpop.f32.mrb[0].mxu0
  %v3834 = vadd.f32 %v3765, %v3833
  %v3835 = vpop.f32.mrb[0].mxu0
  %3836 = vmatprep.mubr.f32.mxu0 0.0
  %3837 = vmatmul.mubr.f32.gmra.mrb[0].mxu0 %v2511
  %v3838 = vpop.f32.mrb[0].mxu0
  %v3839 = vadd.f32 %v3765, %v3838
  %v3840 = vpop.f32.mrb[0].mxu0
  %3841 = vdwg.mxu0
  %v3843 = vsel %vm315, %v3658, 0
  %v3846 = vsel %vm315, %v3663, 0
  %v3849 = vsel %vm315, %v3746, 0
  %v3852 = vsel %vm315, %v3751, 0
  %3854 = vmatprep.subr.mxu0 0.0
  %3855 = vmatpush1.xpose.msra.mxu0 %v3849
  %3856 = vmatprep.subr.mxu0 0.0
  %3857 = vmatpush1.xpose.msra.mxu0 %v3852
  %3858 = vmatprep.subr.mxu0 0.0
  %3859 = vmatpush1.xpose.msra.mxu0 0.0
  %3860 = vmatprep.subr.mxu0 0.0
  %3861 = vmatpush1.xpose.msra.mxu0 0.0
  %3862 = vmatprep.subr.mxu0 0.0
  %3863 = vmatpush1.xpose.msra.mxu0 0.0
  %3864 = vmatprep.subr.mxu0 0.0
  %3865 = vmatpush1.xpose.msra.mxu0 0.0
  %3866 = vmatprep.subr.mxu0 0.0
  %3867 = vmatpush1.xpose.msra.mxu0 0.0
  %3868 = vmatprep.subr.mxu0 0.0
  %3869 = vmatpush1.xpose.msra.mxu0 0.0
  %3870 = vmatprep.subr.mxu0 0.0
  %3871 = vmatpush1.xpose.msra.mxu0 0.0
  %3872 = vmatprep.subr.mxu0 0.0
  %3873 = vmatpush1.xpose.msra.mxu0 0.0
  %3874 = vmatprep.subr.mxu0 0.0
  %3875 = vmatpush1.xpose.msra.mxu0 0.0
  %3876 = vmatprep.subr.mxu0 0.0
  %3877 = vmatpush1.xpose.msra.mxu0 0.0
  %3878 = vmatprep.subr.mxu0 0.0
  %3879 = vmatpush1.xpose.msra.mxu0 0.0
  %3880 = vmatprep.subr.mxu0 0.0
  %3881 = vmatpush1.xpose.msra.mxu0 0.0
  %3882 = vmatprep.subr.mxu0 0.0
  %3883 = vmatpush1.xpose.msra.mxu0 0.0
  %3884 = vmatprep.subr.mxu0 0.0
  %3885 = vmatpush1.xpose.msra.mxu0 0.0
  %3886 = vmatprep.subr.mxu0 0.0
  %3887 = vmatpush1.xpose.msra.mxu0 0.0
  %3888 = vmatprep.subr.mxu0 0.0
  %3889 = vmatpush1.xpose.msra.mxu0 0.0
  %3890 = vmatprep.subr.mxu0 0.0
  %3891 = vmatpush1.xpose.msra.mxu0 0.0
  %3892 = vmatprep.subr.mxu0 0.0
  %3893 = vmatpush1.xpose.msra.mxu0 0.0
  %3894 = vmatprep.subr.mxu0 0.0
  %3895 = vmatpush1.xpose.msra.mxu0 0.0
  %3896 = vmatprep.subr.mxu0 0.0
  %3897 = vmatpush1.xpose.msra.mxu0 0.0
  %3898 = vmatprep.subr.mxu0 0.0
  %3899 = vmatpush1.xpose.msra.mxu0 0.0
  %3900 = vmatprep.subr.mxu0 0.0
  %3901 = vmatpush1.xpose.msra.mxu0 0.0
  %3902 = vmatprep.subr.mxu0 0.0
  %3903 = vmatpush1.xpose.msra.mxu0 0.0
  %3904 = vmatprep.subr.mxu0 0.0
  %3905 = vmatpush1.xpose.msra.mxu0 0.0
  %3906 = vmatprep.subr.mxu0 0.0
  %3907 = vmatpush1.xpose.msra.mxu0 0.0
  %3908 = vmatprep.subr.mxu0 0.0
  %3909 = vmatpush1.xpose.msra.mxu0 0.0
  %3910 = vmatprep.subr.mxu0 0.0
  %3911 = vmatpush1.xpose.msra.mxu0 0.0
  %3912 = vmatprep.subr.mxu0 0.0
  %3913 = vmatpush1.xpose.msra.mxu0 0.0
  %3914 = vmatprep.subr.mxu0 0.0
  %3915 = vmatpush1.xpose.msra.mxu0 0.0
  %3916 = vmatprep.subr.mxu0 0.0
  %3917 = vmatpush1.xpose.msra.mxu0 0.0
  %3918 = vmatprep.mubr.f32.mxu0 0.0
  %3919 = vmatmul.mubr.f32.gmra.mrb[0].mxu0 %v3843
  %v3920 = vpop.f32.mrb[0].mxu0
  %v3921 = vadd.f32 %v46, %v3920
  %v3922 = vpop.f32.mrb[0].mxu0
  %3923 = vmatprep.mubr.f32.mxu0 0.0
  %3924 = vmatmul.mubr.f32.gmra.mrb[0].mxu0 %v3846
  %v3925 = vpop.f32.mrb[0].mxu0
  %v3926 = vadd.f32 %v47, %v3925
  %v3927 = vpop.f32.mrb[0].mxu0
  %3928 = vdwg.mxu0
  %v3929 = vsel %vm403, %v3921, -inf
  %3930 = vmax.xlane.f32.xlu0 %v3929
  %v3931 = vpop.xlane.xlu0 %3930
  %v3932 = vsel %vm403, %v3926, -inf
  %3933 = vmax.xlane.f32.xlu0 %v3932
  %v3934 = vpop.xlane.xlu0 %3933
  %v3935 = vsub.f32 %v3921, %v3931
  %v3936 = vsub.f32 %v3926, %v3934
  %v3937 = vmul.f32 %v3935, 1.442695
  %v3938 = vpow.pop %v3937
  %v3939 = vmul.f32 %v3936, 1.442695
  %v3940 = vpow.pop %v3939
  %v3941 = vsel %vm403, %v3938, 0.0
  %3942 = vadd.xlane.f32.xlu0 %v3941
  %v3943 = vpop.xlane.xlu0 %3942
  %v3944 = vsel %vm403, %v3940, 0.0
  %3945 = vadd.xlane.f32.xlu0 %v3944
  %v3946 = vpop.xlane.xlu0 %3945
  %v3947 = vrcp.pop %v3943
  %v3948 = vmul.f32 1.0, %v3947
  %v3949 = vrcp.pop %v3946
  %v3950 = vmul.f32 1.0, %v3949
  %v3952 = vsel %vm403, %v3938, 0
  %v3955 = vsel %vm403, %v3940, 0
  %3957 = vmatprep.subr.mxu0 0.0
  %3958 = vmatpush1.msra.mxu0 %v3834
  %3959 = vmatprep.subr.mxu0 0.0
  %3960 = vmatpush1.msra.mxu0 %v3839
  %3961 = vmatprep.subr.mxu0 0.0
  %3962 = vmatpush1.msra.mxu0 0.0
  %3963 = vmatprep.subr.mxu0 0.0
  %3964 = vmatpush1.msra.mxu0 0.0
  %3965 = vmatprep.subr.mxu0 0.0
  %3966 = vmatpush1.msra.mxu0 0.0
  %3967 = vmatprep.subr.mxu0 0.0
  %3968 = vmatpush1.msra.mxu0 0.0
  %3969 = vmatprep.subr.mxu0 0.0
  %3970 = vmatpush1.msra.mxu0 0.0
  %3971 = vmatprep.subr.mxu0 0.0
  %3972 = vmatpush1.msra.mxu0 0.0
  %3973 = vmatprep.subr.mxu0 0.0
  %3974 = vmatpush1.msra.mxu0 0.0
  %3975 = vmatprep.subr.mxu0 0.0
  %3976 = vmatpush1.msra.mxu0 0.0
  %3977 = vmatprep.subr.mxu0 0.0
  %3978 = vmatpush1.msra.mxu0 0.0
  %3979 = vmatprep.subr.mxu0 0.0
  %3980 = vmatpush1.msra.mxu0 0.0
  %3981 = vmatprep.subr.mxu0 0.0
  %3982 = vmatpush1.msra.mxu0 0.0
  %3983 = vmatprep.subr.mxu0 0.0
  %3984 = vmatpush1.msra.mxu0 0.0
  %3985 = vmatprep.subr.mxu0 0.0
  %3986 = vmatpush1.msra.mxu0 0.0
  %3987 = vmatprep.subr.mxu0 0.0
  %3988 = vmatpush1.msra.mxu0 0.0
  %3989 = vmatprep.subr.mxu0 0.0
  %3990 = vmatpush1.msra.mxu0 0.0
  %3991 = vmatprep.subr.mxu0 0.0
  %3992 = vmatpush1.msra.mxu0 0.0
  %3993 = vmatprep.subr.mxu0 0.0
  %3994 = vmatpush1.msra.mxu0 0.0
  %3995 = vmatprep.subr.mxu0 0.0
  %3996 = vmatpush1.msra.mxu0 0.0
  %3997 = vmatprep.subr.mxu0 0.0
  %3998 = vmatpush1.msra.mxu0 0.0
  %3999 = vmatprep.subr.mxu0 0.0
  %4000 = vmatpush1.msra.mxu0 0.0
  %4001 = vmatprep.subr.mxu0 0.0
  %4002 = vmatpush1.msra.mxu0 0.0
  %4003 = vmatprep.subr.mxu0 0.0
  %4004 = vmatpush1.msra.mxu0 0.0
  %4005 = vmatprep.subr.mxu0 0.0
  %4006 = vmatpush1.msra.mxu0 0.0
  %4007 = vmatprep.subr.mxu0 0.0
  %4008 = vmatpush1.msra.mxu0 0.0
  %4009 = vmatprep.subr.mxu0 0.0
  %4010 = vmatpush1.msra.mxu0 0.0
  %4011 = vmatprep.subr.mxu0 0.0
  %4012 = vmatpush1.msra.mxu0 0.0
  %4013 = vmatprep.subr.mxu0 0.0
  %4014 = vmatpush1.msra.mxu0 0.0
  %4015 = vmatprep.subr.mxu0 0.0
  %4016 = vmatpush1.msra.mxu0 0.0
  %4017 = vmatprep.subr.mxu0 0.0
  %4018 = vmatpush1.msra.mxu0 0.0
  %4019 = vmatprep.subr.mxu0 0.0
  %4020 = vmatpush1.msra.mxu0 0.0
  %4021 = vmatprep.mubr.f32.mxu0 0.0
  %4022 = vmatmul.mubr.f32.gmra.mrb[0].mxu0 %v3952
  %v4023 = vpop.f32.mrb[0].mxu0
  %v4024 = vadd.f32 0.0, %v4023
  %v4025 = vpop.f32.mrb[0].mxu0
  %4026 = vmatprep.mubr.f32.mxu0 0.0
  %4027 = vmatmul.mubr.f32.gmra.mrb[0].mxu0 %v3955
  %v4028 = vpop.f32.mrb[0].mxu0
  %v4029 = vadd.f32 0.0, %v4028
  %v4030 = vpop.f32.mrb[0].mxu0
  %4031 = vdwg.mxu0
  %v4032 = vmul.f32 %v4024, %v3948
  %v4033 = vmul.f32 %v4029, %v3950
  %s4034 = scalar_lea.vmem %s6, 48
  %v4035 = vld [vmem:[%s4034] sm:$0xff]
  %v4037 = vsel %vm315, %v4032, 0
  %v4040 = vsel %vm315, %v4033, 0
  %4042 = vmatprep.subr.mxu0 0.0
  %4043 = vmatpush1.msra.mxu0 %v4035
  %4044 = vmatprep.subr.mxu0 0.0
  %4045 = vmatpush1.msra.mxu0 0.0
  %4046 = vmatprep.subr.mxu0 0.0
  %4047 = vmatpush1.msra.mxu0 0.0
  %4048 = vmatprep.subr.mxu0 0.0
  %4049 = vmatpush1.msra.mxu0 0.0
  %4050 = vmatprep.subr.mxu0 0.0
  %4051 = vmatpush1.msra.mxu0 0.0
  %4052 = vmatprep.subr.mxu0 0.0
  %4053 = vmatpush1.msra.mxu0 0.0
  %4054 = vmatprep.subr.mxu0 0.0
  %4055 = vmatpush1.msra.mxu0 0.0
  %4056 = vmatprep.subr.mxu0 0.0
  %4057 = vmatpush1.msra.mxu0 0.0
  %4058 = vmatprep.subr.mxu0 0.0
  %4059 = vmatpush1.msra.mxu0 0.0
  %4060 = vmatprep.subr.mxu0 0.0
  %4061 = vmatpush1.msra.mxu0 0.0
  %4062 = vmatprep.subr.mxu0 0.0
  %4063 = vmatpush1.msra.mxu0 0.0
  %4064 = vmatprep.subr.mxu0 0.0
  %4065 = vmatpush1.msra.mxu0 0.0
  %4066 = vmatprep.subr.mxu0 0.0
  %4067 = vmatpush1.msra.mxu0 0.0
  %4068 = vmatprep.subr.mxu0 0.0
  %4069 = vmatpush1.msra.mxu0 0.0
  %4070 = vmatprep.subr.mxu0 0.0
  %4071 = vmatpush1.msra.mxu0 0.0
  %4072 = vmatprep.subr.mxu0 0.0
  %4073 = vmatpush1.msra.mxu0 0.0
  %4074 = vmatprep.subr.mxu0 0.0
  %4075 = vmatpush1.msra.mxu0 0.0
  %4076 = vmatprep.subr.mxu0 0.0
  %4077 = vmatpush1.msra.mxu0 0.0
  %4078 = vmatprep.subr.mxu0 0.0
  %4079 = vmatpush1.msra.mxu0 0.0
  %4080 = vmatprep.subr.mxu0 0.0
  %4081 = vmatpush1.msra.mxu0 0.0
  %4082 = vmatprep.subr.mxu0 0.0
  %4083 = vmatpush1.msra.mxu0 0.0
  %4084 = vmatprep.subr.mxu0 0.0
  %4085 = vmatpush1.msra.mxu0 0.0
  %4086 = vmatprep.subr.mxu0 0.0
  %4087 = vmatpush1.msra.mxu0 0.0
  %4088 = vmatprep.subr.mxu0 0.0
  %4089 = vmatpush1.msra.mxu0 0.0
  %4090 = vmatprep.subr.mxu0 0.0
  %4091 = vmatpush1.msra.mxu0 0.0
  %4092 = vmatprep.subr.mxu0 0.0
  %4093 = vmatpush1.msra.mxu0 0.0
  %4094 = vmatprep.subr.mxu0 0.0
  %4095 = vmatpush1.msra.mxu0 0.0
  %4096 = vmatprep.subr.mxu0 0.0
  %4097 = vmatpush1.msra.mxu0 0.0
  %4098 = vmatprep.subr.mxu0 0.0
  %4099 = vmatpush1.msra.mxu0 0.0
  %4100 = vmatprep.subr.mxu0 0.0
  %4101 = vmatpush1.msra.mxu0 0.0
  %4102 = vmatprep.subr.mxu0 0.0
  %4103 = vmatpush1.msra.mxu0 0.0
  %4104 = vmatprep.subr.mxu0 0.0
  %4105 = vmatpush1.msra.mxu0 0.0
  %4106 = vmatprep.mubr.f32.mxu0 0.0
  %4107 = vmatmul.mubr.f32.gmra.mrb[0].mxu0 %v4037
  %v4108 = vpop.f32.mrb[0].mxu0
  %v4109 = vadd.f32 0.0, %v4108
  %v4110 = vpop.f32.mrb[0].mxu0
  %4111 = vmatprep.mubr.f32.mxu0 0.0
  %4112 = vmatmul.mubr.f32.gmra.mrb[0].mxu0 %v4040
  %v4113 = vpop.f32.mrb[0].mxu0
  %v4114 = vadd.f32 0.0, %v4113
  %v4115 = vpop.f32.mrb[0].mxu0
  %4116 = vdwg.mxu0
  %v4117 = vadd.f32 %v3570, %v4109
  %v4118 = vadd.f32 %v3575, %v4114
  %s4119 = scalar_lea.vmem %s2, 224
  %v4120 = vld [vmem:[%s4119] sm:$0xff]
  %v4121 = vld [vmem:[%s4119 + $0x8] sm:$0xff]
  %v4122 = vld [vmem:[%s4119 + $0x10] sm:$0xff]
  %v4123 = vld [vmem:[%s4119 + $0x18] sm:$0xff]
  %s4124 = scalar_lea.vmem %s5, 15
  %v4125 = vld [vmem:[%s4124] sm:$0x1]
  %v4127 = vlaneseq
  %v4128 = vshrl.u32 %v4127, 7
  %v4129 = vsub.s32 0, %v4128
  %v4130 = vrot.slane %v4125, %v4129
  %4132 = vmatprep.subr.mxu0 0.0
  %4133 = vmatpush1.msra.mxu0 %v4120
  %4134 = vmatprep.subr.mxu0 0.0
  %4135 = vmatpush1.msra.mxu0 %v4121
  %4136 = vmatprep.subr.mxu0 0.0
  %4137 = vmatpush1.msra.mxu0 %v4122
  %4138 = vmatprep.subr.mxu0 0.0
  %4139 = vmatpush1.msra.mxu0 %v4123
  %4140 = vmatprep.subr.mxu0 0.0
  %4141 = vmatpush1.msra.mxu0 0.0
  %4142 = vmatprep.subr.mxu0 0.0
  %4143 = vmatpush1.msra.mxu0 0.0
  %4144 = vmatprep.subr.mxu0 0.0
  %4145 = vmatpush1.msra.mxu0 0.0
  %4146 = vmatprep.subr.mxu0 0.0
  %4147 = vmatpush1.msra.mxu0 0.0
  %4148 = vmatprep.subr.mxu0 0.0
  %4149 = vmatpush1.msra.mxu0 0.0
  %4150 = vmatprep.subr.mxu0 0.0
  %4151 = vmatpush1.msra.mxu0 0.0
  %4152 = vmatprep.subr.mxu0 0.0
  %4153 = vmatpush1.msra.mxu0 0.0
  %4154 = vmatprep.subr.mxu0 0.0
  %4155 = vmatpush1.msra.mxu0 0.0
  %4156 = vmatprep.subr.mxu0 0.0
  %4157 = vmatpush1.msra.mxu0 0.0
  %4158 = vmatprep.subr.mxu0 0.0
  %4159 = vmatpush1.msra.mxu0 0.0
  %4160 = vmatprep.subr.mxu0 0.0
  %4161 = vmatpush1.msra.mxu0 0.0
  %4162 = vmatprep.subr.mxu0 0.0
  %4163 = vmatpush1.msra.mxu0 0.0
  %4164 = vmatprep.subr.mxu0 0.0
  %4165 = vmatpush1.msra.mxu0 0.0
  %4166 = vmatprep.subr.mxu0 0.0
  %4167 = vmatpush1.msra.mxu0 0.0
  %4168 = vmatprep.subr.mxu0 0.0
  %4169 = vmatpush1.msra.mxu0 0.0
  %4170 = vmatprep.subr.mxu0 0.0
  %4171 = vmatpush1.msra.mxu0 0.0
  %4172 = vmatprep.subr.mxu0 0.0
  %4173 = vmatpush1.msra.mxu0 0.0
  %4174 = vmatprep.subr.mxu0 0.0
  %4175 = vmatpush1.msra.mxu0 0.0
  %4176 = vmatprep.subr.mxu0 0.0
  %4177 = vmatpush1.msra.mxu0 0.0
  %4178 = vmatprep.subr.mxu0 0.0
  %4179 = vmatpush1.msra.mxu0 0.0
  %4180 = vmatprep.subr.mxu0 0.0
  %4181 = vmatpush1.msra.mxu0 0.0
  %4182 = vmatprep.subr.mxu0 0.0
  %4183 = vmatpush1.msra.mxu0 0.0
  %4184 = vmatprep.subr.mxu0 0.0
  %4185 = vmatpush1.msra.mxu0 0.0
  %4186 = vmatprep.subr.mxu0 0.0
  %4187 = vmatpush1.msra.mxu0 0.0
  %4188 = vmatprep.subr.mxu0 0.0
  %4189 = vmatpush1.msra.mxu0 0.0
  %4190 = vmatprep.subr.mxu0 0.0
  %4191 = vmatpush1.msra.mxu0 0.0
  %4192 = vmatprep.subr.mxu0 0.0
  %4193 = vmatpush1.msra.mxu0 0.0
  %4194 = vmatprep.subr.mxu0 0.0
  %4195 = vmatpush1.msra.mxu0 0.0
  %4196 = vmatprep.mubr.f32.mxu0 0.0
  %4197 = vmatmul.mubr.f32.gmra.mrb[0].mxu0 %v2508
  %v4198 = vpop.f32.mrb[0].mxu0
  %v4199 = vadd.f32 %v4130, %v4198
  %v4200 = vpop.f32.mrb[0].mxu0
  %4201 = vmatprep.mubr.f32.mxu0 0.0
  %4202 = vmatmul.mubr.f32.gmra.mrb[0].mxu0 %v2511
  %v4203 = vpop.f32.mrb[0].mxu0
  %v4204 = vadd.f32 %v4130, %v4203
  %v4205 = vpop.f32.mrb[0].mxu0
  %4206 = vdwg.mxu0
  %s4207 = scalar_lea.vmem %s3, 224
  %v4208 = vld [vmem:[%s4207] sm:$0xff]
  %v4209 = vld [vmem:[%s4207 + $0x8] sm:$0xff]
  %v4210 = vld [vmem:[%s4207 + $0x10] sm:$0xff]
  %v4211 = vld [vmem:[%s4207 + $0x18] sm:$0xff]
  %s4212 = scalar_lea.vmem %s5, 19
  %v4213 = vld [vmem:[%s4212] sm:$0x1]
  %v4215 = vlaneseq
  %v4216 = vshrl.u32 %v4215, 7
  %v4217 = vsub.s32 0, %v4216
  %v4218 = vrot.slane %v4213, %v4217
  %4220 = vmatprep.subr.mxu0 0.0
  %4221 = vmatpush1.msra.mxu0 %v4208
  %4222 = vmatprep.subr.mxu0 0.0
  %4223 = vmatpush1.msra.mxu0 %v4209
  %4224 = vmatprep.subr.mxu0 0.0
  %4225 = vmatpush1.msra.mxu0 %v4210
  %4226 = vmatprep.subr.mxu0 0.0
  %4227 = vmatpush1.msra.mxu0 %v4211
  %4228 = vmatprep.subr.mxu0 0.0
  %4229 = vmatpush1.msra.mxu0 0.0
  %4230 = vmatprep.subr.mxu0 0.0
  %4231 = vmatpush1.msra.mxu0 0.0
  %4232 = vmatprep.subr.mxu0 0.0
  %4233 = vmatpush1.msra.mxu0 0.0
  %4234 = vmatprep.subr.mxu0 0.0
  %4235 = vmatpush1.msra.mxu0 0.0
  %4236 = vmatprep.subr.mxu0 0.0
  %4237 = vmatpush1.msra.mxu0 0.0
  %4238 = vmatprep.subr.mxu0 0.0
  %4239 = vmatpush1.msra.mxu0 0.0
  %4240 = vmatprep.subr.mxu0 0.0
  %4241 = vmatpush1.msra.mxu0 0.0
  %4242 = vmatprep.subr.mxu0 0.0
  %4243 = vmatpush1.msra.mxu0 0.0
  %4244 = vmatprep.subr.mxu0 0.0
  %4245 = vmatpush1.msra.mxu0 0.0
  %4246 = vmatprep.subr.mxu0 0.0
  %4247 = vmatpush1.msra.mxu0 0.0
  %4248 = vmatprep.subr.mxu0 0.0
  %4249 = vmatpush1.msra.mxu0 0.0
  %4250 = vmatprep.subr.mxu0 0.0
  %4251 = vmatpush1.msra.mxu0 0.0
  %4252 = vmatprep.subr.mxu0 0.0
  %4253 = vmatpush1.msra.mxu0 0.0
  %4254 = vmatprep.subr.mxu0 0.0
  %4255 = vmatpush1.msra.mxu0 0.0
  %4256 = vmatprep.subr.mxu0 0.0
  %4257 = vmatpush1.msra.mxu0 0.0
  %4258 = vmatprep.subr.mxu0 0.0
  %4259 = vmatpush1.msra.mxu0 0.0
  %4260 = vmatprep.subr.mxu0 0.0
  %4261 = vmatpush1.msra.mxu0 0.0
  %4262 = vmatprep.subr.mxu0 0.0
  %4263 = vmatpush1.msra.mxu0 0.0
  %4264 = vmatprep.subr.mxu0 0.0
  %4265 = vmatpush1.msra.mxu0 0.0
  %4266 = vmatprep.subr.mxu0 0.0
  %4267 = vmatpush1.msra.mxu0 0.0
  %4268 = vmatprep.subr.mxu0 0.0
  %4269 = vmatpush1.msra.mxu0 0.0
  %4270 = vmatprep.subr.mxu0 0.0
  %4271 = vmatpush1.msra.mxu0 0.0
  %4272 = vmatprep.subr.mxu0 0.0
  %4273 = vmatpush1.msra.mxu0 0.0
  %4274 = vmatprep.subr.mxu0 0.0
  %4275 = vmatpush1.msra.mxu0 0.0
  %4276 = vmatprep.subr.mxu0 0.0
  %4277 = vmatpush1.msra.mxu0 0.0
  %4278 = vmatprep.subr.mxu0 0.0
  %4279 = vmatpush1.msra.mxu0 0.0
  %4280 = vmatprep.subr.mxu0 0.0
  %4281 = vmatpush1.msra.mxu0 0.0
  %4282 = vmatprep.subr.mxu0 0.0
  %4283 = vmatpush1.msra.mxu0 0.0
  %4284 = vmatprep.mubr.f32.mxu0 0.0
  %4285 = vmatmul.mubr.f32.gmra.mrb[0].mxu0 %v2508
  %v4286 = vpop.f32.mrb[0].mxu0
  %v4287 = vadd.f32 %v4218, %v4286
  %v4288 = vpop.f32.mrb[0].mxu0
  %4289 = vmatprep.mubr.f32.mxu0 0.0
  %4290 = vmatmul.mubr.f32.gmra.mrb[0].mxu0 %v2511
  %v4291 = vpop.f32.mrb[0].mxu0
  %v4292 = vadd.f32 %v4218, %v4291
  %v4293 = vpop.f32.mrb[0].mxu0
  %4294 = vdwg.mxu0
  %s4295 = scalar_lea.vmem %s4, 224
  %v4296 = vld [vmem:[%s4295] sm:$0xff]
  %v4297 = vld [vmem:[%s4295 + $0x8] sm:$0xff]
  %v4298 = vld [vmem:[%s4295 + $0x10] sm:$0xff]
  %v4299 = vld [vmem:[%s4295 + $0x18] sm:$0xff]
  %s4300 = scalar_lea.vmem %s5, 23
  %v4301 = vld [vmem:[%s4300] sm:$0x1]
  %v4303 = vlaneseq
  %v4304 = vshrl.u32 %v4303, 7
  %v4305 = vsub.s32 0, %v4304
  %v4306 = vrot.slane %v4301, %v4305
  %4308 = vmatprep.subr.mxu0 0.0
  %4309 = vmatpush1.msra.mxu0 %v4296
  %4310 = vmatprep.subr.mxu0 0.0
  %4311 = vmatpush1.msra.mxu0 %v4297
  %4312 = vmatprep.subr.mxu0 0.0
  %4313 = vmatpush1.msra.mxu0 %v4298
  %4314 = vmatprep.subr.mxu0 0.0
  %4315 = vmatpush1.msra.mxu0 %v4299
  %4316 = vmatprep.subr.mxu0 0.0
  %4317 = vmatpush1.msra.mxu0 0.0
  %4318 = vmatprep.subr.mxu0 0.0
  %4319 = vmatpush1.msra.mxu0 0.0
  %4320 = vmatprep.subr.mxu0 0.0
  %4321 = vmatpush1.msra.mxu0 0.0
  %4322 = vmatprep.subr.mxu0 0.0
  %4323 = vmatpush1.msra.mxu0 0.0
  %4324 = vmatprep.subr.mxu0 0.0
  %4325 = vmatpush1.msra.mxu0 0.0
  %4326 = vmatprep.subr.mxu0 0.0
  %4327 = vmatpush1.msra.mxu0 0.0
  %4328 = vmatprep.subr.mxu0 0.0
  %4329 = vmatpush1.msra.mxu0 0.0
  %4330 = vmatprep.subr.mxu0 0.0
  %4331 = vmatpush1.msra.mxu0 0.0
  %4332 = vmatprep.subr.mxu0 0.0
  %4333 = vmatpush1.msra.mxu0 0.0
  %4334 = vmatprep.subr.mxu0 0.0
  %4335 = vmatpush1.msra.mxu0 0.0
  %4336 = vmatprep.subr.mxu0 0.0
  %4337 = vmatpush1.msra.mxu0 0.0
  %4338 = vmatprep.subr.mxu0 0.0
  %4339 = vmatpush1.msra.mxu0 0.0
  %4340 = vmatprep.subr.mxu0 0.0
  %4341 = vmatpush1.msra.mxu0 0.0
  %4342 = vmatprep.subr.mxu0 0.0
  %4343 = vmatpush1.msra.mxu0 0.0
  %4344 = vmatprep.subr.mxu0 0.0
  %4345 = vmatpush1.msra.mxu0 0.0
  %4346 = vmatprep.subr.mxu0 0.0
  %4347 = vmatpush1.msra.mxu0 0.0
  %4348 = vmatprep.subr.mxu0 0.0
  %4349 = vmatpush1.msra.mxu0 0.0
  %4350 = vmatprep.subr.mxu0 0.0
  %4351 = vmatpush1.msra.mxu0 0.0
  %4352 = vmatprep.subr.mxu0 0.0
  %4353 = vmatpush1.msra.mxu0 0.0
  %4354 = vmatprep.subr.mxu0 0.0
  %4355 = vmatpush1.msra.mxu0 0.0
  %4356 = vmatprep.subr.mxu0 0.0
  %4357 = vmatpush1.msra.mxu0 0.0
  %4358 = vmatprep.subr.mxu0 0.0
  %4359 = vmatpush1.msra.mxu0 0.0
  %4360 = vmatprep.subr.mxu0 0.0
  %4361 = vmatpush1.msra.mxu0 0.0
  %4362 = vmatprep.subr.mxu0 0.0
  %4363 = vmatpush1.msra.mxu0 0.0
  %4364 = vmatprep.subr.mxu0 0.0
  %4365 = vmatpush1.msra.mxu0 0.0
  %4366 = vmatprep.subr.mxu0 0.0
  %4367 = vmatpush1.msra.mxu0 0.0
  %4368 = vmatprep.subr.mxu0 0.0
  %4369 = vmatpush1.msra.mxu0 0.0
  %4370 = vmatprep.subr.mxu0 0.0
  %4371 = vmatpush1.msra.mxu0 0.0
  %4372 = vmatprep.mubr.f32.mxu0 0.0
  %4373 = vmatmul.mubr.f32.gmra.mrb[0].mxu0 %v2508
  %v4374 = vpop.f32.mrb[0].mxu0
  %v4375 = vadd.f32 %v4306, %v4374
  %v4376 = vpop.f32.mrb[0].mxu0
  %4377 = vmatprep.mubr.f32.mxu0 0.0
  %4378 = vmatmul.mubr.f32.gmra.mrb[0].mxu0 %v2511
  %v4379 = vpop.f32.mrb[0].mxu0
  %v4380 = vadd.f32 %v4306, %v4379
  %v4381 = vpop.f32.mrb[0].mxu0
  %4382 = vdwg.mxu0
  %v4384 = vsel %vm315, %v4199, 0
  %v4387 = vsel %vm315, %v4204, 0
  %v4390 = vsel %vm315, %v4287, 0
  %v4393 = vsel %vm315, %v4292, 0
  %4395 = vmatprep.subr.mxu0 0.0
  %4396 = vmatpush1.xpose.msra.mxu0 %v4390
  %4397 = vmatprep.subr.mxu0 0.0
  %4398 = vmatpush1.xpose.msra.mxu0 %v4393
  %4399 = vmatprep.subr.mxu0 0.0
  %4400 = vmatpush1.xpose.msra.mxu0 0.0
  %4401 = vmatprep.subr.mxu0 0.0
  %4402 = vmatpush1.xpose.msra.mxu0 0.0
  %4403 = vmatprep.subr.mxu0 0.0
  %4404 = vmatpush1.xpose.msra.mxu0 0.0
  %4405 = vmatprep.subr.mxu0 0.0
  %4406 = vmatpush1.xpose.msra.mxu0 0.0
  %4407 = vmatprep.subr.mxu0 0.0
  %4408 = vmatpush1.xpose.msra.mxu0 0.0
  %4409 = vmatprep.subr.mxu0 0.0
  %4410 = vmatpush1.xpose.msra.mxu0 0.0
  %4411 = vmatprep.subr.mxu0 0.0
  %4412 = vmatpush1.xpose.msra.mxu0 0.0
  %4413 = vmatprep.subr.mxu0 0.0
  %4414 = vmatpush1.xpose.msra.mxu0 0.0
  %4415 = vmatprep.subr.mxu0 0.0
  %4416 = vmatpush1.xpose.msra.mxu0 0.0
  %4417 = vmatprep.subr.mxu0 0.0
  %4418 = vmatpush1.xpose.msra.mxu0 0.0
  %4419 = vmatprep.subr.mxu0 0.0
  %4420 = vmatpush1.xpose.msra.mxu0 0.0
  %4421 = vmatprep.subr.mxu0 0.0
  %4422 = vmatpush1.xpose.msra.mxu0 0.0
  %4423 = vmatprep.subr.mxu0 0.0
  %4424 = vmatpush1.xpose.msra.mxu0 0.0
  %4425 = vmatprep.subr.mxu0 0.0
  %4426 = vmatpush1.xpose.msra.mxu0 0.0
  %4427 = vmatprep.subr.mxu0 0.0
  %4428 = vmatpush1.xpose.msra.mxu0 0.0
  %4429 = vmatprep.subr.mxu0 0.0
  %4430 = vmatpush1.xpose.msra.mxu0 0.0
  %4431 = vmatprep.subr.mxu0 0.0
  %4432 = vmatpush1.xpose.msra.mxu0 0.0
  %4433 = vmatprep.subr.mxu0 0.0
  %4434 = vmatpush1.xpose.msra.mxu0 0.0
  %4435 = vmatprep.subr.mxu0 0.0
  %4436 = vmatpush1.xpose.msra.mxu0 0.0
  %4437 = vmatprep.subr.mxu0 0.0
  %4438 = vmatpush1.xpose.msra.mxu0 0.0
  %4439 = vmatprep.subr.mxu0 0.0
  %4440 = vmatpush1.xpose.msra.mxu0 0.0
  %4441 = vmatprep.subr.mxu0 0.0
  %4442 = vmatpush1.xpose.msra.mxu0 0.0
  %4443 = vmatprep.subr.mxu0 0.0
  %4444 = vmatpush1.xpose.msra.mxu0 0.0
  %4445 = vmatprep.subr.mxu0 0.0
  %4446 = vmatpush1.xpose.msra.mxu0 0.0
  %4447 = vmatprep.subr.mxu0 0.0
  %4448 = vmatpush1.xpose.msra.mxu0 0.0
  %4449 = vmatprep.subr.mxu0 0.0
  %4450 = vmatpush1.xpose.msra.mxu0 0.0
  %4451 = vmatprep.subr.mxu0 0.0
  %4452 = vmatpush1.xpose.msra.mxu0 0.0
  %4453 = vmatprep.subr.mxu0 0.0
  %4454 = vmatpush1.xpose.msra.mxu0 0.0
  %4455 = vmatprep.subr.mxu0 0.0
  %4456 = vmatpush1.xpose.msra.mxu0 0.0
  %4457 = vmatprep.subr.mxu0 0.0
  %4458 = vmatpush1.xpose.msra.mxu0 0.0
  %4459 = vmatprep.mubr.f32.mxu0 0.0
  %4460 = vmatmul.mubr.f32.gmra.mrb[0].mxu0 %v4384
  %v4461 = vpop.f32.mrb[0].mxu0
  %v4462 = vadd.f32 %v46, %v4461
  %v4463 = vpop.f32.mrb[0].mxu0
  %4464 = vmatprep.mubr.f32.mxu0 0.0
  %4465 = vmatmul.mubr.f32.gmra.mrb[0].mxu0 %v4387
  %v4466 = vpop.f32.mrb[0].mxu0
  %v4467 = vadd.f32 %v47, %v4466
  %v4468 = vpop.f32.mrb[0].mxu0
  %4469 = vdwg.mxu0
  %v4470 = vsel %vm403, %v4462, -inf
  %4471 = vmax.xlane.f32.xlu0 %v4470
  %v4472 = vpop.xlane.xlu0 %4471
  %v4473 = vsel %vm403, %v4467, -inf
  %4474 = vmax.xlane.f32.xlu0 %v4473
  %v4475 = vpop.xlane.xlu0 %4474
  %v4476 = vsub.f32 %v4462, %v4472
  %v4477 = vsub.f32 %v4467, %v4475
  %v4478 = vmul.f32 %v4476, 1.442695
  %v4479 = vpow.pop %v4478
  %v4480 = vmul.f32 %v4477, 1.442695
  %v4481 = vpow.pop %v4480
  %v4482 = vsel %vm403, %v4479, 0.0
  %4483 = vadd.xlane.f32.xlu0 %v4482
  %v4484 = vpop.xlane.xlu0 %4483
  %v4485 = vsel %vm403, %v4481, 0.0
  %4486 = vadd.xlane.f32.xlu0 %v4485
  %v4487 = vpop.xlane.xlu0 %4486
  %v4488 = vrcp.pop %v4484
  %v4489 = vmul.f32 1.0, %v4488
  %v4490 = vrcp.pop %v4487
  %v4491 = vmul.f32 1.0, %v4490
  %v4493 = vsel %vm403, %v4479, 0
  %v4496 = vsel %vm403, %v4481, 0
  %4498 = vmatprep.subr.mxu0 0.0
  %4499 = vmatpush1.msra.mxu0 %v4375
  %4500 = vmatprep.subr.mxu0 0.0
  %4501 = vmatpush1.msra.mxu0 %v4380
  %4502 = vmatprep.subr.mxu0 0.0
  %4503 = vmatpush1.msra.mxu0 0.0
  %4504 = vmatprep.subr.mxu0 0.0
  %4505 = vmatpush1.msra.mxu0 0.0
  %4506 = vmatprep.subr.mxu0 0.0
  %4507 = vmatpush1.msra.mxu0 0.0
  %4508 = vmatprep.subr.mxu0 0.0
  %4509 = vmatpush1.msra.mxu0 0.0
  %4510 = vmatprep.subr.mxu0 0.0
  %4511 = vmatpush1.msra.mxu0 0.0
  %4512 = vmatprep.subr.mxu0 0.0
  %4513 = vmatpush1.msra.mxu0 0.0
  %4514 = vmatprep.subr.mxu0 0.0
  %4515 = vmatpush1.msra.mxu0 0.0
  %4516 = vmatprep.subr.mxu0 0.0
  %4517 = vmatpush1.msra.mxu0 0.0
  %4518 = vmatprep.subr.mxu0 0.0
  %4519 = vmatpush1.msra.mxu0 0.0
  %4520 = vmatprep.subr.mxu0 0.0
  %4521 = vmatpush1.msra.mxu0 0.0
  %4522 = vmatprep.subr.mxu0 0.0
  %4523 = vmatpush1.msra.mxu0 0.0
  %4524 = vmatprep.subr.mxu0 0.0
  %4525 = vmatpush1.msra.mxu0 0.0
  %4526 = vmatprep.subr.mxu0 0.0
  %4527 = vmatpush1.msra.mxu0 0.0
  %4528 = vmatprep.subr.mxu0 0.0
  %4529 = vmatpush1.msra.mxu0 0.0
  %4530 = vmatprep.subr.mxu0 0.0
  %4531 = vmatpush1.msra.mxu0 0.0
  %4532 = vmatprep.subr.mxu0 0.0
  %4533 = vmatpush1.msra.mxu0 0.0
  %4534 = vmatprep.subr.mxu0 0.0
  %4535 = vmatpush1.msra.mxu0 0.0
  %4536 = vmatprep.subr.mxu0 0.0
  %4537 = vmatpush1.msra.mxu0 0.0
  %4538 = vmatprep.subr.mxu0 0.0
  %4539 = vmatpush1.msra.mxu0 0.0
  %4540 = vmatprep.subr.mxu0 0.0
  %4541 = vmatpush1.msra.mxu0 0.0
  %4542 = vmatprep.subr.mxu0 0.0
  %4543 = vmatpush1.msra.mxu0 0.0
  %4544 = vmatprep.subr.mxu0 0.0
  %4545 = vmatpush1.msra.mxu0 0.0
  %4546 = vmatprep.subr.mxu0 0.0
  %4547 = vmatpush1.msra.mxu0 0.0
  %4548 = vmatprep.subr.mxu0 0.0
  %4549 = vmatpush1.msra.mxu0 0.0
  %4550 = vmatprep.subr.mxu0 0.0
  %4551 = vmatpush1.msra.mxu0 0.0
  %4552 = vmatprep.subr.mxu0 0.0
  %4553 = vmatpush1.msra.mxu0 0.0
  %4554 = vmatprep.subr.mxu0 0.0
  %4555 = vmatpush1.msra.mxu0 0.0
  %4556 = vmatprep.subr.mxu0 0.0
  %4557 = vmatpush1.msra.mxu0 0.0
  %4558 = vmatprep.subr.mxu0 0.0
  %4559 = vmatpush1.msra.mxu0 0.0
  %4560 = vmatprep.subr.mxu0 0.0
  %4561 = vmatpush1.msra.mxu0 0.0
  %4562 = vmatprep.mubr.f32.mxu0 0.0
  %4563 = vmatmul.mubr.f32.gmra.mrb[0].mxu0 %v4493
  %v4564 = vpop.f32.mrb[0].mxu0
  %v4565 = vadd.f32 0.0, %v4564
  %v4566 = vpop.f32.mrb[0].mxu0
  %4567 = vmatprep.mubr.f32.mxu0 0.0
  %4568 = vmatmul.mubr.f32.gmra.mrb[0].mxu0 %v4496
  %v4569 = vpop.f32.mrb[0].mxu0
  %v4570 = vadd.f32 0.0, %v4569
  %v4571 = vpop.f32.mrb[0].mxu0
  %4572 = vdwg.mxu0
  %v4573 = vmul.f32 %v4565, %v4489
  %v4574 = vmul.f32 %v4570, %v4491
  %s4575 = scalar_lea.vmem %s6, 56
  %v4576 = vld [vmem:[%s4575] sm:$0xff]
  %v4578 = vsel %vm315, %v4573, 0
  %v4581 = vsel %vm315, %v4574, 0
  %4583 = vmatprep.subr.mxu0 0.0
  %4584 = vmatpush1.msra.mxu0 %v4576
  %4585 = vmatprep.subr.mxu0 0.0
  %4586 = vmatpush1.msra.mxu0 0.0
  %4587 = vmatprep.subr.mxu0 0.0
  %4588 = vmatpush1.msra.mxu0 0.0
  %4589 = vmatprep.subr.mxu0 0.0
  %4590 = vmatpush1.msra.mxu0 0.0
  %4591 = vmatprep.subr.mxu0 0.0
  %4592 = vmatpush1.msra.mxu0 0.0
  %4593 = vmatprep.subr.mxu0 0.0
  %4594 = vmatpush1.msra.mxu0 0.0
  %4595 = vmatprep.subr.mxu0 0.0
  %4596 = vmatpush1.msra.mxu0 0.0
  %4597 = vmatprep.subr.mxu0 0.0
  %4598 = vmatpush1.msra.mxu0 0.0
  %4599 = vmatprep.subr.mxu0 0.0
  %4600 = vmatpush1.msra.mxu0 0.0
  %4601 = vmatprep.subr.mxu0 0.0
  %4602 = vmatpush1.msra.mxu0 0.0
  %4603 = vmatprep.subr.mxu0 0.0
  %4604 = vmatpush1.msra.mxu0 0.0
  %4605 = vmatprep.subr.mxu0 0.0
  %4606 = vmatpush1.msra.mxu0 0.0
  %4607 = vmatprep.subr.mxu0 0.0
  %4608 = vmatpush1.msra.mxu0 0.0
  %4609 = vmatprep.subr.mxu0 0.0
  %4610 = vmatpush1.msra.mxu0 0.0
  %4611 = vmatprep.subr.mxu0 0.0
  %4612 = vmatpush1.msra.mxu0 0.0
  %4613 = vmatprep.subr.mxu0 0.0
  %4614 = vmatpush1.msra.mxu0 0.0
  %4615 = vmatprep.subr.mxu0 0.0
  %4616 = vmatpush1.msra.mxu0 0.0
  %4617 = vmatprep.subr.mxu0 0.0
  %4618 = vmatpush1.msra.mxu0 0.0
  %4619 = vmatprep.subr.mxu0 0.0
  %4620 = vmatpush1.msra.mxu0 0.0
  %4621 = vmatprep.subr.mxu0 0.0
  %4622 = vmatpush1.msra.mxu0 0.0
  %4623 = vmatprep.subr.mxu0 0.0
  %4624 = vmatpush1.msra.mxu0 0.0
  %4625 = vmatprep.subr.mxu0 0.0
  %4626 = vmatpush1.msra.mxu0 0.0
  %4627 = vmatprep.subr.mxu0 0.0
  %4628 = vmatpush1.msra.mxu0 0.0
  %4629 = vmatprep.subr.mxu0 0.0
  %4630 = vmatpush1.msra.mxu0 0.0
  %4631 = vmatprep.subr.mxu0 0.0
  %4632 = vmatpush1.msra.mxu0 0.0
  %4633 = vmatprep.subr.mxu0 0.0
  %4634 = vmatpush1.msra.mxu0 0.0
  %4635 = vmatprep.subr.mxu0 0.0
  %4636 = vmatpush1.msra.mxu0 0.0
  %4637 = vmatprep.subr.mxu0 0.0
  %4638 = vmatpush1.msra.mxu0 0.0
  %4639 = vmatprep.subr.mxu0 0.0
  %4640 = vmatpush1.msra.mxu0 0.0
  %4641 = vmatprep.subr.mxu0 0.0
  %4642 = vmatpush1.msra.mxu0 0.0
  %4643 = vmatprep.subr.mxu0 0.0
  %4644 = vmatpush1.msra.mxu0 0.0
  %4645 = vmatprep.subr.mxu0 0.0
  %4646 = vmatpush1.msra.mxu0 0.0
  %4647 = vmatprep.mubr.f32.mxu0 0.0
  %4648 = vmatmul.mubr.f32.gmra.mrb[0].mxu0 %v4578
  %v4649 = vpop.f32.mrb[0].mxu0
  %v4650 = vadd.f32 0.0, %v4649
  %v4651 = vpop.f32.mrb[0].mxu0
  %4652 = vmatprep.mubr.f32.mxu0 0.0
  %4653 = vmatmul.mubr.f32.gmra.mrb[0].mxu0 %v4581
  %v4654 = vpop.f32.mrb[0].mxu0
  %v4655 = vadd.f32 0.0, %v4654
  %v4656 = vpop.f32.mrb[0].mxu0
  %4657 = vdwg.mxu0
  %v4658 = vadd.f32 %v4117, %v4650
  %v4659 = vadd.f32 %v4118, %v4655
  %s4660 = scalar_lea.vmem %s7, 8
  %v4661 = vld [vmem:[%s4660] sm:$0x1]
  %v4662 = vlaneseq
  %v4663 = vshrl.u32 %v4662, 7
  %v4664 = vsub.s32 0, %v4663
  %v4665 = vrot.slane %v4661, %v4664
  %v4666 = vadd.f32 %v4658, %v4665
  %v4667 = vadd.f32 %v4659, %v4665
  %v4668 = vadd.f32 %v2492, %v4666
  %v4669 = vadd.f32 %v2493, %v4667
  %v4670 = vld [vmem:[%s4660 + $0x1] sm:$0x1]
  %v4671 = vld [vmem:[%s4660 + $0x2] sm:$0x1]
  %v4672 = vsel %vm59, %v4668, 0.0
  %4673 = vadd.xlane.f32.xlu0 %v4672
  %v4674 = vpop.xlane.xlu0 %4673
  %v4675 = vsel %vm59, %v4669, 0.0
  %4676 = vadd.xlane.f32.xlu0 %v4675
  %v4677 = vpop.xlane.xlu0 %4676
  %v4678 = vmul.f32 %v4674, %v2229
  %v4679 = vmul.f32 %v4677, %v2229
  %v4680 = vsub.f32 %v4668, %v4678
  %v4681 = vsub.f32 %v4669, %v4679
  %v4682 = vmul.f32 %v4680, %v4680
  %v4683 = vmul.f32 %v4681, %v4681
  %v4684 = vsel %vm59, %v4682, 0.0
  %4685 = vadd.xlane.f32.xlu0 %v4684
  %v4686 = vpop.xlane.xlu0 %4685
  %v4687 = vsel %vm59, %v4683, 0.0
  %4688 = vadd.xlane.f32.xlu0 %v4687
  %v4689 = vpop.xlane.xlu0 %4688
  %v4690 = vmul.f32 %v4686, %v2229
  %v4691 = vmul.f32 %v4689, %v2229
  %v4692 = vadd.f32 %v4690, 1e-05
  %v4693 = vadd.f32 %v4691, 1e-05
  %v4694 = vrsqrt.pop %v4692
  %v4695 = vrsqrt.pop %v4693
  %v4696 = vmul.f32 %v4680, %v4694
  %v4697 = vmul.f32 %v4681, %v4695
  %v4698 = vlaneseq
  %v4699 = vshrl.u32 %v4698, 7
  %v4700 = vsub.s32 0, %v4699
  %v4701 = vrot.slane %v4670, %v4700
  %v4702 = vmul.f32 %v4696, %v4701
  %v4703 = vmul.f32 %v4697, %v4701
  %v4704 = vlaneseq
  %v4705 = vshrl.u32 %v4704, 7
  %v4706 = vsub.s32 0, %v4705
  %v4707 = vrot.slane %v4671, %v4706
  %v4708 = vadd.f32 %v4702, %v4707
  %v4709 = vadd.f32 %v4703, %v4707
  %s4710 = scalar_lea.vmem %s8, 32
  %v4711 = vld [vmem:[%s4710] sm:$0xff]
  %v4712 = vld [vmem:[%s4710 + $0x8] sm:$0xff]
  %v4713 = vld [vmem:[%s4710 + $0x10] sm:$0xff]
  %v4714 = vld [vmem:[%s4710 + $0x18] sm:$0xff]
  %s4715 = scalar_lea.vmem %s9, 1
  %v4716 = vld [vmem:[%s4715] sm:$0x1]
  %v4718 = vlaneseq
  %v4719 = vshrl.u32 %v4718, 7
  %v4720 = vsub.s32 0, %v4719
  %v4721 = vrot.slane %v4716, %v4720
  %v4724 = vsel %vm59, %v4708, 0
  %v4727 = vsel %vm59, %v4709, 0
  %4729 = vmatprep.subr.mxu0 0.0
  %4730 = vmatpush1.msra.mxu0 %v4711
  %4731 = vmatprep.subr.mxu0 0.0
  %4732 = vmatpush1.msra.mxu0 %v4712
  %4733 = vmatprep.subr.mxu0 0.0
  %4734 = vmatpush1.msra.mxu0 %v4713
  %4735 = vmatprep.subr.mxu0 0.0
  %4736 = vmatpush1.msra.mxu0 %v4714
  %4737 = vmatprep.subr.mxu0 0.0
  %4738 = vmatpush1.msra.mxu0 0.0
  %4739 = vmatprep.subr.mxu0 0.0
  %4740 = vmatpush1.msra.mxu0 0.0
  %4741 = vmatprep.subr.mxu0 0.0
  %4742 = vmatpush1.msra.mxu0 0.0
  %4743 = vmatprep.subr.mxu0 0.0
  %4744 = vmatpush1.msra.mxu0 0.0
  %4745 = vmatprep.subr.mxu0 0.0
  %4746 = vmatpush1.msra.mxu0 0.0
  %4747 = vmatprep.subr.mxu0 0.0
  %4748 = vmatpush1.msra.mxu0 0.0
  %4749 = vmatprep.subr.mxu0 0.0
  %4750 = vmatpush1.msra.mxu0 0.0
  %4751 = vmatprep.subr.mxu0 0.0
  %4752 = vmatpush1.msra.mxu0 0.0
  %4753 = vmatprep.subr.mxu0 0.0
  %4754 = vmatpush1.msra.mxu0 0.0
  %4755 = vmatprep.subr.mxu0 0.0
  %4756 = vmatpush1.msra.mxu0 0.0
  %4757 = vmatprep.subr.mxu0 0.0
  %4758 = vmatpush1.msra.mxu0 0.0
  %4759 = vmatprep.subr.mxu0 0.0
  %4760 = vmatpush1.msra.mxu0 0.0
  %4761 = vmatprep.subr.mxu0 0.0
  %4762 = vmatpush1.msra.mxu0 0.0
  %4763 = vmatprep.subr.mxu0 0.0
  %4764 = vmatpush1.msra.mxu0 0.0
  %4765 = vmatprep.subr.mxu0 0.0
  %4766 = vmatpush1.msra.mxu0 0.0
  %4767 = vmatprep.subr.mxu0 0.0
  %4768 = vmatpush1.msra.mxu0 0.0
  %4769 = vmatprep.subr.mxu0 0.0
  %4770 = vmatpush1.msra.mxu0 0.0
  %4771 = vmatprep.subr.mxu0 0.0
  %4772 = vmatpush1.msra.mxu0 0.0
  %4773 = vmatprep.subr.mxu0 0.0
  %4774 = vmatpush1.msra.mxu0 0.0
  %4775 = vmatprep.subr.mxu0 0.0
  %4776 = vmatpush1.msra.mxu0 0.0
  %4777 = vmatprep.subr.mxu0 0.0
  %4778 = vmatpush1.msra.mxu0 0.0
  %4779 = vmatprep.subr.mxu0 0.0
  %4780 = vmatpush1.msra.mxu0 0.0
  %4781 = vmatprep.subr.mxu0 0.0
  %4782 = vmatpush1.msra.mxu0 0.0
  %4783 = vmatprep.subr.mxu0 0.0
  %4784 = vmatpush1.msra.mxu0 0.0
  %4785 = vmatprep.subr.mxu0 0.0
  %4786 = vmatpush1.msra.mxu0 0.0
  %4787 = vmatprep.subr.mxu0 0.0
  %4788 = vmatpush1.msra.mxu0 0.0
  %4789 = vmatprep.subr.mxu0 0.0
  %4790 = vmatpush1.msra.mxu0 0.0
  %4791 = vmatprep.subr.mxu0 0.0
  %4792 = vmatpush1.msra.mxu0 0.0
  %4793 = vmatprep.mubr.f32.mxu0 0.0
  %4794 = vmatmul.mubr.f32.gmra.mrb[0].mxu0 %v4724
  %v4795 = vpop.f32.mrb[0].mxu0
  %v4796 = vadd.f32 %v4721, %v4795
  %v4797 = vpop.f32.mrb[0].mxu0
  %4798 = vmatprep.mubr.f32.mxu0 0.0
  %4799 = vmatmul.mubr.f32.gmra.mrb[0].mxu0 %v4727
  %v4800 = vpop.f32.mrb[0].mxu0
  %v4801 = vadd.f32 %v4721, %v4800
  %v4802 = vpop.f32.mrb[0].mxu0
  %4803 = vdwg.mxu0
  %v4804 = vmax.f32 %v4796, 0.0
  %v4805 = vmax.f32 %v4801, 0.0
  %s4806 = scalar_lea.vmem %s10, 128
  %v4807 = vld [vmem:[%s4806] sm:$0xff]
  %v4808 = vld [vmem:[%s4806 + $0x8] sm:$0xff]
  %v4809 = vld [vmem:[%s4806 + $0x10] sm:$0xff]
  %v4810 = vld [vmem:[%s4806 + $0x18] sm:$0xff]
  %v4811 = vld [vmem:[%s4806 + $0x20] sm:$0xff]
  %v4812 = vld [vmem:[%s4806 + $0x28] sm:$0xff]
  %v4813 = vld [vmem:[%s4806 + $0x30] sm:$0xff]
  %v4814 = vld [vmem:[%s4806 + $0x38] sm:$0xff]
  %v4815 = vld [vmem:[%s4806 + $0x40] sm:$0xff]
  %v4816 = vld [vmem:[%s4806 + $0x48] sm:$0xff]
  %v4817 = vld [vmem:[%s4806 + $0x50] sm:$0xff]
  %v4818 = vld [vmem:[%s4806 + $0x58] sm:$0xff]
  %v4819 = vld [vmem:[%s4806 + $0x60] sm:$0xff]
  %v4820 = vld [vmem:[%s4806 + $0x68] sm:$0xff]
  %v4821 = vld [vmem:[%s4806 + $0x70] sm:$0xff]
  %v4822 = vld [vmem:[%s4806 + $0x78] sm:$0xff]
  %v4823 = vld [vmem:[%s4660 + $0x3] sm:$0x1]
  %v4824 = vlaneseq
  %v4825 = vshrl.u32 %v4824, 7
  %v4826 = vsub.s32 0, %v4825
  %v4827 = vrot.slane %v4823, %v4826
  %4828 = vmatprep.subr.mxu0 0.0
  %4829 = vmatpush1.msra.mxu0 %v4807
  %4830 = vmatprep.subr.mxu0 0.0
  %4831 = vmatpush1.msra.mxu0 %v4808
  %4832 = vmatprep.subr.mxu0 0.0
  %4833 = vmatpush1.msra.mxu0 %v4809
  %4834 = vmatprep.subr.mxu0 0.0
  %4835 = vmatpush1.msra.mxu0 %v4810
  %4836 = vmatprep.subr.mxu0 0.0
  %4837 = vmatpush1.msra.mxu0 %v4811
  %4838 = vmatprep.subr.mxu0 0.0
  %4839 = vmatpush1.msra.mxu0 %v4812
  %4840 = vmatprep.subr.mxu0 0.0
  %4841 = vmatpush1.msra.mxu0 %v4813
  %4842 = vmatprep.subr.mxu0 0.0
  %4843 = vmatpush1.msra.mxu0 %v4814
  %4844 = vmatprep.subr.mxu0 0.0
  %4845 = vmatpush1.msra.mxu0 %v4815
  %4846 = vmatprep.subr.mxu0 0.0
  %4847 = vmatpush1.msra.mxu0 %v4816
  %4848 = vmatprep.subr.mxu0 0.0
  %4849 = vmatpush1.msra.mxu0 %v4817
  %4850 = vmatprep.subr.mxu0 0.0
  %4851 = vmatpush1.msra.mxu0 %v4818
  %4852 = vmatprep.subr.mxu0 0.0
  %4853 = vmatpush1.msra.mxu0 %v4819
  %4854 = vmatprep.subr.mxu0 0.0
  %4855 = vmatpush1.msra.mxu0 %v4820
  %4856 = vmatprep.subr.mxu0 0.0
  %4857 = vmatpush1.msra.mxu0 %v4821
  %4858 = vmatprep.subr.mxu0 0.0
  %4859 = vmatpush1.msra.mxu0 %v4822
  %4860 = vmatprep.subr.mxu0 0.0
  %4861 = vmatpush1.msra.mxu0 0.0
  %4862 = vmatprep.subr.mxu0 0.0
  %4863 = vmatpush1.msra.mxu0 0.0
  %4864 = vmatprep.subr.mxu0 0.0
  %4865 = vmatpush1.msra.mxu0 0.0
  %4866 = vmatprep.subr.mxu0 0.0
  %4867 = vmatpush1.msra.mxu0 0.0
  %4868 = vmatprep.subr.mxu0 0.0
  %4869 = vmatpush1.msra.mxu0 0.0
  %4870 = vmatprep.subr.mxu0 0.0
  %4871 = vmatpush1.msra.mxu0 0.0
  %4872 = vmatprep.subr.mxu0 0.0
  %4873 = vmatpush1.msra.mxu0 0.0
  %4874 = vmatprep.subr.mxu0 0.0
  %4875 = vmatpush1.msra.mxu0 0.0
  %4876 = vmatprep.subr.mxu0 0.0
  %4877 = vmatpush1.msra.mxu0 0.0
  %4878 = vmatprep.subr.mxu0 0.0
  %4879 = vmatpush1.msra.mxu0 0.0
  %4880 = vmatprep.subr.mxu0 0.0
  %4881 = vmatpush1.msra.mxu0 0.0
  %4882 = vmatprep.subr.mxu0 0.0
  %4883 = vmatpush1.msra.mxu0 0.0
  %4884 = vmatprep.subr.mxu0 0.0
  %4885 = vmatpush1.msra.mxu0 0.0
  %4886 = vmatprep.subr.mxu0 0.0
  %4887 = vmatpush1.msra.mxu0 0.0
  %4888 = vmatprep.subr.mxu0 0.0
  %4889 = vmatpush1.msra.mxu0 0.0
  %4890 = vmatprep.subr.mxu0 0.0
  %4891 = vmatpush1.msra.mxu0 0.0
  %4892 = vmatprep.mubr.f32.mxu0 0.0
  %4893 = vmatmul.mubr.f32.gmra.mrb[0].mxu0 %v4804
  %v4894 = vpop.f32.mrb[0].mxu0
  %v4895 = vadd.f32 %v4827, %v4894
  %v4896 = vpop.f32.mrb[0].mxu0
  %4897 = vmatprep.mubr.f32.mxu0 0.0
  %4898 = vmatmul.mubr.f32.gmra.mrb[0].mxu0 %v4805
  %v4899 = vpop.f32.mrb[0].mxu0
  %v4900 = vadd.f32 %v4827, %v4899
  %v4901 = vpop.f32.mrb[0].mxu0
  %4902 = vdwg.mxu0
  %v4903 = vadd.f32 %v4708, %v4895
  %v4904 = vadd.f32 %v4709, %v4900
  %v4905 = vld [vmem:[%s4660 + $0x4] sm:$0x1]
  %v4906 = vld [vmem:[%s4660 + $0x5] sm:$0x1]
  %v4907 = vsel %vm59, %v4903, 0.0
  %4908 = vadd.xlane.f32.xlu0 %v4907
  %v4909 = vpop.xlane.xlu0 %4908
  %v4910 = vsel %vm59, %v4904, 0.0
  %4911 = vadd.xlane.f32.xlu0 %v4910
  %v4912 = vpop.xlane.xlu0 %4911
  %v4913 = vmul.f32 %v4909, %v2229
  %v4914 = vmul.f32 %v4912, %v2229
  %v4915 = vsub.f32 %v4903, %v4913
  %v4916 = vsub.f32 %v4904, %v4914
  %v4917 = vmul.f32 %v4915, %v4915
  %v4918 = vmul.f32 %v4916, %v4916
  %v4919 = vsel %vm59, %v4917, 0.0
  %4920 = vadd.xlane.f32.xlu0 %v4919
  %v4921 = vpop.xlane.xlu0 %4920
  %v4922 = vsel %vm59, %v4918, 0.0
  %4923 = vadd.xlane.f32.xlu0 %v4922
  %v4924 = vpop.xlane.xlu0 %4923
  %v4925 = vmul.f32 %v4921, %v2229
  %v4926 = vmul.f32 %v4924, %v2229
  %v4927 = vadd.f32 %v4925, 1e-05
  %v4928 = vadd.f32 %v4926, 1e-05
  %v4929 = vrsqrt.pop %v4927
  %v4930 = vrsqrt.pop %v4928
  %v4931 = vmul.f32 %v4915, %v4929
  %v4932 = vmul.f32 %v4916, %v4930
  %v4933 = vlaneseq
  %v4934 = vshrl.u32 %v4933, 7
  %v4935 = vsub.s32 0, %v4934
  %v4936 = vrot.slane %v4905, %v4935
  %v4937 = vmul.f32 %v4931, %v4936
  %v4938 = vmul.f32 %v4932, %v4936
  %v4939 = vlaneseq
  %v4940 = vshrl.u32 %v4939, 7
  %v4941 = vsub.s32 0, %v4940
  %v4942 = vrot.slane %v4906, %v4941
  %v4943 = vadd.f32 %v4937, %v4942
  %v4944 = vadd.f32 %v4938, %v4942
  %v4945 = vld [vmem:[%s11] sm:$0xff]
  %v4946 = vld [vmem:[%s11 + $0x8] sm:$0xff]
  %v4947 = vld [vmem:[%s11 + $0x10] sm:$0xff]
  %v4948 = vld [vmem:[%s11 + $0x18] sm:$0xff]
  %v4949 = vld [vmem:[%s12] sm:$0x1]
  %v4951 = vlaneseq
  %v4952 = vshrl.u32 %v4951, 7
  %v4953 = vsub.s32 0, %v4952
  %v4954 = vrot.slane %v4949, %v4953
  %v4957 = vsel %vm59, %v4943, 0
  %v4960 = vsel %vm59, %v4944, 0
  %4962 = vmatprep.subr.mxu0 0.0
  %4963 = vmatpush1.msra.mxu0 %v4945
  %4964 = vmatprep.subr.mxu0 0.0
  %4965 = vmatpush1.msra.mxu0 %v4946
  %4966 = vmatprep.subr.mxu0 0.0
  %4967 = vmatpush1.msra.mxu0 %v4947
  %4968 = vmatprep.subr.mxu0 0.0
  %4969 = vmatpush1.msra.mxu0 %v4948
  %4970 = vmatprep.subr.mxu0 0.0
  %4971 = vmatpush1.msra.mxu0 0.0
  %4972 = vmatprep.subr.mxu0 0.0
  %4973 = vmatpush1.msra.mxu0 0.0
  %4974 = vmatprep.subr.mxu0 0.0
  %4975 = vmatpush1.msra.mxu0 0.0
  %4976 = vmatprep.subr.mxu0 0.0
  %4977 = vmatpush1.msra.mxu0 0.0
  %4978 = vmatprep.subr.mxu0 0.0
  %4979 = vmatpush1.msra.mxu0 0.0
  %4980 = vmatprep.subr.mxu0 0.0
  %4981 = vmatpush1.msra.mxu0 0.0
  %4982 = vmatprep.subr.mxu0 0.0
  %4983 = vmatpush1.msra.mxu0 0.0
  %4984 = vmatprep.subr.mxu0 0.0
  %4985 = vmatpush1.msra.mxu0 0.0
  %4986 = vmatprep.subr.mxu0 0.0
  %4987 = vmatpush1.msra.mxu0 0.0
  %4988 = vmatprep.subr.mxu0 0.0
  %4989 = vmatpush1.msra.mxu0 0.0
  %4990 = vmatprep.subr.mxu0 0.0
  %4991 = vmatpush1.msra.mxu0 0.0
  %4992 = vmatprep.subr.mxu0 0.0
  %4993 = vmatpush1.msra.mxu0 0.0
  %4994 = vmatprep.subr.mxu0 0.0
  %4995 = vmatpush1.msra.mxu0 0.0
  %4996 = vmatprep.subr.mxu0 0.0
  %4997 = vmatpush1.msra.mxu0 0.0
  %4998 = vmatprep.subr.mxu0 0.0
  %4999 = vmatpush1.msra.mxu0 0.0
  %5000 = vmatprep.subr.mxu0 0.0
  %5001 = vmatpush1.msra.mxu0 0.0
  %5002 = vmatprep.subr.mxu0 0.0
  %5003 = vmatpush1.msra.mxu0 0.0
  %5004 = vmatprep.subr.mxu0 0.0
  %5005 = vmatpush1.msra.mxu0 0.0
  %5006 = vmatprep.subr.mxu0 0.0
  %5007 = vmatpush1.msra.mxu0 0.0
  %5008 = vmatprep.subr.mxu0 0.0
  %5009 = vmatpush1.msra.mxu0 0.0
  %5010 = vmatprep.subr.mxu0 0.0
  %5011 = vmatpush1.msra.mxu0 0.0
  %5012 = vmatprep.subr.mxu0 0.0
  %5013 = vmatpush1.msra.mxu0 0.0
  %5014 = vmatprep.subr.mxu0 0.0
  %5015 = vmatpush1.msra.mxu0 0.0
  %5016 = vmatprep.subr.mxu0 0.0
  %5017 = vmatpush1.msra.mxu0 0.0
  %5018 = vmatprep.subr.mxu0 0.0
  %5019 = vmatpush1.msra.mxu0 0.0
  %5020 = vmatprep.subr.mxu0 0.0
  %5021 = vmatpush1.msra.mxu0 0.0
  %5022 = vmatprep.subr.mxu0 0.0
  %5023 = vmatpush1.msra.mxu0 0.0
  %5024 = vmatprep.subr.mxu0 0.0
  %5025 = vmatpush1.msra.mxu0 0.0
  %5026 = vmatprep.mubr.f32.mxu0 0.0
  %5027 = vmatmul.mubr.f32.gmra.mrb[0].mxu0 %v4957
  %v5028 = vpop.f32.mrb[0].mxu0
  %v5029 = vadd.f32 %v4954, %v5028
  %v5030 = vpop.f32.mrb[0].mxu0
  %5031 = vmatprep.mubr.f32.mxu0 0.0
  %5032 = vmatmul.mubr.f32.gmra.mrb[0].mxu0 %v4960
  %v5033 = vpop.f32.mrb[0].mxu0
  %v5034 = vadd.f32 %v4954, %v5033
  %v5035 = vpop.f32.mrb[0].mxu0
  %5036 = vdwg.mxu0
  %5037 = vst [vmem:[%s13] sm:$0xff] %v5029
  %5038 = vst [vmem:[%s13 + $0x8] sm:$0xff] %v5034
  // Predicated region
  $region54: #{critic_forward.1} parent=0 // pred_check
    _
  $region55: #{critic_forward.1} parent=0 // pred_check_branch
    %5040 = sbr.rel (0) target = $region57
  $region56: #{critic_forward.1} parent=0 // pred_region
    _
  $region57: #{critic_forward.1} parent=0 // pred_fallthru
    _
  // Predicated region
  $region58: #{critic_forward.1} parent=0 // pred_check
    _
  $region59: #{critic_forward.1} parent=0 // pred_check_branch
    %5042 = sbr.rel (0) target = $region61
  $region60: #{critic_forward.1} parent=0 // pred_region
    _
  $region61: #{critic_forward.1} parent=0 // pred_fallthru
    _

</llo_original>
